<compile_context>
chip_gen: v7x
topology: tpu7x:2x2x1
jax: 0.10.0
libtpu: 0.0.40
codegen_flags: <defaults>
</compile_context>

<pallas_src>
import jax
import jax.numpy as jnp
from jax.experimental import pallas as pl
from jax.experimental.pallas import tpu as pltpu

Z_DIM = 64
IMG_DIM = 28 * 28          # 784
IMG_PAD = 896              # 7 * 128, lane-dense output width inside the kernel
H1, H2, H3 = 256, 512, 256
BN_EPS = 1e-5

# Packed (1, F) vector-parameter layout; every offset is a multiple of 128 lanes:
#   [ g1 | be1 | g2 | be2 | g3 | be3 | b4_padded ]
_P_G1, _P_BE1 = 0, 256
_P_G2, _P_BE2 = 512, 1024
_P_G3, _P_BE3 = 1536, 1792
_P_B4 = 2048
P_LEN = 2944               # 23 * 128


def _generator_kernel(x_ref, w1_ref, w2_ref, w3_ref, w4_ref, p_ref, o_ref):
    """Whole forward pass for one batch; everything resident in VMEM."""

    def linear(x_f32, w_ref):
        # bf16 x bf16 -> f32 accumulation on the MXU.
        return jnp.dot(x_f32.astype(jnp.bfloat16), w_ref[...],
                       preferred_element_type=jnp.float32)

    def bn_relu(h, g, be):
        # Training-mode BatchNorm1d (biased batch variance), affine fused
        # into a single per-feature scale/shift, then ReLU.
        mean = jnp.mean(h, axis=0, keepdims=True)                    # (1, F)
        var = jnp.mean(h * h, axis=0, keepdims=True) - mean * mean   # (1, F)
        scale = g * jax.lax.rsqrt(var + BN_EPS)                      # (1, F)
        shift = be - mean * scale                                    # (1, F)
        return jnp.maximum(h * scale + shift, 0.0)

    p = p_ref[...]                                                   # (1, P_LEN) f32
    g1, be1 = p[:, _P_G1:_P_BE1], p[:, _P_BE1:_P_G2]
    g2, be2 = p[:, _P_G2:_P_BE2], p[:, _P_BE2:_P_G3]
    g3, be3 = p[:, _P_G3:_P_BE3], p[:, _P_BE3:_P_B4]
    b4 = p[:, _P_B4:P_LEN]

    x = x_ref[...].astype(jnp.float32)
    # Biases of layers 1-3 are mathematically cancelled by the BN mean
    # subtraction, so they are omitted entirely.
    h = bn_relu(linear(x, w1_ref), g1, be1)
    h = bn_relu(linear(h, w2_ref), g2, be2)
    h = bn_relu(linear(h, w3_ref), g3, be3)
    o_ref[...] = jnp.tanh(linear(h, w4_ref) + b4).astype(o_ref.dtype)


@jax.jit
def generator_forward(x, params):
    """x: (B, Z_DIM) float32.  Returns (B, IMG_DIM) float32."""
    B = x.shape[0]
    vmem = pl.BlockSpec(memory_space=pltpu.MemorySpace.VMEM)

    args = (
        x,
        params["w1"], params["w2"], params["w3"], params["w4p"],
        params["packed"],
    )

    out_padded = pl.pallas_call(
        _generator_kernel,
        out_shape=jax.ShapeDtypeStruct((B, IMG_PAD), jnp.float32),
        in_specs=[vmem] * len(args),
        out_specs=vmem,
        compiler_params=pltpu.CompilerParams(vmem_limit_bytes=16 << 20),
    )(*args)
    return out_padded[:, :IMG_DIM]


def init_params(key):
    """Deterministic params mirroring the PyTorch module.

    Linear weights are stored pre-transposed (in_features, out_features) and in
    bf16 (matmul operand dtype). The final layer is lane-padded 784 -> 896.
    All (1, F) vector params used in f32 VPU math are packed into one array.
    """
    def linear_init(k, fan_in, fan_out):
        kw, kb = jax.random.split(k)
        bound = 1.0 / jnp.sqrt(float(fan_in))
        w = jax.random.uniform(kw, (fan_in, fan_out), jnp.float32, -bound, bound)
        b = jax.random.uniform(kb, (1, fan_out), jnp.float32, -bound, bound)
        return w, b

    def bn_init(k, feat):
        kg, kb = jax.random.split(k)
        # PyTorch default is gamma=1, beta=0; perturb deterministically so the
        # affine part is exercised.
        g = 1.0 + 0.1 * jax.random.normal(kg, (1, feat), jnp.float32)
        be = 0.1 * jax.random.normal(kb, (1, feat), jnp.float32)
        return g, be

    ks = jax.random.split(key, 7)
    w1, _b1 = linear_init(ks[0], Z_DIM, H1)     # b1/b2/b3 unused (cancel in BN)
    g1, be1 = bn_init(ks[1], H1)
    w2, _b2 = linear_init(ks[2], H1, H2)
    g2, be2 = bn_init(ks[3], H2)
    w3, _b3 = linear_init(ks[4], H2, H3)
    g3, be3 = bn_init(ks[5], H3)
    w4, b4 = linear_init(ks[6], H3, IMG_DIM)

    # Lane-pad the final layer (zeros in padded columns; sliced off outside).
    w4p = jnp.zeros((H3, IMG_PAD), jnp.float32).at[:, :IMG_DIM].set(w4)
    b4p = jnp.zeros((1, IMG_PAD), jnp.float32).at[:, :IMG_DIM].set(b4)

    packed = jnp.concatenate([g1, be1, g2, be2, g3, be3, b4p], axis=1)
    assert packed.shape == (1, P_LEN), packed.shape

    return dict(
        # Kernel inputs.
        w1=w1.astype(jnp.bfloat16),
        w2=w2.astype(jnp.bfloat16),
        w3=w3.astype(jnp.bfloat16),
        w4p=w4p.astype(jnp.bfloat16),
        packed=packed,
        # Extra copies for the pure-JAX reference check.
        w4=w4.astype(jnp.bfloat16), b4=b4,
        g1=g1, be1=be1, g2=g2, be2=be2, g3=g3, be3=be3,
    )


def _reference_forward(x, p):
    """Pure-JAX reference with the same bf16-operand / f32-accumulate math."""
    def mm(a, w):
        return jnp.dot(a.astype(jnp.bfloat16), w, preferred_element_type=jnp.float32)

    def bn_relu(h, g, be):
        m = jnp.mean(h, axis=0, keepdims=True)
        v = jnp.mean((h - m) ** 2, axis=0, keepdims=True)
        return jnp.maximum((h - m) * jax.lax.rsqrt(v + BN_EPS) * g + be, 0.0)

    h = bn_relu(mm(x, p["w1"]), p["g1"], p["be1"])
    h = bn_relu(mm(h, p["w2"]), p["g2"], p["be2"])
    h = bn_relu(mm(h, p["w3"]), p["g3"], p["be3"])
    return jnp.tanh(mm(h, p["w4"]) + p["b4"])


if __name__ == "__main__":
    key = jax.random.PRNGKey(0)
    k_params, k_x = jax.random.split(key)

    B = 128  # MXU-row-aligned batch; BN batch statistics well defined.
    params = init_params(k_params)
    x = jax.random.normal(k_x, (B, Z_DIM), jnp.float32)  # latent noise z

    out = generator_forward(x, params)
    out = jax.block_until_ready(out)

    assert out.shape == (B, IMG_DIM), out.shape
    ref = _reference_forward(x, params)
    max_err = float(jnp.max(jnp.abs(out - ref)))
    # bf16 matmul operands + fused-vs-unfused BN math => relaxed tolerance.
    assert max_err < 2e-2, max_err

    print("KERNEL_OK")
</pallas_src>

<mosaic_0001>
module attributes {stable_mosaic.version = 11 : i64} {
  func.func @_generator_kernel(%arg0: memref<128x64xf32, #tpu.memory_space<vmem>>, %arg1: memref<64x256xbf16, #tpu.memory_space<vmem>>, %arg2: memref<256x512xbf16, #tpu.memory_space<vmem>>, %arg3: memref<512x256xbf16, #tpu.memory_space<vmem>>, %arg4: memref<256x896xbf16, #tpu.memory_space<vmem>>, %arg5: memref<1x2944xf32, #tpu.memory_space<vmem>>, %arg6: memref<128x896xf32, #tpu.memory_space<vmem>>) attributes {dimension_semantics = [], scalar_prefetch = 0 : i64, scratch_operands = 0 : i64, tpu.core_type = #tpu.core_type<tc>} {
    %c0 = arith.constant 0 : index
    %c0_0 = arith.constant 0 : index
    %0 = vector.load %arg5[%c0, %c0_0] : memref<1x2944xf32, #tpu.memory_space<vmem>>, vector<1x2944xf32>
    %1 = vector.extract_strided_slice %0 {offsets = [0, 0], sizes = [1, 256], strides = [1, 1]} : vector<1x2944xf32> to vector<1x256xf32>
    %2 = vector.extract_strided_slice %0 {offsets = [0, 256], sizes = [1, 256], strides = [1, 1]} : vector<1x2944xf32> to vector<1x256xf32>
    %3 = vector.extract_strided_slice %0 {offsets = [0, 512], sizes = [1, 512], strides = [1, 1]} : vector<1x2944xf32> to vector<1x512xf32>
    %4 = vector.extract_strided_slice %0 {offsets = [0, 1024], sizes = [1, 512], strides = [1, 1]} : vector<1x2944xf32> to vector<1x512xf32>
    %5 = vector.extract_strided_slice %0 {offsets = [0, 1536], sizes = [1, 256], strides = [1, 1]} : vector<1x2944xf32> to vector<1x256xf32>
    %6 = vector.extract_strided_slice %0 {offsets = [0, 1792], sizes = [1, 256], strides = [1, 1]} : vector<1x2944xf32> to vector<1x256xf32>
    %7 = vector.extract_strided_slice %0 {offsets = [0, 2048], sizes = [1, 896], strides = [1, 1]} : vector<1x2944xf32> to vector<1x896xf32>
    %c0_1 = arith.constant 0 : index
    %c0_2 = arith.constant 0 : index
    %8 = vector.load %arg0[%c0_1, %c0_2] : memref<128x64xf32, #tpu.memory_space<vmem>>, vector<128x64xf32>
    %9 = arith.truncf %8 : vector<128x64xf32> to vector<128x64xbf16>
    %c0_3 = arith.constant 0 : index
    %c0_4 = arith.constant 0 : index
    %10 = vector.load %arg1[%c0_3, %c0_4] : memref<64x256xbf16, #tpu.memory_space<vmem>>, vector<64x256xbf16>
    %cst = arith.constant dense<0.000000e+00> : vector<128x256xf32>
    %11 = tpu.matmul %9, %10, %cst {dimension_numbers = #tpu.dot_dimension_numbers<[1], [0], [0], [1], [0, 0, 1, 1], [], []>} : vector<128x64xbf16>, vector<64x256xbf16>, vector<128x256xf32> -> vector<128x256xf32>
    %cst_5 = arith.constant dense<0.000000e+00> : vector<256xf32>
    %12 = vector.multi_reduction <add>, %11, %cst_5 [0] : vector<128x256xf32> to vector<256xf32>
    %13 = vector.shape_cast %12 : vector<256xf32> to vector<1x256xf32>
    %cst_6 = arith.constant 1.280000e+02 : f32
    %14 = vector.broadcast %cst_6 : f32 to vector<1x256xf32>
    %15 = arith.divf %13, %14 : vector<1x256xf32>
    %16 = arith.mulf %11, %11 : vector<128x256xf32>
    %cst_7 = arith.constant dense<0.000000e+00> : vector<256xf32>
    %17 = vector.multi_reduction <add>, %16, %cst_7 [0] : vector<128x256xf32> to vector<256xf32>
    %18 = vector.shape_cast %17 : vector<256xf32> to vector<1x256xf32>
    %cst_8 = arith.constant 1.280000e+02 : f32
    %19 = vector.broadcast %cst_8 : f32 to vector<1x256xf32>
    %20 = arith.divf %18, %19 : vector<1x256xf32>
    %21 = arith.mulf %15, %15 : vector<1x256xf32>
    %22 = arith.subf %20, %21 : vector<1x256xf32>
    %cst_9 = arith.constant 9.99999974E-6 : f32
    %23 = vector.broadcast %cst_9 : f32 to vector<1x256xf32>
    %24 = arith.addf %22, %23 : vector<1x256xf32>
    %25 = math.rsqrt %24 : vector<1x256xf32>
    %26 = arith.mulf %1, %25 : vector<1x256xf32>
    %27 = arith.mulf %15, %26 : vector<1x256xf32>
    %28 = arith.subf %2, %27 : vector<1x256xf32>
    %29 = vector.broadcast %26 : vector<1x256xf32> to vector<128x256xf32>
    %30 = arith.mulf %11, %29 : vector<128x256xf32>
    %31 = vector.broadcast %28 : vector<1x256xf32> to vector<128x256xf32>
    %32 = arith.addf %30, %31 : vector<128x256xf32>
    %cst_10 = arith.constant 0.000000e+00 : f32
    %33 = vector.broadcast %cst_10 : f32 to vector<128x256xf32>
    %34 = arith.maximumf %32, %33 : vector<128x256xf32>
    %35 = arith.truncf %34 : vector<128x256xf32> to vector<128x256xbf16>
    %c0_11 = arith.constant 0 : index
    %c0_12 = arith.constant 0 : index
    %36 = vector.load %arg2[%c0_11, %c0_12] : memref<256x512xbf16, #tpu.memory_space<vmem>>, vector<256x512xbf16>
    %cst_13 = arith.constant dense<0.000000e+00> : vector<128x512xf32>
    %37 = tpu.matmul %35, %36, %cst_13 {dimension_numbers = #tpu.dot_dimension_numbers<[1], [0], [0], [1], [0, 0, 1, 1], [], []>} : vector<128x256xbf16>, vector<256x512xbf16>, vector<128x512xf32> -> vector<128x512xf32>
    %cst_14 = arith.constant dense<0.000000e+00> : vector<512xf32>
    %38 = vector.multi_reduction <add>, %37, %cst_14 [0] : vector<128x512xf32> to vector<512xf32>
    %39 = vector.shape_cast %38 : vector<512xf32> to vector<1x512xf32>
    %cst_15 = arith.constant 1.280000e+02 : f32
    %40 = vector.broadcast %cst_15 : f32 to vector<1x512xf32>
    %41 = arith.divf %39, %40 : vector<1x512xf32>
    %42 = arith.mulf %37, %37 : vector<128x512xf32>
    %cst_16 = arith.constant dense<0.000000e+00> : vector<512xf32>
    %43 = vector.multi_reduction <add>, %42, %cst_16 [0] : vector<128x512xf32> to vector<512xf32>
    %44 = vector.shape_cast %43 : vector<512xf32> to vector<1x512xf32>
    %cst_17 = arith.constant 1.280000e+02 : f32
    %45 = vector.broadcast %cst_17 : f32 to vector<1x512xf32>
    %46 = arith.divf %44, %45 : vector<1x512xf32>
    %47 = arith.mulf %41, %41 : vector<1x512xf32>
    %48 = arith.subf %46, %47 : vector<1x512xf32>
    %cst_18 = arith.constant 9.99999974E-6 : f32
    %49 = vector.broadcast %cst_18 : f32 to vector<1x512xf32>
    %50 = arith.addf %48, %49 : vector<1x512xf32>
    %51 = math.rsqrt %50 : vector<1x512xf32>
    %52 = arith.mulf %3, %51 : vector<1x512xf32>
    %53 = arith.mulf %41, %52 : vector<1x512xf32>
    %54 = arith.subf %4, %53 : vector<1x512xf32>
    %55 = vector.broadcast %52 : vector<1x512xf32> to vector<128x512xf32>
    %56 = arith.mulf %37, %55 : vector<128x512xf32>
    %57 = vector.broadcast %54 : vector<1x512xf32> to vector<128x512xf32>
    %58 = arith.addf %56, %57 : vector<128x512xf32>
    %cst_19 = arith.constant 0.000000e+00 : f32
    %59 = vector.broadcast %cst_19 : f32 to vector<128x512xf32>
    %60 = arith.maximumf %58, %59 : vector<128x512xf32>
    %61 = arith.truncf %60 : vector<128x512xf32> to vector<128x512xbf16>
    %c0_20 = arith.constant 0 : index
    %c0_21 = arith.constant 0 : index
    %62 = vector.load %arg3[%c0_20, %c0_21] : memref<512x256xbf16, #tpu.memory_space<vmem>>, vector<512x256xbf16>
    %cst_22 = arith.constant dense<0.000000e+00> : vector<128x256xf32>
    %63 = tpu.matmul %61, %62, %cst_22 {dimension_numbers = #tpu.dot_dimension_numbers<[1], [0], [0], [1], [0, 0, 1, 1], [], []>} : vector<128x512xbf16>, vector<512x256xbf16>, vector<128x256xf32> -> vector<128x256xf32>
    %cst_23 = arith.constant dense<0.000000e+00> : vector<256xf32>
    %64 = vector.multi_reduction <add>, %63, %cst_23 [0] : vector<128x256xf32> to vector<256xf32>
    %65 = vector.shape_cast %64 : vector<256xf32> to vector<1x256xf32>
    %cst_24 = arith.constant 1.280000e+02 : f32
    %66 = vector.broadcast %cst_24 : f32 to vector<1x256xf32>
    %67 = arith.divf %65, %66 : vector<1x256xf32>
    %68 = arith.mulf %63, %63 : vector<128x256xf32>
    %cst_25 = arith.constant dense<0.000000e+00> : vector<256xf32>
    %69 = vector.multi_reduction <add>, %68, %cst_25 [0] : vector<128x256xf32> to vector<256xf32>
    %70 = vector.shape_cast %69 : vector<256xf32> to vector<1x256xf32>
    %cst_26 = arith.constant 1.280000e+02 : f32
    %71 = vector.broadcast %cst_26 : f32 to vector<1x256xf32>
    %72 = arith.divf %70, %71 : vector<1x256xf32>
    %73 = arith.mulf %67, %67 : vector<1x256xf32>
    %74 = arith.subf %72, %73 : vector<1x256xf32>
    %cst_27 = arith.constant 9.99999974E-6 : f32
    %75 = vector.broadcast %cst_27 : f32 to vector<1x256xf32>
    %76 = arith.addf %74, %75 : vector<1x256xf32>
    %77 = math.rsqrt %76 : vector<1x256xf32>
    %78 = arith.mulf %5, %77 : vector<1x256xf32>
    %79 = arith.mulf %67, %78 : vector<1x256xf32>
    %80 = arith.subf %6, %79 : vector<1x256xf32>
    %81 = vector.broadcast %78 : vector<1x256xf32> to vector<128x256xf32>
    %82 = arith.mulf %63, %81 : vector<128x256xf32>
    %83 = vector.broadcast %80 : vector<1x256xf32> to vector<128x256xf32>
    %84 = arith.addf %82, %83 : vector<128x256xf32>
    %cst_28 = arith.constant 0.000000e+00 : f32
    %85 = vector.broadcast %cst_28 : f32 to vector<128x256xf32>
    %86 = arith.maximumf %84, %85 : vector<128x256xf32>
    %87 = arith.truncf %86 : vector<128x256xf32> to vector<128x256xbf16>
    %c0_29 = arith.constant 0 : index
    %c0_30 = arith.constant 0 : index
    %88 = vector.load %arg4[%c0_29, %c0_30] : memref<256x896xbf16, #tpu.memory_space<vmem>>, vector<256x896xbf16>
    %cst_31 = arith.constant dense<0.000000e+00> : vector<128x896xf32>
    %89 = tpu.matmul %87, %88, %cst_31 {dimension_numbers = #tpu.dot_dimension_numbers<[1], [0], [0], [1], [0, 0, 1, 1], [], []>} : vector<128x256xbf16>, vector<256x896xbf16>, vector<128x896xf32> -> vector<128x896xf32>
    %90 = vector.broadcast %7 : vector<1x896xf32> to vector<128x896xf32>
    %91 = arith.addf %89, %90 : vector<128x896xf32>
    %92 = math.tanh %91 : vector<128x896xf32>
    %c0_32 = arith.constant 0 : index
    %c0_33 = arith.constant 0 : index
    %93 = vector.load %arg6[%c0_32, %c0_33] : memref<128x896xf32, #tpu.memory_space<vmem>>, vector<128x896xf32>
    tpu.vector_store %arg6[%c0_32, %c0_33], %92 {strides = array<i32>} : memref<128x896xf32, #tpu.memory_space<vmem>>, vector<128x896xf32>,
    return
  }
}

</mosaic_0001>

<llo_original>
// kernel: generator_forward.1
$region0: #{generator_forward.1}
  #allocation0 [shape = 'u32[]', space=smem, size = 0x4, offset = 0x4, fixed_abs, tag = 'smem constant byte address 0x4 - core index']
  #allocation1 [shape = 'u32[144,128]{1,0:T(1,128)}', space=vmem, size = 0x12000, scoped, tag = 'internal scratch']
  %s0 = inlined_call_operand.vmem [shape: f32[128,64], index: 0, kind: input, shape index: {}]
  %s1 = inlined_call_operand.vmem [shape: bf16[64,256], index: 1, kind: input, shape index: {}]
  %s2 = inlined_call_operand.hbm [shape: bf16[256,512], index: 2, kind: input, shape index: {}]
  %s3 = inlined_call_operand.hbm [shape: bf16[512,256], index: 3, kind: input, shape index: {}]
  %s4 = inlined_call_operand.hbm [shape: bf16[256,896], index: 4, kind: input, shape index: {}]
  %s5 = inlined_call_operand.vmem [shape: f32[1,2944], index: 5, kind: input, shape index: {}]
  %s6 = inlined_call_operand.vmem [shape: f32[128,896], index: 6, kind: output, shape index: {}]
  %s7 = sld [smem:[#allocation0]]
  $region46: #{generator_forward.1} parent=0
    _
  %s9 = ssub.s32 1, %s7
  %s10 = scalar_select 0, %s9, %s7
  $region1: #{generator_forward.1} parent=0
    #allocation2 [shape = 'u8[262144]{0}', space=vmem, size = 0x40000, scoped, tag = 'input window, operand 2, single buffered']
    #allocation3 [shape = 's32[1]{0}', space=sflag, size = 0x4, scoped, tag = 'scoped memory for generator_forward.1']
    #allocation4 [shape = 'u8[262144]{0}', space=vmem, size = 0x40000, scoped, tag = 'input window, operand 3, single buffered']
    #allocation5 [shape = 's32[1]{0}', space=sflag, size = 0x4, scoped, tag = 'scoped memory for generator_forward.1']
    #allocation6 [shape = 'u8[458752]{0}', space=vmem, size = 0x70000, scoped, tag = 'input window, operand 4, single buffered']
    %11 = vsyncpa [#allocation3], 0
    %12 = vsyncpa [#allocation5], 0
    // Predicated region
    $region2: #{generator_forward.1} parent=1 // pred_check
      _
    $region3: #{generator_forward.1} parent=1 // pred_check_branch
      %14 = sbr.rel (0) target = $region5
    $region4: #{generator_forward.1} parent=1 // pred_region
      _
    $region5: #{generator_forward.1} parent=1 // pred_fallthru
      _
    // Predicated region
    $region6: #{generator_forward.1} parent=1 // pred_check
      _
    $region7: #{generator_forward.1} parent=1 // pred_check_branch
      %16 = sbr.rel (0) target = $region9
    $region8: #{generator_forward.1} parent=1 // pred_region
      _
    $region9: #{generator_forward.1} parent=1 // pred_fallthru
      _
    // Predicated region
    $region10: #{generator_forward.1} parent=1 // pred_check
      _
    $region11: #{generator_forward.1} parent=1 // pred_check_branch
      %18 = sbr.rel (0) target = $region13
    $region12: #{generator_forward.1} parent=1 // pred_region
      %s20 = ssub.s32 8192, 8192
      %21 = vsyncadd [#allocation3], %s20
      %s22 = sshll.u32 [#allocation2], 4
      %s23 = int_to_ptr.vmem [resolvable:$true] %s22
      %28 = dma.hbm_to_vmem [thread:$0]  %s2, 8192, %s23, [#allocation3], 256, 256, 16
    $region13: #{generator_forward.1} parent=1 // pred_fallthru
      _
    // Predicated region
    $region14: #{generator_forward.1} parent=1 // pred_check
      _
    $region15: #{generator_forward.1} parent=1 // pred_check_branch
      %30 = sbr.rel (0) target = $region17
    $region16: #{generator_forward.1} parent=1 // pred_region
      %s32 = ssub.s32 8192, 8192
      %33 = vsyncadd [#allocation5], %s32
      %s34 = sshll.u32 [#allocation4], 4
      %s35 = int_to_ptr.vmem [resolvable:$true] %s34
      %40 = dma.hbm_to_vmem [thread:$0]  %s3, 8192, %s35, [#allocation5], 128, 128, 8
    $region17: #{generator_forward.1} parent=1 // pred_fallthru
      _
    // Predicated region
    $region18: #{generator_forward.1} parent=1 // pred_check
      _
    $region19: #{generator_forward.1} parent=1 // pred_check_branch
      %42 = sbr.rel (0) target = $region21
    $region20: #{generator_forward.1} parent=1 // pred_region
      %s44 = ssub.s32 14336, 14336
      %45 = vsyncadd [#allocation5], %s44
      %s46 = sshll.u32 [#allocation6], 4
      %s47 = int_to_ptr.vmem [resolvable:$true] %s46
      %52 = dma.hbm_to_vmem [thread:$0]  %s4, 14336, %s47, [#allocation5], 448, 448, 28
    $region21: #{generator_forward.1} parent=1 // pred_fallthru
      _
    // Predicated region
    $region22: #{generator_forward.1} parent=1 // pred_check
      _
    $region23: #{generator_forward.1} parent=1 // pred_check_branch
      %54 = sbr.rel (0) target = $region25
    $region24: #{generator_forward.1} parent=1 // pred_region
      _
    $region25: #{generator_forward.1} parent=1 // pred_fallthru
      _
    // Predicated region
    $region26: #{generator_forward.1} parent=1 // pred_check
      _
    $region27: #{generator_forward.1} parent=1 // pred_check_branch
      %56 = sbr.rel (0) target = $region29
    $region28: #{generator_forward.1} parent=1 // pred_region
      %57 = dma.done [#allocation3], 8192
    $region29: #{generator_forward.1} parent=1 // pred_fallthru
      _
    // Predicated region
    $region30: #{generator_forward.1} parent=1 // pred_check
      _
    $region31: #{generator_forward.1} parent=1 // pred_check_branch
      %59 = sbr.rel (0) target = $region33
    $region32: #{generator_forward.1} parent=1 // pred_region
      %60 = dma.done [#allocation5], 8192
    $region33: #{generator_forward.1} parent=1 // pred_fallthru
      _
    // Predicated region
    $region34: #{generator_forward.1} parent=1 // pred_check
      _
    $region35: #{generator_forward.1} parent=1 // pred_check_branch
      %62 = sbr.rel (0) target = $region37
    $region36: #{generator_forward.1} parent=1 // pred_region
      %63 = dma.done [#allocation5], 14336
    $region37: #{generator_forward.1} parent=1 // pred_fallthru
      _
    %v65 = vld [vmem:[%s5] sm:$0xff]
    %v66 = vld [vmem:[%s5 + $0x8] sm:$0xff]
    %v67 = vld [vmem:[%s5 + $0x10] sm:$0xff]
    %v68 = vld [vmem:[%s0] sm:$0xff]
    %v69 = vld [vmem:[%s0 + $0x8] sm:$0xff]
    %v70 = vld [vmem:[%s0 + $0x10] sm:$0xff]
    %v71 = vld [vmem:[%s0 + $0x18] sm:$0xff]
    %v72 = vld [vmem:[%s0 + $0x20] sm:$0xff]
    %v73 = vld [vmem:[%s0 + $0x28] sm:$0xff]
    %v74 = vld [vmem:[%s0 + $0x30] sm:$0xff]
    %v75 = vld [vmem:[%s0 + $0x38] sm:$0xff]
    %v76 = vld [vmem:[%s0 + $0x40] sm:$0xff]
    %v77 = vld [vmem:[%s0 + $0x48] sm:$0xff]
    %v78 = vld [vmem:[%s0 + $0x50] sm:$0xff]
    %v79 = vld [vmem:[%s0 + $0x58] sm:$0xff]
    %v80 = vld [vmem:[%s0 + $0x60] sm:$0xff]
    %v81 = vld [vmem:[%s0 + $0x68] sm:$0xff]
    %v82 = vld [vmem:[%s0 + $0x70] sm:$0xff]
    %v83 = vld [vmem:[%s0 + $0x78] sm:$0xff]
    %v84 = vpack.c.bf16 %v69, %v68
    %v85 = vpack.c.bf16 %v71, %v70
    %v86 = vpack.c.bf16 %v73, %v72
    %v87 = vpack.c.bf16 %v75, %v74
    %v88 = vpack.c.bf16 %v77, %v76
    %v89 = vpack.c.bf16 %v79, %v78
    %v90 = vpack.c.bf16 %v81, %v80
    %v91 = vpack.c.bf16 %v83, %v82
    %v92 = vld [vmem:[%s1] sm:$0xff]
    %v93 = vld [vmem:[%s1 + $0x8] sm:$0xff]
    %v94 = vld [vmem:[%s1 + $0x10] sm:$0xff]
    %v95 = vld [vmem:[%s1 + $0x18] sm:$0xff]
    %v96 = vld [vmem:[%s1 + $0x20] sm:$0xff]
    %v97 = vld [vmem:[%s1 + $0x28] sm:$0xff]
    %v98 = vld [vmem:[%s1 + $0x30] sm:$0xff]
    %v99 = vld [vmem:[%s1 + $0x38] sm:$0xff]
    %v108 = vunpack.c.l.b16 %v92
    %v109 = vunpack.c.h.b16 %v92
    %v110 = vunpack.c.l.b16 %v93
    %v111 = vunpack.c.h.b16 %v93
    %v112 = vunpack.c.l.b16 %v94
    %v113 = vunpack.c.h.b16 %v94
    %v114 = vunpack.c.l.b16 %v95
    %v115 = vunpack.c.h.b16 %v95
    %v116 = vunpack.c.l.b16 %v96
    %v117 = vunpack.c.h.b16 %v96
    %v118 = vunpack.c.l.b16 %v97
    %v119 = vunpack.c.h.b16 %v97
    %v120 = vunpack.c.l.b16 %v98
    %v121 = vunpack.c.h.b16 %v98
    %v122 = vunpack.c.l.b16 %v99
    %v123 = vunpack.c.h.b16 %v99
    %v124 = vpack.c.b16 %v110, %v108
    %v125 = vpack.c.b16 %v111, %v109
    %v126 = vpack.c.b16 %v114, %v112
    %v127 = vpack.c.b16 %v115, %v113
    %v128 = vpack.c.b16 %v118, %v116
    %v129 = vpack.c.b16 %v119, %v117
    %v130 = vpack.c.b16 %v122, %v120
    %v131 = vpack.c.b16 %v123, %v121
    %vm140 = vcmask 523264
    %v142 = vsel %vm140, %v84, 0
    %v145 = vsel %vm140, %v85, 0
    %v148 = vsel %vm140, %v86, 0
    %v151 = vsel %vm140, %v87, 0
    %v154 = vsel %vm140, %v88, 0
    %v157 = vsel %vm140, %v89, 0
    %v160 = vsel %vm140, %v90, 0
    %v163 = vsel %vm140, %v91, 0
    %165 = vmatprep.subr.bf16.mxu0 %v125
    %166 = vmatpush1.bf16.msra.mxu0 %v124
    %167 = vmatprep.subr.bf16.mxu0 %v127
    %168 = vmatpush1.bf16.msra.mxu0 %v126
    %169 = vmatprep.subr.bf16.mxu0 %v129
    %170 = vmatpush1.bf16.msra.mxu0 %v128
    %171 = vmatprep.subr.bf16.mxu0 %v131
    %172 = vmatpush1.bf16.msra.mxu0 %v130
    %173 = vmatprep.subr.bf16.mxu0 0
    %174 = vmatpush1.bf16.msra.mxu0 0
    %175 = vmatprep.subr.bf16.mxu0 0
    %176 = vmatpush1.bf16.msra.mxu0 0
    %177 = vmatprep.subr.bf16.mxu0 0
    %178 = vmatpush1.bf16.msra.mxu0 0
    %179 = vmatprep.subr.bf16.mxu0 0
    %180 = vmatpush1.bf16.msra.mxu0 0
    %181 = vmatprep.subr.bf16.mxu0 0
    %182 = vmatpush1.bf16.msra.mxu0 0
    %183 = vmatprep.subr.bf16.mxu0 0
    %184 = vmatpush1.bf16.msra.mxu0 0
    %185 = vmatprep.subr.bf16.mxu0 0
    %186 = vmatpush1.bf16.msra.mxu0 0
    %187 = vmatprep.subr.bf16.mxu0 0
    %188 = vmatpush1.bf16.msra.mxu0 0
    %189 = vmatprep.subr.bf16.mxu0 0
    %190 = vmatpush1.bf16.msra.mxu0 0
    %191 = vmatprep.subr.bf16.mxu0 0
    %192 = vmatpush1.bf16.msra.mxu0 0
    %193 = vmatprep.subr.bf16.mxu0 0
    %194 = vmatpush1.bf16.msra.mxu0 0
    %195 = vmatprep.subr.bf16.mxu0 0
    %196 = vmatpush1.bf16.msra.mxu0 0
    %197 = vmatprep.mubr.bf16.mxu0 0
    %198 = vmatmul.mubr.bf16.gmra.mrb[0].mxu0 %v142
    %v199 = vpop.f32.mrb[0].mxu0
    %v200 = vadd.f32 0.0, %v199
    %v201 = vpop.f32.mrb[0].mxu0
    %v202 = vadd.f32 0.0, %v201
    %v203 = vpop.f32.mrb[0].mxu0
    %v204 = vadd.f32 0.0, %v203
    %v205 = vpop.f32.mrb[0].mxu0
    %v206 = vadd.f32 0.0, %v205
    %207 = vmatprep.mubr.bf16.mxu0 0
    %208 = vmatmul.mubr.bf16.gmra.mrb[0].mxu0 %v145
    %v209 = vpop.f32.mrb[0].mxu0
    %v210 = vadd.f32 0.0, %v209
    %v211 = vpop.f32.mrb[0].mxu0
    %v212 = vadd.f32 0.0, %v211
    %v213 = vpop.f32.mrb[0].mxu0
    %v214 = vadd.f32 0.0, %v213
    %v215 = vpop.f32.mrb[0].mxu0
    %v216 = vadd.f32 0.0, %v215
    %217 = vmatprep.mubr.bf16.mxu0 0
    %218 = vmatmul.mubr.bf16.gmra.mrb[0].mxu0 %v148
    %v219 = vpop.f32.mrb[0].mxu0
    %v220 = vadd.f32 0.0, %v219
    %v221 = vpop.f32.mrb[0].mxu0
    %v222 = vadd.f32 0.0, %v221
    %v223 = vpop.f32.mrb[0].mxu0
    %v224 = vadd.f32 0.0, %v223
    %v225 = vpop.f32.mrb[0].mxu0
    %v226 = vadd.f32 0.0, %v225
    %227 = vmatprep.mubr.bf16.mxu0 0
    %228 = vmatmul.mubr.bf16.gmra.mrb[0].mxu0 %v151
    %v229 = vpop.f32.mrb[0].mxu0
    %v230 = vadd.f32 0.0, %v229
    %v231 = vpop.f32.mrb[0].mxu0
    %v232 = vadd.f32 0.0, %v231
    %v233 = vpop.f32.mrb[0].mxu0
    %v234 = vadd.f32 0.0, %v233
    %v235 = vpop.f32.mrb[0].mxu0
    %v236 = vadd.f32 0.0, %v235
    %237 = vmatprep.mubr.bf16.mxu0 0
    %238 = vmatmul.mubr.bf16.gmra.mrb[0].mxu0 %v154
    %v239 = vpop.f32.mrb[0].mxu0
    %v240 = vadd.f32 0.0, %v239
    %v241 = vpop.f32.mrb[0].mxu0
    %v242 = vadd.f32 0.0, %v241
    %v243 = vpop.f32.mrb[0].mxu0
    %v244 = vadd.f32 0.0, %v243
    %v245 = vpop.f32.mrb[0].mxu0
    %v246 = vadd.f32 0.0, %v245
    %247 = vmatprep.mubr.bf16.mxu0 0
    %248 = vmatmul.mubr.bf16.gmra.mrb[0].mxu0 %v157
    %v249 = vpop.f32.mrb[0].mxu0
    %v250 = vadd.f32 0.0, %v249
    %v251 = vpop.f32.mrb[0].mxu0
    %v252 = vadd.f32 0.0, %v251
    %v253 = vpop.f32.mrb[0].mxu0
    %v254 = vadd.f32 0.0, %v253
    %v255 = vpop.f32.mrb[0].mxu0
    %v256 = vadd.f32 0.0, %v255
    %257 = vmatprep.mubr.bf16.mxu0 0
    %258 = vmatmul.mubr.bf16.gmra.mrb[0].mxu0 %v160
    %v259 = vpop.f32.mrb[0].mxu0
    %v260 = vadd.f32 0.0, %v259
    %v261 = vpop.f32.mrb[0].mxu0
    %v262 = vadd.f32 0.0, %v261
    %v263 = vpop.f32.mrb[0].mxu0
    %v264 = vadd.f32 0.0, %v263
    %v265 = vpop.f32.mrb[0].mxu0
    %v266 = vadd.f32 0.0, %v265
    %267 = vmatprep.mubr.bf16.mxu0 0
    %268 = vmatmul.mubr.bf16.gmra.mrb[0].mxu0 %v163
    %v269 = vpop.f32.mrb[0].mxu0
    %v270 = vadd.f32 0.0, %v269
    %v271 = vpop.f32.mrb[0].mxu0
    %v272 = vadd.f32 0.0, %v271
    %v273 = vpop.f32.mrb[0].mxu0
    %v274 = vadd.f32 0.0, %v273
    %v275 = vpop.f32.mrb[0].mxu0
    %v276 = vadd.f32 0.0, %v275
    %277 = vdwg.mxu0
    %v278 = vadd.f32 %v200, %v204
    %v279 = vadd.f32 %v278, %v210
    %v280 = vadd.f32 %v279, %v214
    %v281 = vadd.f32 %v280, %v220
    %v282 = vadd.f32 %v281, %v224
    %v283 = vadd.f32 %v282, %v230
    %v284 = vadd.f32 %v283, %v234
    %v285 = vadd.f32 %v284, %v240
    %v286 = vadd.f32 %v285, %v244
    %v287 = vadd.f32 %v286, %v250
    %v288 = vadd.f32 %v287, %v254
    %v289 = vadd.f32 %v288, %v260
    %v290 = vadd.f32 %v289, %v264
    %v291 = vadd.f32 %v290, %v270
    %v292 = vadd.f32 %v291, %v274
    %v293 = vrot.slane %v292, 4
    %v294 = vadd.f32 %v292, %v293
    %v295 = vrot.slane %v294, 2
    %v296 = vadd.f32 %v294, %v295
    %v297 = vrot.slane %v296, 1
    %v298 = vadd.f32 %v296, %v297
    %v299 = vadd.f32 %v202, %v206
    %v300 = vadd.f32 %v299, %v212
    %v301 = vadd.f32 %v300, %v216
    %v302 = vadd.f32 %v301, %v222
    %v303 = vadd.f32 %v302, %v226
    %v304 = vadd.f32 %v303, %v232
    %v305 = vadd.f32 %v304, %v236
    %v306 = vadd.f32 %v305, %v242
    %v307 = vadd.f32 %v306, %v246
    %v308 = vadd.f32 %v307, %v252
    %v309 = vadd.f32 %v308, %v256
    %v310 = vadd.f32 %v309, %v262
    %v311 = vadd.f32 %v310, %v266
    %v312 = vadd.f32 %v311, %v272
    %v313 = vadd.f32 %v312, %v276
    %v314 = vrot.slane %v313, 4
    %v315 = vadd.f32 %v313, %v314
    %v316 = vrot.slane %v315, 2
    %v317 = vadd.f32 %v315, %v316
    %v318 = vrot.slane %v317, 1
    %v319 = vadd.f32 %v317, %v318
    %v320 = vrcp.pop 128.0
    %v321 = vmul.f32 %v298, %v320
    %v322 = vmul.f32 %v319, %v320
    %v323 = vmul.f32 %v200, %v200
    %v324 = vmul.f32 %v202, %v202
    %v325 = vmul.f32 %v204, %v204
    %v326 = vmul.f32 %v206, %v206
    %v327 = vmul.f32 %v210, %v210
    %v328 = vmul.f32 %v212, %v212
    %v329 = vmul.f32 %v214, %v214
    %v330 = vmul.f32 %v216, %v216
    %v331 = vmul.f32 %v220, %v220
    %v332 = vmul.f32 %v222, %v222
    %v333 = vmul.f32 %v224, %v224
    %v334 = vmul.f32 %v226, %v226
    %v335 = vmul.f32 %v230, %v230
    %v336 = vmul.f32 %v232, %v232
    %v337 = vmul.f32 %v234, %v234
    %v338 = vmul.f32 %v236, %v236
    %v339 = vmul.f32 %v240, %v240
    %v340 = vmul.f32 %v242, %v242
    %v341 = vmul.f32 %v244, %v244
    %v342 = vmul.f32 %v246, %v246
    %v343 = vmul.f32 %v250, %v250
    %v344 = vmul.f32 %v252, %v252
    %v345 = vmul.f32 %v254, %v254
    %v346 = vmul.f32 %v256, %v256
    %v347 = vmul.f32 %v260, %v260
    %v348 = vmul.f32 %v262, %v262
    %v349 = vmul.f32 %v264, %v264
    %v350 = vmul.f32 %v266, %v266
    %v351 = vmul.f32 %v270, %v270
    %v352 = vmul.f32 %v272, %v272
    %v353 = vmul.f32 %v274, %v274
    %v354 = vmul.f32 %v276, %v276
    %v355 = vadd.f32 %v323, %v325
    %v356 = vadd.f32 %v355, %v327
    %v357 = vadd.f32 %v356, %v329
    %v358 = vadd.f32 %v357, %v331
    %v359 = vadd.f32 %v358, %v333
    %v360 = vadd.f32 %v359, %v335
    %v361 = vadd.f32 %v360, %v337
    %v362 = vadd.f32 %v361, %v339
    %v363 = vadd.f32 %v362, %v341
    %v364 = vadd.f32 %v363, %v343
    %v365 = vadd.f32 %v364, %v345
    %v366 = vadd.f32 %v365, %v347
    %v367 = vadd.f32 %v366, %v349
    %v368 = vadd.f32 %v367, %v351
    %v369 = vadd.f32 %v368, %v353
    %v370 = vrot.slane %v369, 4
    %v371 = vadd.f32 %v369, %v370
    %v372 = vrot.slane %v371, 2
    %v373 = vadd.f32 %v371, %v372
    %v374 = vrot.slane %v373, 1
    %v375 = vadd.f32 %v373, %v374
    %v376 = vadd.f32 %v324, %v326
    %v377 = vadd.f32 %v376, %v328
    %v378 = vadd.f32 %v377, %v330
    %v379 = vadd.f32 %v378, %v332
    %v380 = vadd.f32 %v379, %v334
    %v381 = vadd.f32 %v380, %v336
    %v382 = vadd.f32 %v381, %v338
    %v383 = vadd.f32 %v382, %v340
    %v384 = vadd.f32 %v383, %v342
    %v385 = vadd.f32 %v384, %v344
    %v386 = vadd.f32 %v385, %v346
    %v387 = vadd.f32 %v386, %v348
    %v388 = vadd.f32 %v387, %v350
    %v389 = vadd.f32 %v388, %v352
    %v390 = vadd.f32 %v389, %v354
    %v391 = vrot.slane %v390, 4
    %v392 = vadd.f32 %v390, %v391
    %v393 = vrot.slane %v392, 2
    %v394 = vadd.f32 %v392, %v393
    %v395 = vrot.slane %v394, 1
    %v396 = vadd.f32 %v394, %v395
    %v397 = vmul.f32 %v375, %v320
    %v398 = vmul.f32 %v396, %v320
    %v399 = vmul.f32 %v321, %v321
    %v400 = vmul.f32 %v322, %v322
    %v401 = vsub.f32 %v397, %v399
    %v402 = vsub.f32 %v398, %v400
    %v403 = vadd.f32 %v401, 1e-05
    %v404 = vadd.f32 %v402, 1e-05
    %v405 = vrsqrt.pop %v403
    %v406 = vrsqrt.pop %v404
    %v409 = vcombine.low %v405, %v406
    %v411 = vunpack.c.l.s4 1966171168
    %v412 = vunpack.c.0.s8 %v411
    %v413 = vlaneseq
    %v414 = vshrl.u32 %v413, 7
    %v415 = vsub.s32 %v412, %v414
    %v416 = vrot.slane %v409, %v415
    %v418 = vunpack.c.l.s4 1966171168
    %v419 = vunpack.c.0.s8 %v418
    %v420 = vlaneseq
    %v421 = vshrl.u32 %v420, 7
    %v422 = vsub.s32 %v419, %v421
    %v423 = vrot.slane %v416, %v422
    %v425 = vmul.f32 %v65, %v423
    %v427 = vlaneseq
    %v428 = vshrl.u32 %v427, 7
    %v429 = vsub.s32 0, %v428
    %v430 = vrot.slane %v425, %v429
    %v431 = vlaneseq
    %v432 = vshrl.u32 %v431, 7
    %v433 = vsub.s32 1, %v432
    %v434 = vrot.slane %v425, %v433
    %v437 = vmul.f32 %v321, %v430
    %v438 = vmul.f32 %v322, %v434
    %v440 = vrot.slane %v65, 2
    %v444 = vcombine.low %v437, %v438
    %v446 = vunpack.c.l.s4 1966171168
    %v447 = vunpack.c.0.s8 %v446
    %v448 = vlaneseq
    %v449 = vshrl.u32 %v448, 7
    %v450 = vsub.s32 %v447, %v449
    %v451 = vrot.slane %v444, %v450
    %v453 = vunpack.c.l.s4 1966171168
    %v454 = vunpack.c.0.s8 %v453
    %v455 = vlaneseq
    %v456 = vshrl.u32 %v455, 7
    %v457 = vsub.s32 %v454, %v456
    %v458 = vrot.slane %v451, %v457
    %v460 = vsub.f32 %v440, %v458
    %v461 = vmul.f32 %v200, %v430
    %v462 = vmul.f32 %v202, %v434
    %v463 = vmul.f32 %v204, %v430
    %v464 = vmul.f32 %v206, %v434
    %v465 = vmul.f32 %v210, %v430
    %v466 = vmul.f32 %v212, %v434
    %v467 = vmul.f32 %v214, %v430
    %v468 = vmul.f32 %v216, %v434
    %v469 = vmul.f32 %v220, %v430
    %v470 = vmul.f32 %v222, %v434
    %v471 = vmul.f32 %v224, %v430
    %v472 = vmul.f32 %v226, %v434
    %v473 = vmul.f32 %v230, %v430
    %v474 = vmul.f32 %v232, %v434
    %v475 = vmul.f32 %v234, %v430
    %v476 = vmul.f32 %v236, %v434
    %v477 = vmul.f32 %v240, %v430
    %v478 = vmul.f32 %v242, %v434
    %v479 = vmul.f32 %v244, %v430
    %v480 = vmul.f32 %v246, %v434
    %v481 = vmul.f32 %v250, %v430
    %v482 = vmul.f32 %v252, %v434
    %v483 = vmul.f32 %v254, %v430
    %v484 = vmul.f32 %v256, %v434
    %v485 = vmul.f32 %v260, %v430
    %v486 = vmul.f32 %v262, %v434
    %v487 = vmul.f32 %v264, %v430
    %v488 = vmul.f32 %v266, %v434
    %v489 = vmul.f32 %v270, %v430
    %v490 = vmul.f32 %v272, %v434
    %v491 = vmul.f32 %v274, %v430
    %v492 = vmul.f32 %v276, %v434
    %v494 = vlaneseq
    %v495 = vshrl.u32 %v494, 7
    %v496 = vsub.s32 0, %v495
    %v497 = vrot.slane %v460, %v496
    %v498 = vlaneseq
    %v499 = vshrl.u32 %v498, 7
    %v500 = vsub.s32 1, %v499
    %v501 = vrot.slane %v460, %v500
    %v504 = vadd.f32 %v461, %v497
    %v505 = vadd.f32 %v462, %v501
    %v506 = vadd.f32 %v463, %v497
    %v507 = vadd.f32 %v464, %v501
    %v508 = vadd.f32 %v465, %v497
    %v509 = vadd.f32 %v466, %v501
    %v510 = vadd.f32 %v467, %v497
    %v511 = vadd.f32 %v468, %v501
    %v512 = vadd.f32 %v469, %v497
    %v513 = vadd.f32 %v470, %v501
    %v514 = vadd.f32 %v471, %v497
    %v515 = vadd.f32 %v472, %v501
    %v516 = vadd.f32 %v473, %v497
    %v517 = vadd.f32 %v474, %v501
    %v518 = vadd.f32 %v475, %v497
    %v519 = vadd.f32 %v476, %v501
    %v520 = vadd.f32 %v477, %v497
    %v521 = vadd.f32 %v478, %v501
    %v522 = vadd.f32 %v479, %v497
    %v523 = vadd.f32 %v480, %v501
    %v524 = vadd.f32 %v481, %v497
    %v525 = vadd.f32 %v482, %v501
    %v526 = vadd.f32 %v483, %v497
    %v527 = vadd.f32 %v484, %v501
    %v528 = vadd.f32 %v485, %v497
    %v529 = vadd.f32 %v486, %v501
    %v530 = vadd.f32 %v487, %v497
    %v531 = vadd.f32 %v488, %v501
    %v532 = vadd.f32 %v489, %v497
    %v533 = vadd.f32 %v490, %v501
    %v534 = vadd.f32 %v491, %v497
    %v535 = vadd.f32 %v492, %v501
    %v536 = vmax.f32 %v504, 0.0
    %v537 = vmax.f32 %v505, 0.0
    %v538 = vmax.f32 %v506, 0.0
    %v539 = vmax.f32 %v507, 0.0
    %v540 = vmax.f32 %v508, 0.0
    %v541 = vmax.f32 %v509, 0.0
    %v542 = vmax.f32 %v510, 0.0
    %v543 = vmax.f32 %v511, 0.0
    %v544 = vmax.f32 %v512, 0.0
    %v545 = vmax.f32 %v513, 0.0
    %v546 = vmax.f32 %v514, 0.0
    %v547 = vmax.f32 %v515, 0.0
    %v548 = vmax.f32 %v516, 0.0
    %v549 = vmax.f32 %v517, 0.0
    %v550 = vmax.f32 %v518, 0.0
    %v551 = vmax.f32 %v519, 0.0
    %v552 = vmax.f32 %v520, 0.0
    %v553 = vmax.f32 %v521, 0.0
    %v554 = vmax.f32 %v522, 0.0
    %v555 = vmax.f32 %v523, 0.0
    %v556 = vmax.f32 %v524, 0.0
    %v557 = vmax.f32 %v525, 0.0
    %v558 = vmax.f32 %v526, 0.0
    %v559 = vmax.f32 %v527, 0.0
    %v560 = vmax.f32 %v528, 0.0
    %v561 = vmax.f32 %v529, 0.0
    %v562 = vmax.f32 %v530, 0.0
    %v563 = vmax.f32 %v531, 0.0
    %v564 = vmax.f32 %v532, 0.0
    %v565 = vmax.f32 %v533, 0.0
    %v566 = vmax.f32 %v534, 0.0
    %v567 = vmax.f32 %v535, 0.0
    %v568 = vpack.c.bf16 %v538, %v536
    %v569 = vpack.c.bf16 %v539, %v537
    %v570 = vpack.c.bf16 %v542, %v540
    %v571 = vpack.c.bf16 %v543, %v541
    %v572 = vpack.c.bf16 %v546, %v544
    %v573 = vpack.c.bf16 %v547, %v545
    %v574 = vpack.c.bf16 %v550, %v548
    %v575 = vpack.c.bf16 %v551, %v549
    %v576 = vpack.c.bf16 %v554, %v552
    %v577 = vpack.c.bf16 %v555, %v553
    %v578 = vpack.c.bf16 %v558, %v556
    %v579 = vpack.c.bf16 %v559, %v557
    %v580 = vpack.c.bf16 %v562, %v560
    %v581 = vpack.c.bf16 %v563, %v561
    %v582 = vpack.c.bf16 %v566, %v564
    %v583 = vpack.c.bf16 %v567, %v565
    %v584 = vld [vmem:[#allocation2] sm:$0xff]
    %v585 = vld [vmem:[#allocation2 + $0x8] sm:$0xff]
    %v586 = vld [vmem:[#allocation2 + $0x10] sm:$0xff]
    %v587 = vld [vmem:[#allocation2 + $0x18] sm:$0xff]
    %v588 = vld [vmem:[#allocation2 + $0x20] sm:$0xff]
    %v589 = vld [vmem:[#allocation2 + $0x28] sm:$0xff]
    %v590 = vld [vmem:[#allocation2 + $0x30] sm:$0xff]
    %v591 = vld [vmem:[#allocation2 + $0x38] sm:$0xff]
    %v592 = vld [vmem:[#allocation2 + $0x40] sm:$0xff]
    %v593 = vld [vmem:[#allocation2 + $0x48] sm:$0xff]
    %v594 = vld [vmem:[#allocation2 + $0x50] sm:$0xff]
    %v595 = vld [vmem:[#allocation2 + $0x58] sm:$0xff]
    %v596 = vld [vmem:[#allocation2 + $0x60] sm:$0xff]
    %v597 = vld [vmem:[#allocation2 + $0x68] sm:$0xff]
    %v598 = vld [vmem:[#allocation2 + $0x70] sm:$0xff]
    %v599 = vld [vmem:[#allocation2 + $0x78] sm:$0xff]
    %v600 = vld [vmem:[#allocation2 + $0x80] sm:$0xff]
    %v601 = vld [vmem:[#allocation2 + $0x88] sm:$0xff]
    %v602 = vld [vmem:[#allocation2 + $0x90] sm:$0xff]
    %v603 = vld [vmem:[#allocation2 + $0x98] sm:$0xff]
    %v604 = vld [vmem:[#allocation2 + $0xa0] sm:$0xff]
    %v605 = vld [vmem:[#allocation2 + $0xa8] sm:$0xff]
    %v606 = vld [vmem:[#allocation2 + $0xb0] sm:$0xff]
    %v607 = vld [vmem:[#allocation2 + $0xb8] sm:$0xff]
    %v608 = vld [vmem:[#allocation2 + $0xc0] sm:$0xff]
    %v609 = vld [vmem:[#allocation2 + $0xc8] sm:$0xff]
    %v610 = vld [vmem:[#allocation2 + $0xd0] sm:$0xff]
    %v611 = vld [vmem:[#allocation2 + $0xd8] sm:$0xff]
    %v612 = vld [vmem:[#allocation2 + $0xe0] sm:$0xff]
    %v613 = vld [vmem:[#allocation2 + $0xe8] sm:$0xff]
    %v614 = vld [vmem:[#allocation2 + $0xf0] sm:$0xff]
    %v615 = vld [vmem:[#allocation2 + $0xf8] sm:$0xff]
    %v616 = vld [vmem:[#allocation2 + $0x100] sm:$0xff]
    %v617 = vld [vmem:[#allocation2 + $0x108] sm:$0xff]
    %v618 = vld [vmem:[#allocation2 + $0x110] sm:$0xff]
    %v619 = vld [vmem:[#allocation2 + $0x118] sm:$0xff]
    %v620 = vld [vmem:[#allocation2 + $0x120] sm:$0xff]
    %v621 = vld [vmem:[#allocation2 + $0x128] sm:$0xff]
    %v622 = vld [vmem:[#allocation2 + $0x130] sm:$0xff]
    %v623 = vld [vmem:[#allocation2 + $0x138] sm:$0xff]
    %v624 = vld [vmem:[#allocation2 + $0x140] sm:$0xff]
    %v625 = vld [vmem:[#allocation2 + $0x148] sm:$0xff]
    %v626 = vld [vmem:[#allocation2 + $0x150] sm:$0xff]
    %v627 = vld [vmem:[#allocation2 + $0x158] sm:$0xff]
    %v628 = vld [vmem:[#allocation2 + $0x160] sm:$0xff]
    %v629 = vld [vmem:[#allocation2 + $0x168] sm:$0xff]
    %v630 = vld [vmem:[#allocation2 + $0x170] sm:$0xff]
    %v631 = vld [vmem:[#allocation2 + $0x178] sm:$0xff]
    %v632 = vld [vmem:[#allocation2 + $0x180] sm:$0xff]
    %v633 = vld [vmem:[#allocation2 + $0x188] sm:$0xff]
    %v634 = vld [vmem:[#allocation2 + $0x190] sm:$0xff]
    %v635 = vld [vmem:[#allocation2 + $0x198] sm:$0xff]
    %v636 = vld [vmem:[#allocation2 + $0x1a0] sm:$0xff]
    %v637 = vld [vmem:[#allocation2 + $0x1a8] sm:$0xff]
    %v638 = vld [vmem:[#allocation2 + $0x1b0] sm:$0xff]
    %v639 = vld [vmem:[#allocation2 + $0x1b8] sm:$0xff]
    %v640 = vld [vmem:[#allocation2 + $0x1c0] sm:$0xff]
    %v641 = vld [vmem:[#allocation2 + $0x1c8] sm:$0xff]
    %v642 = vld [vmem:[#allocation2 + $0x1d0] sm:$0xff]
    %v643 = vld [vmem:[#allocation2 + $0x1d8] sm:$0xff]
    %v644 = vld [vmem:[#allocation2 + $0x1e0] sm:$0xff]
    %v645 = vld [vmem:[#allocation2 + $0x1e8] sm:$0xff]
    %v646 = vld [vmem:[#allocation2 + $0x1f0] sm:$0xff]
    %v647 = vld [vmem:[#allocation2 + $0x1f8] sm:$0xff]
    %v712 = vunpack.c.l.b16 %v584
    %v713 = vunpack.c.h.b16 %v584
    %v714 = vunpack.c.l.b16 %v585
    %v715 = vunpack.c.h.b16 %v585
    %v716 = vunpack.c.l.b16 %v586
    %v717 = vunpack.c.h.b16 %v586
    %v718 = vunpack.c.l.b16 %v587
    %v719 = vunpack.c.h.b16 %v587
    %v720 = vunpack.c.l.b16 %v588
    %v721 = vunpack.c.h.b16 %v588
    %v722 = vunpack.c.l.b16 %v589
    %v723 = vunpack.c.h.b16 %v589
    %v724 = vunpack.c.l.b16 %v590
    %v725 = vunpack.c.h.b16 %v590
    %v726 = vunpack.c.l.b16 %v591
    %v727 = vunpack.c.h.b16 %v591
    %v728 = vunpack.c.l.b16 %v592
    %v729 = vunpack.c.h.b16 %v592
    %v730 = vunpack.c.l.b16 %v593
    %v731 = vunpack.c.h.b16 %v593
    %v732 = vunpack.c.l.b16 %v594
    %v733 = vunpack.c.h.b16 %v594
    %v734 = vunpack.c.l.b16 %v595
    %v735 = vunpack.c.h.b16 %v595
    %v736 = vunpack.c.l.b16 %v596
    %v737 = vunpack.c.h.b16 %v596
    %v738 = vunpack.c.l.b16 %v597
    %v739 = vunpack.c.h.b16 %v597
    %v740 = vunpack.c.l.b16 %v598
    %v741 = vunpack.c.h.b16 %v598
    %v742 = vunpack.c.l.b16 %v599
    %v743 = vunpack.c.h.b16 %v599
    %v744 = vunpack.c.l.b16 %v600
    %v745 = vunpack.c.h.b16 %v600
    %v746 = vunpack.c.l.b16 %v601
    %v747 = vunpack.c.h.b16 %v601
    %v748 = vunpack.c.l.b16 %v602
    %v749 = vunpack.c.h.b16 %v602
    %v750 = vunpack.c.l.b16 %v603
    %v751 = vunpack.c.h.b16 %v603
    %v752 = vunpack.c.l.b16 %v604
    %v753 = vunpack.c.h.b16 %v604
    %v754 = vunpack.c.l.b16 %v605
    %v755 = vunpack.c.h.b16 %v605
    %v756 = vunpack.c.l.b16 %v606
    %v757 = vunpack.c.h.b16 %v606
    %v758 = vunpack.c.l.b16 %v607
    %v759 = vunpack.c.h.b16 %v607
    %v760 = vunpack.c.l.b16 %v608
    %v761 = vunpack.c.h.b16 %v608
    %v762 = vunpack.c.l.b16 %v609
    %v763 = vunpack.c.h.b16 %v609
    %v764 = vunpack.c.l.b16 %v610
    %v765 = vunpack.c.h.b16 %v610
    %v766 = vunpack.c.l.b16 %v611
    %v767 = vunpack.c.h.b16 %v611
    %v768 = vunpack.c.l.b16 %v612
    %v769 = vunpack.c.h.b16 %v612
    %v770 = vunpack.c.l.b16 %v613
    %v771 = vunpack.c.h.b16 %v613
    %v772 = vunpack.c.l.b16 %v614
    %v773 = vunpack.c.h.b16 %v614
    %v774 = vunpack.c.l.b16 %v615
    %v775 = vunpack.c.h.b16 %v615
    %v776 = vunpack.c.l.b16 %v616
    %v777 = vunpack.c.h.b16 %v616
    %v778 = vunpack.c.l.b16 %v617
    %v779 = vunpack.c.h.b16 %v617
    %v780 = vunpack.c.l.b16 %v618
    %v781 = vunpack.c.h.b16 %v618
    %v782 = vunpack.c.l.b16 %v619
    %v783 = vunpack.c.h.b16 %v619
    %v784 = vunpack.c.l.b16 %v620
    %v785 = vunpack.c.h.b16 %v620
    %v786 = vunpack.c.l.b16 %v621
    %v787 = vunpack.c.h.b16 %v621
    %v788 = vunpack.c.l.b16 %v622
    %v789 = vunpack.c.h.b16 %v622
    %v790 = vunpack.c.l.b16 %v623
    %v791 = vunpack.c.h.b16 %v623
    %v792 = vunpack.c.l.b16 %v624
    %v793 = vunpack.c.h.b16 %v624
    %v794 = vunpack.c.l.b16 %v625
    %v795 = vunpack.c.h.b16 %v625
    %v796 = vunpack.c.l.b16 %v626
    %v797 = vunpack.c.h.b16 %v626
    %v798 = vunpack.c.l.b16 %v627
    %v799 = vunpack.c.h.b16 %v627
    %v800 = vunpack.c.l.b16 %v628
    %v801 = vunpack.c.h.b16 %v628
    %v802 = vunpack.c.l.b16 %v629
    %v803 = vunpack.c.h.b16 %v629
    %v804 = vunpack.c.l.b16 %v630
    %v805 = vunpack.c.h.b16 %v630
    %v806 = vunpack.c.l.b16 %v631
    %v807 = vunpack.c.h.b16 %v631
    %v808 = vunpack.c.l.b16 %v632
    %v809 = vunpack.c.h.b16 %v632
    %v810 = vunpack.c.l.b16 %v633
    %v811 = vunpack.c.h.b16 %v633
    %v812 = vunpack.c.l.b16 %v634
    %v813 = vunpack.c.h.b16 %v634
    %v814 = vunpack.c.l.b16 %v635
    %v815 = vunpack.c.h.b16 %v635
    %v816 = vunpack.c.l.b16 %v636
    %v817 = vunpack.c.h.b16 %v636
    %v818 = vunpack.c.l.b16 %v637
    %v819 = vunpack.c.h.b16 %v637
    %v820 = vunpack.c.l.b16 %v638
    %v821 = vunpack.c.h.b16 %v638
    %v822 = vunpack.c.l.b16 %v639
    %v823 = vunpack.c.h.b16 %v639
    %v824 = vunpack.c.l.b16 %v640
    %v825 = vunpack.c.h.b16 %v640
    %v826 = vunpack.c.l.b16 %v641
    %v827 = vunpack.c.h.b16 %v641
    %v828 = vunpack.c.l.b16 %v642
    %v829 = vunpack.c.h.b16 %v642
    %v830 = vunpack.c.l.b16 %v643
    %v831 = vunpack.c.h.b16 %v643
    %v832 = vunpack.c.l.b16 %v644
    %v833 = vunpack.c.h.b16 %v644
    %v834 = vunpack.c.l.b16 %v645
    %v835 = vunpack.c.h.b16 %v645
    %v836 = vunpack.c.l.b16 %v646
    %v837 = vunpack.c.h.b16 %v646
    %v838 = vunpack.c.l.b16 %v647
    %v839 = vunpack.c.h.b16 %v647
    %v840 = vpack.c.b16 %v716, %v712
    %v841 = vpack.c.b16 %v717, %v713
    %v842 = vpack.c.b16 %v718, %v714
    %v843 = vpack.c.b16 %v719, %v715
    %v844 = vpack.c.b16 %v724, %v720
    %v845 = vpack.c.b16 %v725, %v721
    %v846 = vpack.c.b16 %v726, %v722
    %v847 = vpack.c.b16 %v727, %v723
    %v848 = vpack.c.b16 %v732, %v728
    %v849 = vpack.c.b16 %v733, %v729
    %v850 = vpack.c.b16 %v734, %v730
    %v851 = vpack.c.b16 %v735, %v731
    %v852 = vpack.c.b16 %v740, %v736
    %v853 = vpack.c.b16 %v741, %v737
    %v854 = vpack.c.b16 %v742, %v738
    %v855 = vpack.c.b16 %v743, %v739
    %v856 = vpack.c.b16 %v748, %v744
    %v857 = vpack.c.b16 %v749, %v745
    %v858 = vpack.c.b16 %v750, %v746
    %v859 = vpack.c.b16 %v751, %v747
    %v860 = vpack.c.b16 %v756, %v752
    %v861 = vpack.c.b16 %v757, %v753
    %v862 = vpack.c.b16 %v758, %v754
    %v863 = vpack.c.b16 %v759, %v755
    %v864 = vpack.c.b16 %v764, %v760
    %v865 = vpack.c.b16 %v765, %v761
    %v866 = vpack.c.b16 %v766, %v762
    %v867 = vpack.c.b16 %v767, %v763
    %v868 = vpack.c.b16 %v772, %v768
    %v869 = vpack.c.b16 %v773, %v769
    %v870 = vpack.c.b16 %v774, %v770
    %v871 = vpack.c.b16 %v775, %v771
    %v872 = vpack.c.b16 %v780, %v776
    %v873 = vpack.c.b16 %v781, %v777
    %v874 = vpack.c.b16 %v782, %v778
    %v875 = vpack.c.b16 %v783, %v779
    %v876 = vpack.c.b16 %v788, %v784
    %v877 = vpack.c.b16 %v789, %v785
    %v878 = vpack.c.b16 %v790, %v786
    %v879 = vpack.c.b16 %v791, %v787
    %v880 = vpack.c.b16 %v796, %v792
    %v881 = vpack.c.b16 %v797, %v793
    %v882 = vpack.c.b16 %v798, %v794
    %v883 = vpack.c.b16 %v799, %v795
    %v884 = vpack.c.b16 %v804, %v800
    %v885 = vpack.c.b16 %v805, %v801
    %v886 = vpack.c.b16 %v806, %v802
    %v887 = vpack.c.b16 %v807, %v803
    %v888 = vpack.c.b16 %v812, %v808
    %v889 = vpack.c.b16 %v813, %v809
    %v890 = vpack.c.b16 %v814, %v810
    %v891 = vpack.c.b16 %v815, %v811
    %v892 = vpack.c.b16 %v820, %v816
    %v893 = vpack.c.b16 %v821, %v817
    %v894 = vpack.c.b16 %v822, %v818
    %v895 = vpack.c.b16 %v823, %v819
    %v896 = vpack.c.b16 %v828, %v824
    %v897 = vpack.c.b16 %v829, %v825
    %v898 = vpack.c.b16 %v830, %v826
    %v899 = vpack.c.b16 %v831, %v827
    %v900 = vpack.c.b16 %v836, %v832
    %v901 = vpack.c.b16 %v837, %v833
    %v902 = vpack.c.b16 %v838, %v834
    %v903 = vpack.c.b16 %v839, %v835
    %968 = vmatprep.subr.bf16.mxu0 %v841
    %969 = vmatpush1.bf16.msra.mxu0 %v840
    %970 = vmatprep.subr.bf16.mxu0 %v845
    %971 = vmatpush1.bf16.msra.mxu0 %v844
    %972 = vmatprep.subr.bf16.mxu0 %v849
    %973 = vmatpush1.bf16.msra.mxu0 %v848
    %974 = vmatprep.subr.bf16.mxu0 %v853
    %975 = vmatpush1.bf16.msra.mxu0 %v852
    %976 = vmatprep.subr.bf16.mxu0 %v857
    %977 = vmatpush1.bf16.msra.mxu0 %v856
    %978 = vmatprep.subr.bf16.mxu0 %v861
    %979 = vmatpush1.bf16.msra.mxu0 %v860
    %980 = vmatprep.subr.bf16.mxu0 %v865
    %981 = vmatpush1.bf16.msra.mxu0 %v864
    %982 = vmatprep.subr.bf16.mxu0 %v869
    %983 = vmatpush1.bf16.msra.mxu0 %v868
    %984 = vmatprep.subr.bf16.mxu0 %v873
    %985 = vmatpush1.bf16.msra.mxu0 %v872
    %986 = vmatprep.subr.bf16.mxu0 %v877
    %987 = vmatpush1.bf16.msra.mxu0 %v876
    %988 = vmatprep.subr.bf16.mxu0 %v881
    %989 = vmatpush1.bf16.msra.mxu0 %v880
    %990 = vmatprep.subr.bf16.mxu0 %v885
    %991 = vmatpush1.bf16.msra.mxu0 %v884
    %992 = vmatprep.subr.bf16.mxu0 %v889
    %993 = vmatpush1.bf16.msra.mxu0 %v888
    %994 = vmatprep.subr.bf16.mxu0 %v893
    %995 = vmatpush1.bf16.msra.mxu0 %v892
    %996 = vmatprep.subr.bf16.mxu0 %v897
    %997 = vmatpush1.bf16.msra.mxu0 %v896
    %998 = vmatprep.subr.bf16.mxu0 %v901
    %999 = vmatpush1.bf16.msra.mxu0 %v900
    %1000 = vmatprep.mubr.bf16.mxu0 %v569
    %1001 = vmatmul.mubr.bf16.gmra.mrb[0].mxu0 %v568
    %v1002 = vpop.f32.mrb[0].mxu0
    %v1003 = vadd.f32 0.0, %v1002
    %v1004 = vpop.f32.mrb[0].mxu0
    %v1005 = vadd.f32 0.0, %v1004
    %v1006 = vpop.f32.mrb[0].mxu0
    %v1007 = vadd.f32 0.0, %v1006
    %v1008 = vpop.f32.mrb[0].mxu0
    %v1009 = vadd.f32 0.0, %v1008
    %1010 = vmatprep.mubr.bf16.mxu0 %v571
    %1011 = vmatmul.mubr.bf16.gmra.mrb[0].mxu0 %v570
    %v1012 = vpop.f32.mrb[0].mxu0
    %v1013 = vadd.f32 0.0, %v1012
    %v1014 = vpop.f32.mrb[0].mxu0
    %v1015 = vadd.f32 0.0, %v1014
    %v1016 = vpop.f32.mrb[0].mxu0
    %v1017 = vadd.f32 0.0, %v1016
    %v1018 = vpop.f32.mrb[0].mxu0
    %v1019 = vadd.f32 0.0, %v1018
    %1020 = vmatprep.mubr.bf16.mxu0 %v573
    %1021 = vmatmul.mubr.bf16.gmra.mrb[0].mxu0 %v572
    %v1022 = vpop.f32.mrb[0].mxu0
    %v1023 = vadd.f32 0.0, %v1022
    %v1024 = vpop.f32.mrb[0].mxu0
    %v1025 = vadd.f32 0.0, %v1024
    %v1026 = vpop.f32.mrb[0].mxu0
    %v1027 = vadd.f32 0.0, %v1026
    %v1028 = vpop.f32.mrb[0].mxu0
    %v1029 = vadd.f32 0.0, %v1028
    %1030 = vmatprep.mubr.bf16.mxu0 %v575
    %1031 = vmatmul.mubr.bf16.gmra.mrb[0].mxu0 %v574
    %v1032 = vpop.f32.mrb[0].mxu0
    %v1033 = vadd.f32 0.0, %v1032
    %v1034 = vpop.f32.mrb[0].mxu0
    %v1035 = vadd.f32 0.0, %v1034
    %v1036 = vpop.f32.mrb[0].mxu0
    %v1037 = vadd.f32 0.0, %v1036
    %v1038 = vpop.f32.mrb[0].mxu0
    %v1039 = vadd.f32 0.0, %v1038
    %1040 = vmatprep.mubr.bf16.mxu0 %v577
    %1041 = vmatmul.mubr.bf16.gmra.mrb[0].mxu0 %v576
    %v1042 = vpop.f32.mrb[0].mxu0
    %v1043 = vadd.f32 0.0, %v1042
    %v1044 = vpop.f32.mrb[0].mxu0
    %v1045 = vadd.f32 0.0, %v1044
    %v1046 = vpop.f32.mrb[0].mxu0
    %v1047 = vadd.f32 0.0, %v1046
    %v1048 = vpop.f32.mrb[0].mxu0
    %v1049 = vadd.f32 0.0, %v1048
    %1050 = vmatprep.mubr.bf16.mxu0 %v579
    %1051 = vmatmul.mubr.bf16.gmra.mrb[0].mxu0 %v578
    %v1052 = vpop.f32.mrb[0].mxu0
    %v1053 = vadd.f32 0.0, %v1052
    %v1054 = vpop.f32.mrb[0].mxu0
    %v1055 = vadd.f32 0.0, %v1054
    %v1056 = vpop.f32.mrb[0].mxu0
    %v1057 = vadd.f32 0.0, %v1056
    %v1058 = vpop.f32.mrb[0].mxu0
    %v1059 = vadd.f32 0.0, %v1058
    %1060 = vmatprep.mubr.bf16.mxu0 %v581
    %1061 = vmatmul.mubr.bf16.gmra.mrb[0].mxu0 %v580
    %v1062 = vpop.f32.mrb[0].mxu0
    %v1063 = vadd.f32 0.0, %v1062
    %v1064 = vpop.f32.mrb[0].mxu0
    %v1065 = vadd.f32 0.0, %v1064
    %v1066 = vpop.f32.mrb[0].mxu0
    %v1067 = vadd.f32 0.0, %v1066
    %v1068 = vpop.f32.mrb[0].mxu0
    %v1069 = vadd.f32 0.0, %v1068
    %1070 = vmatprep.mubr.bf16.mxu0 %v583
    %1071 = vmatmul.mubr.bf16.gmra.mrb[0].mxu0 %v582
    %v1072 = vpop.f32.mrb[0].mxu0
    %v1073 = vadd.f32 0.0, %v1072
    %v1074 = vpop.f32.mrb[0].mxu0
    %v1075 = vadd.f32 0.0, %v1074
    %v1076 = vpop.f32.mrb[0].mxu0
    %v1077 = vadd.f32 0.0, %v1076
    %v1078 = vpop.f32.mrb[0].mxu0
    %v1079 = vadd.f32 0.0, %v1078
    %1080 = vdwg.mxu0
    %1081 = vmatprep.subr.bf16.mxu0 %v843
    %1082 = vmatpush1.bf16.msra.mxu0 %v842
    %1083 = vmatprep.subr.bf16.mxu0 %v847
    %1084 = vmatpush1.bf16.msra.mxu0 %v846
    %1085 = vmatprep.subr.bf16.mxu0 %v851
    %1086 = vmatpush1.bf16.msra.mxu0 %v850
    %1087 = vmatprep.subr.bf16.mxu0 %v855
    %1088 = vmatpush1.bf16.msra.mxu0 %v854
    %1089 = vmatprep.subr.bf16.mxu0 %v859
    %1090 = vmatpush1.bf16.msra.mxu0 %v858
    %1091 = vmatprep.subr.bf16.mxu0 %v863
    %1092 = vmatpush1.bf16.msra.mxu0 %v862
    %1093 = vmatprep.subr.bf16.mxu0 %v867
    %1094 = vmatpush1.bf16.msra.mxu0 %v866
    %1095 = vmatprep.subr.bf16.mxu0 %v871
    %1096 = vmatpush1.bf16.msra.mxu0 %v870
    %1097 = vmatprep.subr.bf16.mxu0 %v875
    %1098 = vmatpush1.bf16.msra.mxu0 %v874
    %1099 = vmatprep.subr.bf16.mxu0 %v879
    %1100 = vmatpush1.bf16.msra.mxu0 %v878
    %1101 = vmatprep.subr.bf16.mxu0 %v883
    %1102 = vmatpush1.bf16.msra.mxu0 %v882
    %1103 = vmatprep.subr.bf16.mxu0 %v887
    %1104 = vmatpush1.bf16.msra.mxu0 %v886
    %1105 = vmatprep.subr.bf16.mxu0 %v891
    %1106 = vmatpush1.bf16.msra.mxu0 %v890
    %1107 = vmatprep.subr.bf16.mxu0 %v895
    %1108 = vmatpush1.bf16.msra.mxu0 %v894
    %1109 = vmatprep.subr.bf16.mxu0 %v899
    %1110 = vmatpush1.bf16.msra.mxu0 %v898
    %1111 = vmatprep.subr.bf16.mxu0 %v903
    %1112 = vmatpush1.bf16.msra.mxu0 %v902
    %1113 = vmatprep.mubr.bf16.mxu0 %v569
    %1114 = vmatmul.mubr.bf16.gmra.mrb[0].mxu0 %v568
    %v1115 = vpop.f32.mrb[0].mxu0
    %v1116 = vadd.f32 0.0, %v1115
    %v1117 = vpop.f32.mrb[0].mxu0
    %v1118 = vadd.f32 0.0, %v1117
    %v1119 = vpop.f32.mrb[0].mxu0
    %v1120 = vadd.f32 0.0, %v1119
    %v1121 = vpop.f32.mrb[0].mxu0
    %v1122 = vadd.f32 0.0, %v1121
    %1123 = vmatprep.mubr.bf16.mxu0 %v571
    %1124 = vmatmul.mubr.bf16.gmra.mrb[0].mxu0 %v570
    %v1125 = vpop.f32.mrb[0].mxu0
    %v1126 = vadd.f32 0.0, %v1125
    %v1127 = vpop.f32.mrb[0].mxu0
    %v1128 = vadd.f32 0.0, %v1127
    %v1129 = vpop.f32.mrb[0].mxu0
    %v1130 = vadd.f32 0.0, %v1129
    %v1131 = vpop.f32.mrb[0].mxu0
    %v1132 = vadd.f32 0.0, %v1131
    %1133 = vmatprep.mubr.bf16.mxu0 %v573
    %1134 = vmatmul.mubr.bf16.gmra.mrb[0].mxu0 %v572
    %v1135 = vpop.f32.mrb[0].mxu0
    %v1136 = vadd.f32 0.0, %v1135
    %v1137 = vpop.f32.mrb[0].mxu0
    %v1138 = vadd.f32 0.0, %v1137
    %v1139 = vpop.f32.mrb[0].mxu0
    %v1140 = vadd.f32 0.0, %v1139
    %v1141 = vpop.f32.mrb[0].mxu0
    %v1142 = vadd.f32 0.0, %v1141
    %1143 = vmatprep.mubr.bf16.mxu0 %v575
    %1144 = vmatmul.mubr.bf16.gmra.mrb[0].mxu0 %v574
    %v1145 = vpop.f32.mrb[0].mxu0
    %v1146 = vadd.f32 0.0, %v1145
    %v1147 = vpop.f32.mrb[0].mxu0
    %v1148 = vadd.f32 0.0, %v1147
    %v1149 = vpop.f32.mrb[0].mxu0
    %v1150 = vadd.f32 0.0, %v1149
    %v1151 = vpop.f32.mrb[0].mxu0
    %v1152 = vadd.f32 0.0, %v1151
    %1153 = vmatprep.mubr.bf16.mxu0 %v577
    %1154 = vmatmul.mubr.bf16.gmra.mrb[0].mxu0 %v576
    %v1155 = vpop.f32.mrb[0].mxu0
    %v1156 = vadd.f32 0.0, %v1155
    %v1157 = vpop.f32.mrb[0].mxu0
    %v1158 = vadd.f32 0.0, %v1157
    %v1159 = vpop.f32.mrb[0].mxu0
    %v1160 = vadd.f32 0.0, %v1159
    %v1161 = vpop.f32.mrb[0].mxu0
    %v1162 = vadd.f32 0.0, %v1161
    %1163 = vmatprep.mubr.bf16.mxu0 %v579
    %1164 = vmatmul.mubr.bf16.gmra.mrb[0].mxu0 %v578
    %v1165 = vpop.f32.mrb[0].mxu0
    %v1166 = vadd.f32 0.0, %v1165
    %v1167 = vpop.f32.mrb[0].mxu0
    %v1168 = vadd.f32 0.0, %v1167
    %v1169 = vpop.f32.mrb[0].mxu0
    %v1170 = vadd.f32 0.0, %v1169
    %v1171 = vpop.f32.mrb[0].mxu0
    %v1172 = vadd.f32 0.0, %v1171
    %1173 = vmatprep.mubr.bf16.mxu0 %v581
    %1174 = vmatmul.mubr.bf16.gmra.mrb[0].mxu0 %v580
    %v1175 = vpop.f32.mrb[0].mxu0
    %v1176 = vadd.f32 0.0, %v1175
    %v1177 = vpop.f32.mrb[0].mxu0
    %v1178 = vadd.f32 0.0, %v1177
    %v1179 = vpop.f32.mrb[0].mxu0
    %v1180 = vadd.f32 0.0, %v1179
    %v1181 = vpop.f32.mrb[0].mxu0
    %v1182 = vadd.f32 0.0, %v1181
    %1183 = vmatprep.mubr.bf16.mxu0 %v583
    %1184 = vmatmul.mubr.bf16.gmra.mrb[0].mxu0 %v582
    %v1185 = vpop.f32.mrb[0].mxu0
    %v1186 = vadd.f32 0.0, %v1185
    %v1187 = vpop.f32.mrb[0].mxu0
    %v1188 = vadd.f32 0.0, %v1187
    %v1189 = vpop.f32.mrb[0].mxu0
    %v1190 = vadd.f32 0.0, %v1189
    %v1191 = vpop.f32.mrb[0].mxu0
    %v1192 = vadd.f32 0.0, %v1191
    %1193 = vdwg.mxu0
    %v1194 = vadd.f32 %v1003, %v1007
    %v1195 = vadd.f32 %v1194, %v1013
    %v1196 = vadd.f32 %v1195, %v1017
    %v1197 = vadd.f32 %v1196, %v1023
    %v1198 = vadd.f32 %v1197, %v1027
    %v1199 = vadd.f32 %v1198, %v1033
    %v1200 = vadd.f32 %v1199, %v1037
    %v1201 = vadd.f32 %v1200, %v1043
    %v1202 = vadd.f32 %v1201, %v1047
    %v1203 = vadd.f32 %v1202, %v1053
    %v1204 = vadd.f32 %v1203, %v1057
    %v1205 = vadd.f32 %v1204, %v1063
    %v1206 = vadd.f32 %v1205, %v1067
    %v1207 = vadd.f32 %v1206, %v1073
    %v1208 = vadd.f32 %v1207, %v1077
    %v1209 = vrot.slane %v1208, 4
    %v1210 = vadd.f32 %v1208, %v1209
    %v1211 = vrot.slane %v1210, 2
    %v1212 = vadd.f32 %v1210, %v1211
    %v1213 = vrot.slane %v1212, 1
    %v1214 = vadd.f32 %v1212, %v1213
    %v1215 = vadd.f32 %v1005, %v1009
    %v1216 = vadd.f32 %v1215, %v1015
    %v1217 = vadd.f32 %v1216, %v1019
    %v1218 = vadd.f32 %v1217, %v1025
    %v1219 = vadd.f32 %v1218, %v1029
    %v1220 = vadd.f32 %v1219, %v1035
    %v1221 = vadd.f32 %v1220, %v1039
    %v1222 = vadd.f32 %v1221, %v1045
    %v1223 = vadd.f32 %v1222, %v1049
    %v1224 = vadd.f32 %v1223, %v1055
    %v1225 = vadd.f32 %v1224, %v1059
    %v1226 = vadd.f32 %v1225, %v1065
    %v1227 = vadd.f32 %v1226, %v1069
    %v1228 = vadd.f32 %v1227, %v1075
    %v1229 = vadd.f32 %v1228, %v1079
    %v1230 = vrot.slane %v1229, 4
    %v1231 = vadd.f32 %v1229, %v1230
    %v1232 = vrot.slane %v1231, 2
    %v1233 = vadd.f32 %v1231, %v1232
    %v1234 = vrot.slane %v1233, 1
    %v1235 = vadd.f32 %v1233, %v1234
    %v1236 = vadd.f32 %v1116, %v1120
    %v1237 = vadd.f32 %v1236, %v1126
    %v1238 = vadd.f32 %v1237, %v1130
    %v1239 = vadd.f32 %v1238, %v1136
    %v1240 = vadd.f32 %v1239, %v1140
    %v1241 = vadd.f32 %v1240, %v1146
    %v1242 = vadd.f32 %v1241, %v1150
    %v1243 = vadd.f32 %v1242, %v1156
    %v1244 = vadd.f32 %v1243, %v1160
    %v1245 = vadd.f32 %v1244, %v1166
    %v1246 = vadd.f32 %v1245, %v1170
    %v1247 = vadd.f32 %v1246, %v1176
    %v1248 = vadd.f32 %v1247, %v1180
    %v1249 = vadd.f32 %v1248, %v1186
    %v1250 = vadd.f32 %v1249, %v1190
    %v1251 = vrot.slane %v1250, 4
    %v1252 = vadd.f32 %v1250, %v1251
    %v1253 = vrot.slane %v1252, 2
    %v1254 = vadd.f32 %v1252, %v1253
    %v1255 = vrot.slane %v1254, 1
    %v1256 = vadd.f32 %v1254, %v1255
    %v1257 = vadd.f32 %v1118, %v1122
    %v1258 = vadd.f32 %v1257, %v1128
    %v1259 = vadd.f32 %v1258, %v1132
    %v1260 = vadd.f32 %v1259, %v1138
    %v1261 = vadd.f32 %v1260, %v1142
    %v1262 = vadd.f32 %v1261, %v1148
    %v1263 = vadd.f32 %v1262, %v1152
    %v1264 = vadd.f32 %v1263, %v1158
    %v1265 = vadd.f32 %v1264, %v1162
    %v1266 = vadd.f32 %v1265, %v1168
    %v1267 = vadd.f32 %v1266, %v1172
    %v1268 = vadd.f32 %v1267, %v1178
    %v1269 = vadd.f32 %v1268, %v1182
    %v1270 = vadd.f32 %v1269, %v1188
    %v1271 = vadd.f32 %v1270, %v1192
    %v1272 = vrot.slane %v1271, 4
    %v1273 = vadd.f32 %v1271, %v1272
    %v1274 = vrot.slane %v1273, 2
    %v1275 = vadd.f32 %v1273, %v1274
    %v1276 = vrot.slane %v1275, 1
    %v1277 = vadd.f32 %v1275, %v1276
    %v1278 = vmul.f32 %v1214, %v320
    %v1279 = vmul.f32 %v1235, %v320
    %v1280 = vmul.f32 %v1256, %v320
    %v1281 = vmul.f32 %v1277, %v320
    %v1282 = vmul.f32 %v1003, %v1003
    %v1283 = vmul.f32 %v1005, %v1005
    %v1284 = vmul.f32 %v1116, %v1116
    %v1285 = vmul.f32 %v1118, %v1118
    %v1286 = vmul.f32 %v1007, %v1007
    %v1287 = vmul.f32 %v1009, %v1009
    %v1288 = vmul.f32 %v1120, %v1120
    %v1289 = vmul.f32 %v1122, %v1122
    %v1290 = vmul.f32 %v1013, %v1013
    %v1291 = vmul.f32 %v1015, %v1015
    %v1292 = vmul.f32 %v1126, %v1126
    %v1293 = vmul.f32 %v1128, %v1128
    %v1294 = vmul.f32 %v1017, %v1017
    %v1295 = vmul.f32 %v1019, %v1019
    %v1296 = vmul.f32 %v1130, %v1130
    %v1297 = vmul.f32 %v1132, %v1132
    %v1298 = vmul.f32 %v1023, %v1023
    %v1299 = vmul.f32 %v1025, %v1025
    %v1300 = vmul.f32 %v1136, %v1136
    %v1301 = vmul.f32 %v1138, %v1138
    %v1302 = vmul.f32 %v1027, %v1027
    %v1303 = vmul.f32 %v1029, %v1029
    %v1304 = vmul.f32 %v1140, %v1140
    %v1305 = vmul.f32 %v1142, %v1142
    %v1306 = vmul.f32 %v1033, %v1033
    %v1307 = vmul.f32 %v1035, %v1035
    %v1308 = vmul.f32 %v1146, %v1146
    %v1309 = vmul.f32 %v1148, %v1148
    %v1310 = vmul.f32 %v1037, %v1037
    %v1311 = vmul.f32 %v1039, %v1039
    %v1312 = vmul.f32 %v1150, %v1150
    %v1313 = vmul.f32 %v1152, %v1152
    %v1314 = vmul.f32 %v1043, %v1043
    %v1315 = vmul.f32 %v1045, %v1045
    %v1316 = vmul.f32 %v1156, %v1156
    %v1317 = vmul.f32 %v1158, %v1158
    %v1318 = vmul.f32 %v1047, %v1047
    %v1319 = vmul.f32 %v1049, %v1049
    %v1320 = vmul.f32 %v1160, %v1160
    %v1321 = vmul.f32 %v1162, %v1162
    %v1322 = vmul.f32 %v1053, %v1053
    %v1323 = vmul.f32 %v1055, %v1055
    %v1324 = vmul.f32 %v1166, %v1166
    %v1325 = vmul.f32 %v1168, %v1168
    %v1326 = vmul.f32 %v1057, %v1057
    %v1327 = vmul.f32 %v1059, %v1059
    %v1328 = vmul.f32 %v1170, %v1170
    %v1329 = vmul.f32 %v1172, %v1172
    %v1330 = vmul.f32 %v1063, %v1063
    %v1331 = vmul.f32 %v1065, %v1065
    %v1332 = vmul.f32 %v1176, %v1176
    %v1333 = vmul.f32 %v1178, %v1178
    %v1334 = vmul.f32 %v1067, %v1067
    %v1335 = vmul.f32 %v1069, %v1069
    %v1336 = vmul.f32 %v1180, %v1180
    %v1337 = vmul.f32 %v1182, %v1182
    %v1338 = vmul.f32 %v1073, %v1073
    %v1339 = vmul.f32 %v1075, %v1075
    %v1340 = vmul.f32 %v1186, %v1186
    %v1341 = vmul.f32 %v1188, %v1188
    %v1342 = vmul.f32 %v1077, %v1077
    %v1343 = vmul.f32 %v1079, %v1079
    %v1344 = vmul.f32 %v1190, %v1190
    %v1345 = vmul.f32 %v1192, %v1192
    %v1346 = vadd.f32 %v1282, %v1286
    %v1347 = vadd.f32 %v1346, %v1290
    %v1348 = vadd.f32 %v1347, %v1294
    %v1349 = vadd.f32 %v1348, %v1298
    %v1350 = vadd.f32 %v1349, %v1302
    %v1351 = vadd.f32 %v1350, %v1306
    %v1352 = vadd.f32 %v1351, %v1310
    %v1353 = vadd.f32 %v1352, %v1314
    %v1354 = vadd.f32 %v1353, %v1318
    %v1355 = vadd.f32 %v1354, %v1322
    %v1356 = vadd.f32 %v1355, %v1326
    %v1357 = vadd.f32 %v1356, %v1330
    %v1358 = vadd.f32 %v1357, %v1334
    %v1359 = vadd.f32 %v1358, %v1338
    %v1360 = vadd.f32 %v1359, %v1342
    %v1361 = vrot.slane %v1360, 4
    %v1362 = vadd.f32 %v1360, %v1361
    %v1363 = vrot.slane %v1362, 2
    %v1364 = vadd.f32 %v1362, %v1363
    %v1365 = vrot.slane %v1364, 1
    %v1366 = vadd.f32 %v1364, %v1365
    %v1367 = vadd.f32 %v1283, %v1287
    %v1368 = vadd.f32 %v1367, %v1291
    %v1369 = vadd.f32 %v1368, %v1295
    %v1370 = vadd.f32 %v1369, %v1299
    %v1371 = vadd.f32 %v1370, %v1303
    %v1372 = vadd.f32 %v1371, %v1307
    %v1373 = vadd.f32 %v1372, %v1311
    %v1374 = vadd.f32 %v1373, %v1315
    %v1375 = vadd.f32 %v1374, %v1319
    %v1376 = vadd.f32 %v1375, %v1323
    %v1377 = vadd.f32 %v1376, %v1327
    %v1378 = vadd.f32 %v1377, %v1331
    %v1379 = vadd.f32 %v1378, %v1335
    %v1380 = vadd.f32 %v1379, %v1339
    %v1381 = vadd.f32 %v1380, %v1343
    %v1382 = vrot.slane %v1381, 4
    %v1383 = vadd.f32 %v1381, %v1382
    %v1384 = vrot.slane %v1383, 2
    %v1385 = vadd.f32 %v1383, %v1384
    %v1386 = vrot.slane %v1385, 1
    %v1387 = vadd.f32 %v1385, %v1386
    %v1388 = vadd.f32 %v1284, %v1288
    %v1389 = vadd.f32 %v1388, %v1292
    %v1390 = vadd.f32 %v1389, %v1296
    %v1391 = vadd.f32 %v1390, %v1300
    %v1392 = vadd.f32 %v1391, %v1304
    %v1393 = vadd.f32 %v1392, %v1308
    %v1394 = vadd.f32 %v1393, %v1312
    %v1395 = vadd.f32 %v1394, %v1316
    %v1396 = vadd.f32 %v1395, %v1320
    %v1397 = vadd.f32 %v1396, %v1324
    %v1398 = vadd.f32 %v1397, %v1328
    %v1399 = vadd.f32 %v1398, %v1332
    %v1400 = vadd.f32 %v1399, %v1336
    %v1401 = vadd.f32 %v1400, %v1340
    %v1402 = vadd.f32 %v1401, %v1344
    %v1403 = vrot.slane %v1402, 4
    %v1404 = vadd.f32 %v1402, %v1403
    %v1405 = vrot.slane %v1404, 2
    %v1406 = vadd.f32 %v1404, %v1405
    %v1407 = vrot.slane %v1406, 1
    %v1408 = vadd.f32 %v1406, %v1407
    %v1409 = vadd.f32 %v1285, %v1289
    %v1410 = vadd.f32 %v1409, %v1293
    %v1411 = vadd.f32 %v1410, %v1297
    %v1412 = vadd.f32 %v1411, %v1301
    %v1413 = vadd.f32 %v1412, %v1305
    %v1414 = vadd.f32 %v1413, %v1309
    %v1415 = vadd.f32 %v1414, %v1313
    %v1416 = vadd.f32 %v1415, %v1317
    %v1417 = vadd.f32 %v1416, %v1321
    %v1418 = vadd.f32 %v1417, %v1325
    %v1419 = vadd.f32 %v1418, %v1329
    %v1420 = vadd.f32 %v1419, %v1333
    %v1421 = vadd.f32 %v1420, %v1337
    %v1422 = vadd.f32 %v1421, %v1341
    %v1423 = vadd.f32 %v1422, %v1345
    %v1424 = vrot.slane %v1423, 4
    %v1425 = vadd.f32 %v1423, %v1424
    %v1426 = vrot.slane %v1425, 2
    %v1427 = vadd.f32 %v1425, %v1426
    %v1428 = vrot.slane %v1427, 1
    %v1429 = vadd.f32 %v1427, %v1428
    %v1430 = vmul.f32 %v1366, %v320
    %v1431 = vmul.f32 %v1387, %v320
    %v1432 = vmul.f32 %v1408, %v320
    %v1433 = vmul.f32 %v1429, %v320
    %v1434 = vmul.f32 %v1278, %v1278
    %v1435 = vmul.f32 %v1279, %v1279
    %v1436 = vmul.f32 %v1280, %v1280
    %v1437 = vmul.f32 %v1281, %v1281
    %v1438 = vsub.f32 %v1430, %v1434
    %v1439 = vsub.f32 %v1431, %v1435
    %v1440 = vsub.f32 %v1432, %v1436
    %v1441 = vsub.f32 %v1433, %v1437
    %v1442 = vadd.f32 %v1438, 1e-05
    %v1443 = vadd.f32 %v1439, 1e-05
    %v1444 = vadd.f32 %v1440, 1e-05
    %v1445 = vadd.f32 %v1441, 1e-05
    %v1446 = vrsqrt.pop %v1442
    %v1447 = vrsqrt.pop %v1443
    %v1448 = vrsqrt.pop %v1444
    %v1449 = vrsqrt.pop %v1445
    %v1450 = vrot.slane %v65, 4
    %v1456 = vcombine.low %v1446, %v1447
    %v1457 = vcombine.low %v1448, %v1449
    %v1459 = vunpack.c.l.s4 1966171168
    %v1460 = vunpack.c.0.s8 %v1459
    %v1461 = vlaneseq
    %v1462 = vshrl.u32 %v1461, 7
    %v1463 = vsub.s32 %v1460, %v1462
    %v1464 = vrot.slane %v1456, %v1463
    %v1466 = vunpack.c.l.s4 1966171168
    %v1467 = vunpack.c.0.s8 %v1466
    %v1468 = vlaneseq
    %v1469 = vshrl.u32 %v1468, 7
    %v1470 = vsub.s32 %v1467, %v1469
    %v1471 = vrot.slane %v1457, %v1470
    %v1472 = vcombine.low %v1464, %v1471
    %v1474 = vunpack.c.l.s4 1966171168
    %v1475 = vunpack.c.0.s8 %v1474
    %v1476 = vlaneseq
    %v1477 = vshrl.u32 %v1476, 7
    %v1478 = vsub.s32 %v1475, %v1477
    %v1479 = vrot.slane %v1472, %v1478
    %v1481 = vmul.f32 %v1450, %v1479
    %v1483 = vlaneseq
    %v1484 = vshrl.u32 %v1483, 7
    %v1485 = vsub.s32 0, %v1484
    %v1486 = vrot.slane %v1481, %v1485
    %v1487 = vlaneseq
    %v1488 = vshrl.u32 %v1487, 7
    %v1489 = vsub.s32 1, %v1488
    %v1490 = vrot.slane %v1481, %v1489
    %v1491 = vlaneseq
    %v1492 = vshrl.u32 %v1491, 7
    %v1493 = vsub.s32 2, %v1492
    %v1494 = vrot.slane %v1481, %v1493
    %v1495 = vlaneseq
    %v1496 = vshrl.u32 %v1495, 7
    %v1497 = vsub.s32 3, %v1496
    %v1498 = vrot.slane %v1481, %v1497
    %v1503 = vmul.f32 %v1278, %v1486
    %v1504 = vmul.f32 %v1279, %v1490
    %v1505 = vmul.f32 %v1280, %v1494
    %v1506 = vmul.f32 %v1281, %v1498
    %v1511 = vcombine.low %v1503, %v1504
    %v1512 = vcombine.low %v1505, %v1506
    %v1514 = vunpack.c.l.s4 1966171168
    %v1515 = vunpack.c.0.s8 %v1514
    %v1516 = vlaneseq
    %v1517 = vshrl.u32 %v1516, 7
    %v1518 = vsub.s32 %v1515, %v1517
    %v1519 = vrot.slane %v1511, %v1518
    %v1521 = vunpack.c.l.s4 1966171168
    %v1522 = vunpack.c.0.s8 %v1521
    %v1523 = vlaneseq
    %v1524 = vshrl.u32 %v1523, 7
    %v1525 = vsub.s32 %v1522, %v1524
    %v1526 = vrot.slane %v1512, %v1525
    %v1527 = vcombine.low %v1519, %v1526
    %v1529 = vunpack.c.l.s4 1966171168
    %v1530 = vunpack.c.0.s8 %v1529
    %v1531 = vlaneseq
    %v1532 = vshrl.u32 %v1531, 7
    %v1533 = vsub.s32 %v1530, %v1532
    %v1534 = vrot.slane %v1527, %v1533
    %v1536 = vsub.f32 %v66, %v1534
    %v1537 = vmul.f32 %v1003, %v1486
    %v1538 = vmul.f32 %v1005, %v1490
    %v1539 = vmul.f32 %v1116, %v1494
    %v1540 = vmul.f32 %v1118, %v1498
    %v1541 = vmul.f32 %v1007, %v1486
    %v1542 = vmul.f32 %v1009, %v1490
    %v1543 = vmul.f32 %v1120, %v1494
    %v1544 = vmul.f32 %v1122, %v1498
    %v1545 = vmul.f32 %v1013, %v1486
    %v1546 = vmul.f32 %v1015, %v1490
    %v1547 = vmul.f32 %v1126, %v1494
    %v1548 = vmul.f32 %v1128, %v1498
    %v1549 = vmul.f32 %v1017, %v1486
    %v1550 = vmul.f32 %v1019, %v1490
    %v1551 = vmul.f32 %v1130, %v1494
    %v1552 = vmul.f32 %v1132, %v1498
    %v1553 = vmul.f32 %v1023, %v1486
    %v1554 = vmul.f32 %v1025, %v1490
    %v1555 = vmul.f32 %v1136, %v1494
    %v1556 = vmul.f32 %v1138, %v1498
    %v1557 = vmul.f32 %v1027, %v1486
    %v1558 = vmul.f32 %v1029, %v1490
    %v1559 = vmul.f32 %v1140, %v1494
    %v1560 = vmul.f32 %v1142, %v1498
    %v1561 = vmul.f32 %v1033, %v1486
    %v1562 = vmul.f32 %v1035, %v1490
    %v1563 = vmul.f32 %v1146, %v1494
    %v1564 = vmul.f32 %v1148, %v1498
    %v1565 = vmul.f32 %v1037, %v1486
    %v1566 = vmul.f32 %v1039, %v1490
    %v1567 = vmul.f32 %v1150, %v1494
    %v1568 = vmul.f32 %v1152, %v1498
    %v1569 = vmul.f32 %v1043, %v1486
    %v1570 = vmul.f32 %v1045, %v1490
    %v1571 = vmul.f32 %v1156, %v1494
    %v1572 = vmul.f32 %v1158, %v1498
    %v1573 = vmul.f32 %v1047, %v1486
    %v1574 = vmul.f32 %v1049, %v1490
    %v1575 = vmul.f32 %v1160, %v1494
    %v1576 = vmul.f32 %v1162, %v1498
    %v1577 = vmul.f32 %v1053, %v1486
    %v1578 = vmul.f32 %v1055, %v1490
    %v1579 = vmul.f32 %v1166, %v1494
    %v1580 = vmul.f32 %v1168, %v1498
    %v1581 = vmul.f32 %v1057, %v1486
    %v1582 = vmul.f32 %v1059, %v1490
    %v1583 = vmul.f32 %v1170, %v1494
    %v1584 = vmul.f32 %v1172, %v1498
    %v1585 = vmul.f32 %v1063, %v1486
    %v1586 = vmul.f32 %v1065, %v1490
    %v1587 = vmul.f32 %v1176, %v1494
    %v1588 = vmul.f32 %v1178, %v1498
    %v1589 = vmul.f32 %v1067, %v1486
    %v1590 = vmul.f32 %v1069, %v1490
    %v1591 = vmul.f32 %v1180, %v1494
    %v1592 = vmul.f32 %v1182, %v1498
    %v1593 = vmul.f32 %v1073, %v1486
    %v1594 = vmul.f32 %v1075, %v1490
    %v1595 = vmul.f32 %v1186, %v1494
    %v1596 = vmul.f32 %v1188, %v1498
    %v1597 = vmul.f32 %v1077, %v1486
    %v1598 = vmul.f32 %v1079, %v1490
    %v1599 = vmul.f32 %v1190, %v1494
    %v1600 = vmul.f32 %v1192, %v1498
    %v1602 = vlaneseq
    %v1603 = vshrl.u32 %v1602, 7
    %v1604 = vsub.s32 0, %v1603
    %v1605 = vrot.slane %v1536, %v1604
    %v1606 = vlaneseq
    %v1607 = vshrl.u32 %v1606, 7
    %v1608 = vsub.s32 1, %v1607
    %v1609 = vrot.slane %v1536, %v1608
    %v1610 = vlaneseq
    %v1611 = vshrl.u32 %v1610, 7
    %v1612 = vsub.s32 2, %v1611
    %v1613 = vrot.slane %v1536, %v1612
    %v1614 = vlaneseq
    %v1615 = vshrl.u32 %v1614, 7
    %v1616 = vsub.s32 3, %v1615
    %v1617 = vrot.slane %v1536, %v1616
    %v1622 = vadd.f32 %v1537, %v1605
    %v1623 = vadd.f32 %v1538, %v1609
    %v1624 = vadd.f32 %v1539, %v1613
    %v1625 = vadd.f32 %v1540, %v1617
    %v1626 = vadd.f32 %v1541, %v1605
    %v1627 = vadd.f32 %v1542, %v1609
    %v1628 = vadd.f32 %v1543, %v1613
    %v1629 = vadd.f32 %v1544, %v1617
    %v1630 = vadd.f32 %v1545, %v1605
    %v1631 = vadd.f32 %v1546, %v1609
    %v1632 = vadd.f32 %v1547, %v1613
    %v1633 = vadd.f32 %v1548, %v1617
    %v1634 = vadd.f32 %v1549, %v1605
    %v1635 = vadd.f32 %v1550, %v1609
    %v1636 = vadd.f32 %v1551, %v1613
    %v1637 = vadd.f32 %v1552, %v1617
    %v1638 = vadd.f32 %v1553, %v1605
    %v1639 = vadd.f32 %v1554, %v1609
    %v1640 = vadd.f32 %v1555, %v1613
    %v1641 = vadd.f32 %v1556, %v1617
    %v1642 = vadd.f32 %v1557, %v1605
    %v1643 = vadd.f32 %v1558, %v1609
    %v1644 = vadd.f32 %v1559, %v1613
    %v1645 = vadd.f32 %v1560, %v1617
    %v1646 = vadd.f32 %v1561, %v1605
    %v1647 = vadd.f32 %v1562, %v1609
    %v1648 = vadd.f32 %v1563, %v1613
    %v1649 = vadd.f32 %v1564, %v1617
    %v1650 = vadd.f32 %v1565, %v1605
    %v1651 = vadd.f32 %v1566, %v1609
    %v1652 = vadd.f32 %v1567, %v1613
    %v1653 = vadd.f32 %v1568, %v1617
    %v1654 = vadd.f32 %v1569, %v1605
    %v1655 = vadd.f32 %v1570, %v1609
    %v1656 = vadd.f32 %v1571, %v1613
    %v1657 = vadd.f32 %v1572, %v1617
    %v1658 = vadd.f32 %v1573, %v1605
    %v1659 = vadd.f32 %v1574, %v1609
    %v1660 = vadd.f32 %v1575, %v1613
    %v1661 = vadd.f32 %v1576, %v1617
    %v1662 = vadd.f32 %v1577, %v1605
    %v1663 = vadd.f32 %v1578, %v1609
    %v1664 = vadd.f32 %v1579, %v1613
    %v1665 = vadd.f32 %v1580, %v1617
    %v1666 = vadd.f32 %v1581, %v1605
    %v1667 = vadd.f32 %v1582, %v1609
    %v1668 = vadd.f32 %v1583, %v1613
    %v1669 = vadd.f32 %v1584, %v1617
    %v1670 = vadd.f32 %v1585, %v1605
    %v1671 = vadd.f32 %v1586, %v1609
    %v1672 = vadd.f32 %v1587, %v1613
    %v1673 = vadd.f32 %v1588, %v1617
    %v1674 = vadd.f32 %v1589, %v1605
    %v1675 = vadd.f32 %v1590, %v1609
    %v1676 = vadd.f32 %v1591, %v1613
    %v1677 = vadd.f32 %v1592, %v1617
    %v1678 = vadd.f32 %v1593, %v1605
    %v1679 = vadd.f32 %v1594, %v1609
    %v1680 = vadd.f32 %v1595, %v1613
    %v1681 = vadd.f32 %v1596, %v1617
    %v1682 = vadd.f32 %v1597, %v1605
    %v1683 = vadd.f32 %v1598, %v1609
    %v1684 = vadd.f32 %v1599, %v1613
    %v1685 = vadd.f32 %v1600, %v1617
    %v1686 = vmax.f32 %v1622, 0.0
    %v1687 = vmax.f32 %v1623, 0.0
    %v1688 = vmax.f32 %v1624, 0.0
    %v1689 = vmax.f32 %v1625, 0.0
    %v1690 = vmax.f32 %v1626, 0.0
    %v1691 = vmax.f32 %v1627, 0.0
    %v1692 = vmax.f32 %v1628, 0.0
    %v1693 = vmax.f32 %v1629, 0.0
    %v1694 = vmax.f32 %v1630, 0.0
    %v1695 = vmax.f32 %v1631, 0.0
    %v1696 = vmax.f32 %v1632, 0.0
    %v1697 = vmax.f32 %v1633, 0.0
    %v1698 = vmax.f32 %v1634, 0.0
    %v1699 = vmax.f32 %v1635, 0.0
    %v1700 = vmax.f32 %v1636, 0.0
    %v1701 = vmax.f32 %v1637, 0.0
    %v1702 = vmax.f32 %v1638, 0.0
    %v1703 = vmax.f32 %v1639, 0.0
    %v1704 = vmax.f32 %v1640, 0.0
    %v1705 = vmax.f32 %v1641, 0.0
    %v1706 = vmax.f32 %v1642, 0.0
    %v1707 = vmax.f32 %v1643, 0.0
    %v1708 = vmax.f32 %v1644, 0.0
    %v1709 = vmax.f32 %v1645, 0.0
    %v1710 = vmax.f32 %v1646, 0.0
    %v1711 = vmax.f32 %v1647, 0.0
    %v1712 = vmax.f32 %v1648, 0.0
    %v1713 = vmax.f32 %v1649, 0.0
    %v1714 = vmax.f32 %v1650, 0.0
    %v1715 = vmax.f32 %v1651, 0.0
    %v1716 = vmax.f32 %v1652, 0.0
    %v1717 = vmax.f32 %v1653, 0.0
    %v1718 = vmax.f32 %v1654, 0.0
    %v1719 = vmax.f32 %v1655, 0.0
    %v1720 = vmax.f32 %v1656, 0.0
    %v1721 = vmax.f32 %v1657, 0.0
    %v1722 = vmax.f32 %v1658, 0.0
    %v1723 = vmax.f32 %v1659, 0.0
    %v1724 = vmax.f32 %v1660, 0.0
    %v1725 = vmax.f32 %v1661, 0.0
    %v1726 = vmax.f32 %v1662, 0.0
    %v1727 = vmax.f32 %v1663, 0.0
    %v1728 = vmax.f32 %v1664, 0.0
    %v1729 = vmax.f32 %v1665, 0.0
    %v1730 = vmax.f32 %v1666, 0.0
    %v1731 = vmax.f32 %v1667, 0.0
    %v1732 = vmax.f32 %v1668, 0.0
    %v1733 = vmax.f32 %v1669, 0.0
    %v1734 = vmax.f32 %v1670, 0.0
    %v1735 = vmax.f32 %v1671, 0.0
    %v1736 = vmax.f32 %v1672, 0.0
    %v1737 = vmax.f32 %v1673, 0.0
    %v1738 = vmax.f32 %v1674, 0.0
    %v1739 = vmax.f32 %v1675, 0.0
    %v1740 = vmax.f32 %v1676, 0.0
    %v1741 = vmax.f32 %v1677, 0.0
    %v1742 = vmax.f32 %v1678, 0.0
    %v1743 = vmax.f32 %v1679, 0.0
    %v1744 = vmax.f32 %v1680, 0.0
    %v1745 = vmax.f32 %v1681, 0.0
    %v1746 = vmax.f32 %v1682, 0.0
    %v1747 = vmax.f32 %v1683, 0.0
    %v1748 = vmax.f32 %v1684, 0.0
    %v1749 = vmax.f32 %v1685, 0.0
    %v1750 = vpack.c.bf16 %v1690, %v1686
    %v1751 = vpack.c.bf16 %v1691, %v1687
    %v1752 = vpack.c.bf16 %v1692, %v1688
    %v1753 = vpack.c.bf16 %v1693, %v1689
    %v1754 = vpack.c.bf16 %v1698, %v1694
    %v1755 = vpack.c.bf16 %v1699, %v1695
    %v1756 = vpack.c.bf16 %v1700, %v1696
    %v1757 = vpack.c.bf16 %v1701, %v1697
    %v1758 = vpack.c.bf16 %v1706, %v1702
    %v1759 = vpack.c.bf16 %v1707, %v1703
    %v1760 = vpack.c.bf16 %v1708, %v1704
    %v1761 = vpack.c.bf16 %v1709, %v1705
    %v1762 = vpack.c.bf16 %v1714, %v1710
    %v1763 = vpack.c.bf16 %v1715, %v1711
    %v1764 = vpack.c.bf16 %v1716, %v1712
    %v1765 = vpack.c.bf16 %v1717, %v1713
    %v1766 = vpack.c.bf16 %v1722, %v1718
    %v1767 = vpack.c.bf16 %v1723, %v1719
    %v1768 = vpack.c.bf16 %v1724, %v1720
    %v1769 = vpack.c.bf16 %v1725, %v1721
    %v1770 = vpack.c.bf16 %v1730, %v1726
    %v1771 = vpack.c.bf16 %v1731, %v1727
    %v1772 = vpack.c.bf16 %v1732, %v1728
    %v1773 = vpack.c.bf16 %v1733, %v1729
    %v1774 = vpack.c.bf16 %v1738, %v1734
    %v1775 = vpack.c.bf16 %v1739, %v1735
    %v1776 = vpack.c.bf16 %v1740, %v1736
    %v1777 = vpack.c.bf16 %v1741, %v1737
    %v1778 = vpack.c.bf16 %v1746, %v1742
    %v1779 = vpack.c.bf16 %v1747, %v1743
    %v1780 = vpack.c.bf16 %v1748, %v1744
    %v1781 = vpack.c.bf16 %v1749, %v1745
    %v1782 = vld [vmem:[#allocation4] sm:$0xff]
    %v1783 = vld [vmem:[#allocation4 + $0x8] sm:$0xff]
    %v1784 = vld [vmem:[#allocation4 + $0x10] sm:$0xff]
    %v1785 = vld [vmem:[#allocation4 + $0x18] sm:$0xff]
    %v1786 = vld [vmem:[#allocation4 + $0x20] sm:$0xff]
    %v1787 = vld [vmem:[#allocation4 + $0x28] sm:$0xff]
    %v1788 = vld [vmem:[#allocation4 + $0x30] sm:$0xff]
    %v1789 = vld [vmem:[#allocation4 + $0x38] sm:$0xff]
    %v1790 = vld [vmem:[#allocation4 + $0x40] sm:$0xff]
    %v1791 = vld [vmem:[#allocation4 + $0x48] sm:$0xff]
    %v1792 = vld [vmem:[#allocation4 + $0x50] sm:$0xff]
    %v1793 = vld [vmem:[#allocation4 + $0x58] sm:$0xff]
    %v1794 = vld [vmem:[#allocation4 + $0x60] sm:$0xff]
    %v1795 = vld [vmem:[#allocation4 + $0x68] sm:$0xff]
    %v1796 = vld [vmem:[#allocation4 + $0x70] sm:$0xff]
    %v1797 = vld [vmem:[#allocation4 + $0x78] sm:$0xff]
    %v1798 = vld [vmem:[#allocation4 + $0x80] sm:$0xff]
    %v1799 = vld [vmem:[#allocation4 + $0x88] sm:$0xff]
    %v1800 = vld [vmem:[#allocation4 + $0x90] sm:$0xff]
    %v1801 = vld [vmem:[#allocation4 + $0x98] sm:$0xff]
    %v1802 = vld [vmem:[#allocation4 + $0xa0] sm:$0xff]
    %v1803 = vld [vmem:[#allocation4 + $0xa8] sm:$0xff]
    %v1804 = vld [vmem:[#allocation4 + $0xb0] sm:$0xff]
    %v1805 = vld [vmem:[#allocation4 + $0xb8] sm:$0xff]
    %v1806 = vld [vmem:[#allocation4 + $0xc0] sm:$0xff]
    %v1807 = vld [vmem:[#allocation4 + $0xc8] sm:$0xff]
    %v1808 = vld [vmem:[#allocation4 + $0xd0] sm:$0xff]
    %v1809 = vld [vmem:[#allocation4 + $0xd8] sm:$0xff]
    %v1810 = vld [vmem:[#allocation4 + $0xe0] sm:$0xff]
    %v1811 = vld [vmem:[#allocation4 + $0xe8] sm:$0xff]
    %v1812 = vld [vmem:[#allocation4 + $0xf0] sm:$0xff]
    %v1813 = vld [vmem:[#allocation4 + $0xf8] sm:$0xff]
    %v1814 = vld [vmem:[#allocation4 + $0x100] sm:$0xff]
    %v1815 = vld [vmem:[#allocation4 + $0x108] sm:$0xff]
    %v1816 = vld [vmem:[#allocation4 + $0x110] sm:$0xff]
    %v1817 = vld [vmem:[#allocation4 + $0x118] sm:$0xff]
    %v1818 = vld [vmem:[#allocation4 + $0x120] sm:$0xff]
    %v1819 = vld [vmem:[#allocation4 + $0x128] sm:$0xff]
    %v1820 = vld [vmem:[#allocation4 + $0x130] sm:$0xff]
    %v1821 = vld [vmem:[#allocation4 + $0x138] sm:$0xff]
    %v1822 = vld [vmem:[#allocation4 + $0x140] sm:$0xff]
    %v1823 = vld [vmem:[#allocation4 + $0x148] sm:$0xff]
    %v1824 = vld [vmem:[#allocation4 + $0x150] sm:$0xff]
    %v1825 = vld [vmem:[#allocation4 + $0x158] sm:$0xff]
    %v1826 = vld [vmem:[#allocation4 + $0x160] sm:$0xff]
    %v1827 = vld [vmem:[#allocation4 + $0x168] sm:$0xff]
    %v1828 = vld [vmem:[#allocation4 + $0x170] sm:$0xff]
    %v1829 = vld [vmem:[#allocation4 + $0x178] sm:$0xff]
    %v1830 = vld [vmem:[#allocation4 + $0x180] sm:$0xff]
    %v1831 = vld [vmem:[#allocation4 + $0x188] sm:$0xff]
    %v1832 = vld [vmem:[#allocation4 + $0x190] sm:$0xff]
    %v1833 = vld [vmem:[#allocation4 + $0x198] sm:$0xff]
    %v1834 = vld [vmem:[#allocation4 + $0x1a0] sm:$0xff]
    %v1835 = vld [vmem:[#allocation4 + $0x1a8] sm:$0xff]
    %v1836 = vld [vmem:[#allocation4 + $0x1b0] sm:$0xff]
    %v1837 = vld [vmem:[#allocation4 + $0x1b8] sm:$0xff]
    %v1838 = vld [vmem:[#allocation4 + $0x1c0] sm:$0xff]
    %v1839 = vld [vmem:[#allocation4 + $0x1c8] sm:$0xff]
    %v1840 = vld [vmem:[#allocation4 + $0x1d0] sm:$0xff]
    %v1841 = vld [vmem:[#allocation4 + $0x1d8] sm:$0xff]
    %v1842 = vld [vmem:[#allocation4 + $0x1e0] sm:$0xff]
    %v1843 = vld [vmem:[#allocation4 + $0x1e8] sm:$0xff]
    %v1844 = vld [vmem:[#allocation4 + $0x1f0] sm:$0xff]
    %v1845 = vld [vmem:[#allocation4 + $0x1f8] sm:$0xff]
    %v1910 = vunpack.c.l.b16 %v1782
    %v1911 = vunpack.c.h.b16 %v1782
    %v1912 = vunpack.c.l.b16 %v1783
    %v1913 = vunpack.c.h.b16 %v1783
    %v1914 = vunpack.c.l.b16 %v1784
    %v1915 = vunpack.c.h.b16 %v1784
    %v1916 = vunpack.c.l.b16 %v1785
    %v1917 = vunpack.c.h.b16 %v1785
    %v1918 = vunpack.c.l.b16 %v1786
    %v1919 = vunpack.c.h.b16 %v1786
    %v1920 = vunpack.c.l.b16 %v1787
    %v1921 = vunpack.c.h.b16 %v1787
    %v1922 = vunpack.c.l.b16 %v1788
    %v1923 = vunpack.c.h.b16 %v1788
    %v1924 = vunpack.c.l.b16 %v1789
    %v1925 = vunpack.c.h.b16 %v1789
    %v1926 = vunpack.c.l.b16 %v1790
    %v1927 = vunpack.c.h.b16 %v1790
    %v1928 = vunpack.c.l.b16 %v1791
    %v1929 = vunpack.c.h.b16 %v1791
    %v1930 = vunpack.c.l.b16 %v1792
    %v1931 = vunpack.c.h.b16 %v1792
    %v1932 = vunpack.c.l.b16 %v1793
    %v1933 = vunpack.c.h.b16 %v1793
    %v1934 = vunpack.c.l.b16 %v1794
    %v1935 = vunpack.c.h.b16 %v1794
    %v1936 = vunpack.c.l.b16 %v1795
    %v1937 = vunpack.c.h.b16 %v1795
    %v1938 = vunpack.c.l.b16 %v1796
    %v1939 = vunpack.c.h.b16 %v1796
    %v1940 = vunpack.c.l.b16 %v1797
    %v1941 = vunpack.c.h.b16 %v1797
    %v1942 = vunpack.c.l.b16 %v1798
    %v1943 = vunpack.c.h.b16 %v1798
    %v1944 = vunpack.c.l.b16 %v1799
    %v1945 = vunpack.c.h.b16 %v1799
    %v1946 = vunpack.c.l.b16 %v1800
    %v1947 = vunpack.c.h.b16 %v1800
    %v1948 = vunpack.c.l.b16 %v1801
    %v1949 = vunpack.c.h.b16 %v1801
    %v1950 = vunpack.c.l.b16 %v1802
    %v1951 = vunpack.c.h.b16 %v1802
    %v1952 = vunpack.c.l.b16 %v1803
    %v1953 = vunpack.c.h.b16 %v1803
    %v1954 = vunpack.c.l.b16 %v1804
    %v1955 = vunpack.c.h.b16 %v1804
    %v1956 = vunpack.c.l.b16 %v1805
    %v1957 = vunpack.c.h.b16 %v1805
    %v1958 = vunpack.c.l.b16 %v1806
    %v1959 = vunpack.c.h.b16 %v1806
    %v1960 = vunpack.c.l.b16 %v1807
    %v1961 = vunpack.c.h.b16 %v1807
    %v1962 = vunpack.c.l.b16 %v1808
    %v1963 = vunpack.c.h.b16 %v1808
    %v1964 = vunpack.c.l.b16 %v1809
    %v1965 = vunpack.c.h.b16 %v1809
    %v1966 = vunpack.c.l.b16 %v1810
    %v1967 = vunpack.c.h.b16 %v1810
    %v1968 = vunpack.c.l.b16 %v1811
    %v1969 = vunpack.c.h.b16 %v1811
    %v1970 = vunpack.c.l.b16 %v1812
    %v1971 = vunpack.c.h.b16 %v1812
    %v1972 = vunpack.c.l.b16 %v1813
    %v1973 = vunpack.c.h.b16 %v1813
    %v1974 = vunpack.c.l.b16 %v1814
    %v1975 = vunpack.c.h.b16 %v1814
    %v1976 = vunpack.c.l.b16 %v1815
    %v1977 = vunpack.c.h.b16 %v1815
    %v1978 = vunpack.c.l.b16 %v1816
    %v1979 = vunpack.c.h.b16 %v1816
    %v1980 = vunpack.c.l.b16 %v1817
    %v1981 = vunpack.c.h.b16 %v1817
    %v1982 = vunpack.c.l.b16 %v1818
    %v1983 = vunpack.c.h.b16 %v1818
    %v1984 = vunpack.c.l.b16 %v1819
    %v1985 = vunpack.c.h.b16 %v1819
    %v1986 = vunpack.c.l.b16 %v1820
    %v1987 = vunpack.c.h.b16 %v1820
    %v1988 = vunpack.c.l.b16 %v1821
    %v1989 = vunpack.c.h.b16 %v1821
    %v1990 = vunpack.c.l.b16 %v1822
    %v1991 = vunpack.c.h.b16 %v1822
    %v1992 = vunpack.c.l.b16 %v1823
    %v1993 = vunpack.c.h.b16 %v1823
    %v1994 = vunpack.c.l.b16 %v1824
    %v1995 = vunpack.c.h.b16 %v1824
    %v1996 = vunpack.c.l.b16 %v1825
    %v1997 = vunpack.c.h.b16 %v1825
    %v1998 = vunpack.c.l.b16 %v1826
    %v1999 = vunpack.c.h.b16 %v1826
    %v2000 = vunpack.c.l.b16 %v1827
    %v2001 = vunpack.c.h.b16 %v1827
    %v2002 = vunpack.c.l.b16 %v1828
    %v2003 = vunpack.c.h.b16 %v1828
    %v2004 = vunpack.c.l.b16 %v1829
    %v2005 = vunpack.c.h.b16 %v1829
    %v2006 = vunpack.c.l.b16 %v1830
    %v2007 = vunpack.c.h.b16 %v1830
    %v2008 = vunpack.c.l.b16 %v1831
    %v2009 = vunpack.c.h.b16 %v1831
    %v2010 = vunpack.c.l.b16 %v1832
    %v2011 = vunpack.c.h.b16 %v1832
    %v2012 = vunpack.c.l.b16 %v1833
    %v2013 = vunpack.c.h.b16 %v1833
    %v2014 = vunpack.c.l.b16 %v1834
    %v2015 = vunpack.c.h.b16 %v1834
    %v2016 = vunpack.c.l.b16 %v1835
    %v2017 = vunpack.c.h.b16 %v1835
    %v2018 = vunpack.c.l.b16 %v1836
    %v2019 = vunpack.c.h.b16 %v1836
    %v2020 = vunpack.c.l.b16 %v1837
    %v2021 = vunpack.c.h.b16 %v1837
    %v2022 = vunpack.c.l.b16 %v1838
    %v2023 = vunpack.c.h.b16 %v1838
    %v2024 = vunpack.c.l.b16 %v1839
    %v2025 = vunpack.c.h.b16 %v1839
    %v2026 = vunpack.c.l.b16 %v1840
    %v2027 = vunpack.c.h.b16 %v1840
    %v2028 = vunpack.c.l.b16 %v1841
    %v2029 = vunpack.c.h.b16 %v1841
    %v2030 = vunpack.c.l.b16 %v1842
    %v2031 = vunpack.c.h.b16 %v1842
    %v2032 = vunpack.c.l.b16 %v1843
    %v2033 = vunpack.c.h.b16 %v1843
    %v2034 = vunpack.c.l.b16 %v1844
    %v2035 = vunpack.c.h.b16 %v1844
    %v2036 = vunpack.c.l.b16 %v1845
    %v2037 = vunpack.c.h.b16 %v1845
    %v2038 = vpack.c.b16 %v1912, %v1910
    %v2039 = vpack.c.b16 %v1913, %v1911
    %v2040 = vpack.c.b16 %v1916, %v1914
    %v2041 = vpack.c.b16 %v1917, %v1915
    %v2042 = vpack.c.b16 %v1920, %v1918
    %v2043 = vpack.c.b16 %v1921, %v1919
    %v2044 = vpack.c.b16 %v1924, %v1922
    %v2045 = vpack.c.b16 %v1925, %v1923
    %v2046 = vpack.c.b16 %v1928, %v1926
    %v2047 = vpack.c.b16 %v1929, %v1927
    %v2048 = vpack.c.b16 %v1932, %v1930
    %v2049 = vpack.c.b16 %v1933, %v1931
    %v2050 = vpack.c.b16 %v1936, %v1934
    %v2051 = vpack.c.b16 %v1937, %v1935
    %v2052 = vpack.c.b16 %v1940, %v1938
    %v2053 = vpack.c.b16 %v1941, %v1939
    %v2054 = vpack.c.b16 %v1944, %v1942
    %v2055 = vpack.c.b16 %v1945, %v1943
    %v2056 = vpack.c.b16 %v1948, %v1946
    %v2057 = vpack.c.b16 %v1949, %v1947
    %v2058 = vpack.c.b16 %v1952, %v1950
    %v2059 = vpack.c.b16 %v1953, %v1951
    %v2060 = vpack.c.b16 %v1956, %v1954
    %v2061 = vpack.c.b16 %v1957, %v1955
    %v2062 = vpack.c.b16 %v1960, %v1958
    %v2063 = vpack.c.b16 %v1961, %v1959
    %v2064 = vpack.c.b16 %v1964, %v1962
    %v2065 = vpack.c.b16 %v1965, %v1963
    %v2066 = vpack.c.b16 %v1968, %v1966
    %v2067 = vpack.c.b16 %v1969, %v1967
    %v2068 = vpack.c.b16 %v1972, %v1970
    %v2069 = vpack.c.b16 %v1973, %v1971
    %v2070 = vpack.c.b16 %v1976, %v1974
    %v2071 = vpack.c.b16 %v1977, %v1975
    %v2072 = vpack.c.b16 %v1980, %v1978
    %v2073 = vpack.c.b16 %v1981, %v1979
    %v2074 = vpack.c.b16 %v1984, %v1982
    %v2075 = vpack.c.b16 %v1985, %v1983
    %v2076 = vpack.c.b16 %v1988, %v1986
    %v2077 = vpack.c.b16 %v1989, %v1987
    %v2078 = vpack.c.b16 %v1992, %v1990
    %v2079 = vpack.c.b16 %v1993, %v1991
    %v2080 = vpack.c.b16 %v1996, %v1994
    %v2081 = vpack.c.b16 %v1997, %v1995
    %v2082 = vpack.c.b16 %v2000, %v1998
    %v2083 = vpack.c.b16 %v2001, %v1999
    %v2084 = vpack.c.b16 %v2004, %v2002
    %v2085 = vpack.c.b16 %v2005, %v2003
    %v2086 = vpack.c.b16 %v2008, %v2006
    %v2087 = vpack.c.b16 %v2009, %v2007
    %v2088 = vpack.c.b16 %v2012, %v2010
    %v2089 = vpack.c.b16 %v2013, %v2011
    %v2090 = vpack.c.b16 %v2016, %v2014
    %v2091 = vpack.c.b16 %v2017, %v2015
    %v2092 = vpack.c.b16 %v2020, %v2018
    %v2093 = vpack.c.b16 %v2021, %v2019
    %v2094 = vpack.c.b16 %v2024, %v2022
    %v2095 = vpack.c.b16 %v2025, %v2023
    %v2096 = vpack.c.b16 %v2028, %v2026
    %v2097 = vpack.c.b16 %v2029, %v2027
    %v2098 = vpack.c.b16 %v2032, %v2030
    %v2099 = vpack.c.b16 %v2033, %v2031
    %v2100 = vpack.c.b16 %v2036, %v2034
    %v2101 = vpack.c.b16 %v2037, %v2035
    %2166 = vmatprep.subr.bf16.mxu0 %v2039
    %2167 = vmatpush1.bf16.msra.mxu0 %v2038
    %2168 = vmatprep.subr.bf16.mxu0 %v2041
    %2169 = vmatpush1.bf16.msra.mxu0 %v2040
    %2170 = vmatprep.subr.bf16.mxu0 %v2043
    %2171 = vmatpush1.bf16.msra.mxu0 %v2042
    %2172 = vmatprep.subr.bf16.mxu0 %v2045
    %2173 = vmatpush1.bf16.msra.mxu0 %v2044
    %2174 = vmatprep.subr.bf16.mxu0 %v2047
    %2175 = vmatpush1.bf16.msra.mxu0 %v2046
    %2176 = vmatprep.subr.bf16.mxu0 %v2049
    %2177 = vmatpush1.bf16.msra.mxu0 %v2048
    %2178 = vmatprep.subr.bf16.mxu0 %v2051
    %2179 = vmatpush1.bf16.msra.mxu0 %v2050
    %2180 = vmatprep.subr.bf16.mxu0 %v2053
    %2181 = vmatpush1.bf16.msra.mxu0 %v2052
    %2182 = vmatprep.subr.bf16.mxu0 %v2055
    %2183 = vmatpush1.bf16.msra.mxu0 %v2054
    %2184 = vmatprep.subr.bf16.mxu0 %v2057
    %2185 = vmatpush1.bf16.msra.mxu0 %v2056
    %2186 = vmatprep.subr.bf16.mxu0 %v2059
    %2187 = vmatpush1.bf16.msra.mxu0 %v2058
    %2188 = vmatprep.subr.bf16.mxu0 %v2061
    %2189 = vmatpush1.bf16.msra.mxu0 %v2060
    %2190 = vmatprep.subr.bf16.mxu0 %v2063
    %2191 = vmatpush1.bf16.msra.mxu0 %v2062
    %2192 = vmatprep.subr.bf16.mxu0 %v2065
    %2193 = vmatpush1.bf16.msra.mxu0 %v2064
    %2194 = vmatprep.subr.bf16.mxu0 %v2067
    %2195 = vmatpush1.bf16.msra.mxu0 %v2066
    %2196 = vmatprep.subr.bf16.mxu0 %v2069
    %2197 = vmatpush1.bf16.msra.mxu0 %v2068
    %2198 = vmatprep.mubr.bf16.mxu0 %v1751
    %2199 = vmatmul.mubr.bf16.gmra.mrb[0].mxu0 %v1750
    %v2200 = vpop.f32.mrb[0].mxu0
    %v2201 = vadd.f32 0.0, %v2200
    %v2202 = vpop.f32.mrb[0].mxu0
    %v2203 = vadd.f32 0.0, %v2202
    %v2204 = vpop.f32.mrb[0].mxu0
    %v2205 = vadd.f32 0.0, %v2204
    %v2206 = vpop.f32.mrb[0].mxu0
    %v2207 = vadd.f32 0.0, %v2206
    %2208 = vmatprep.mubr.bf16.mxu0 %v1755
    %2209 = vmatmul.mubr.bf16.gmra.mrb[0].mxu0 %v1754
    %v2210 = vpop.f32.mrb[0].mxu0
    %v2211 = vadd.f32 0.0, %v2210
    %v2212 = vpop.f32.mrb[0].mxu0
    %v2213 = vadd.f32 0.0, %v2212
    %v2214 = vpop.f32.mrb[0].mxu0
    %v2215 = vadd.f32 0.0, %v2214
    %v2216 = vpop.f32.mrb[0].mxu0
    %v2217 = vadd.f32 0.0, %v2216
    %2218 = vmatprep.mubr.bf16.mxu0 %v1759
    %2219 = vmatmul.mubr.bf16.gmra.mrb[0].mxu0 %v1758
    %v2220 = vpop.f32.mrb[0].mxu0
    %v2221 = vadd.f32 0.0, %v2220
    %v2222 = vpop.f32.mrb[0].mxu0
    %v2223 = vadd.f32 0.0, %v2222
    %v2224 = vpop.f32.mrb[0].mxu0
    %v2225 = vadd.f32 0.0, %v2224
    %v2226 = vpop.f32.mrb[0].mxu0
    %v2227 = vadd.f32 0.0, %v2226
    %2228 = vmatprep.mubr.bf16.mxu0 %v1763
    %2229 = vmatmul.mubr.bf16.gmra.mrb[0].mxu0 %v1762
    %v2230 = vpop.f32.mrb[0].mxu0
    %v2231 = vadd.f32 0.0, %v2230
    %v2232 = vpop.f32.mrb[0].mxu0
    %v2233 = vadd.f32 0.0, %v2232
    %v2234 = vpop.f32.mrb[0].mxu0
    %v2235 = vadd.f32 0.0, %v2234
    %v2236 = vpop.f32.mrb[0].mxu0
    %v2237 = vadd.f32 0.0, %v2236
    %2238 = vmatprep.mubr.bf16.mxu0 %v1767
    %2239 = vmatmul.mubr.bf16.gmra.mrb[0].mxu0 %v1766
    %v2240 = vpop.f32.mrb[0].mxu0
    %v2241 = vadd.f32 0.0, %v2240
    %v2242 = vpop.f32.mrb[0].mxu0
    %v2243 = vadd.f32 0.0, %v2242
    %v2244 = vpop.f32.mrb[0].mxu0
    %v2245 = vadd.f32 0.0, %v2244
    %v2246 = vpop.f32.mrb[0].mxu0
    %v2247 = vadd.f32 0.0, %v2246
    %2248 = vmatprep.mubr.bf16.mxu0 %v1771
    %2249 = vmatmul.mubr.bf16.gmra.mrb[0].mxu0 %v1770
    %v2250 = vpop.f32.mrb[0].mxu0
    %v2251 = vadd.f32 0.0, %v2250
    %v2252 = vpop.f32.mrb[0].mxu0
    %v2253 = vadd.f32 0.0, %v2252
    %v2254 = vpop.f32.mrb[0].mxu0
    %v2255 = vadd.f32 0.0, %v2254
    %v2256 = vpop.f32.mrb[0].mxu0
    %v2257 = vadd.f32 0.0, %v2256
    %2258 = vmatprep.mubr.bf16.mxu0 %v1775
    %2259 = vmatmul.mubr.bf16.gmra.mrb[0].mxu0 %v1774
    %v2260 = vpop.f32.mrb[0].mxu0
    %v2261 = vadd.f32 0.0, %v2260
    %v2262 = vpop.f32.mrb[0].mxu0
    %v2263 = vadd.f32 0.0, %v2262
    %v2264 = vpop.f32.mrb[0].mxu0
    %v2265 = vadd.f32 0.0, %v2264
    %v2266 = vpop.f32.mrb[0].mxu0
    %v2267 = vadd.f32 0.0, %v2266
    %2268 = vmatprep.mubr.bf16.mxu0 %v1779
    %2269 = vmatmul.mubr.bf16.gmra.mrb[0].mxu0 %v1778
    %v2270 = vpop.f32.mrb[0].mxu0
    %v2271 = vadd.f32 0.0, %v2270
    %v2272 = vpop.f32.mrb[0].mxu0
    %v2273 = vadd.f32 0.0, %v2272
    %v2274 = vpop.f32.mrb[0].mxu0
    %v2275 = vadd.f32 0.0, %v2274
    %v2276 = vpop.f32.mrb[0].mxu0
    %v2277 = vadd.f32 0.0, %v2276
    %2278 = vdwg.mxu0
    %2279 = vmatprep.subr.bf16.mxu0 %v2071
    %2280 = vmatpush1.bf16.msra.mxu0 %v2070
    %2281 = vmatprep.subr.bf16.mxu0 %v2073
    %2282 = vmatpush1.bf16.msra.mxu0 %v2072
    %2283 = vmatprep.subr.bf16.mxu0 %v2075
    %2284 = vmatpush1.bf16.msra.mxu0 %v2074
    %2285 = vmatprep.subr.bf16.mxu0 %v2077
    %2286 = vmatpush1.bf16.msra.mxu0 %v2076
    %2287 = vmatprep.subr.bf16.mxu0 %v2079
    %2288 = vmatpush1.bf16.msra.mxu0 %v2078
    %2289 = vmatprep.subr.bf16.mxu0 %v2081
    %2290 = vmatpush1.bf16.msra.mxu0 %v2080
    %2291 = vmatprep.subr.bf16.mxu0 %v2083
    %2292 = vmatpush1.bf16.msra.mxu0 %v2082
    %2293 = vmatprep.subr.bf16.mxu0 %v2085
    %2294 = vmatpush1.bf16.msra.mxu0 %v2084
    %2295 = vmatprep.subr.bf16.mxu0 %v2087
    %2296 = vmatpush1.bf16.msra.mxu0 %v2086
    %2297 = vmatprep.subr.bf16.mxu0 %v2089
    %2298 = vmatpush1.bf16.msra.mxu0 %v2088
    %2299 = vmatprep.subr.bf16.mxu0 %v2091
    %2300 = vmatpush1.bf16.msra.mxu0 %v2090
    %2301 = vmatprep.subr.bf16.mxu0 %v2093
    %2302 = vmatpush1.bf16.msra.mxu0 %v2092
    %2303 = vmatprep.subr.bf16.mxu0 %v2095
    %2304 = vmatpush1.bf16.msra.mxu0 %v2094
    %2305 = vmatprep.subr.bf16.mxu0 %v2097
    %2306 = vmatpush1.bf16.msra.mxu0 %v2096
    %2307 = vmatprep.subr.bf16.mxu0 %v2099
    %2308 = vmatpush1.bf16.msra.mxu0 %v2098
    %2309 = vmatprep.subr.bf16.mxu0 %v2101
    %2310 = vmatpush1.bf16.msra.mxu0 %v2100
    %2311 = vmatprep.mubr.bf16.mxu0 %v1753
    %2312 = vmatmul.mubr.bf16.gmra.mrb[0].mxu0 %v1752
    %v2313 = vpop.f32.mrb[0].mxu0
    %v2314 = vadd.f32 %v2201, %v2313
    %v2315 = vpop.f32.mrb[0].mxu0
    %v2316 = vadd.f32 %v2203, %v2315
    %v2317 = vpop.f32.mrb[0].mxu0
    %v2318 = vadd.f32 %v2205, %v2317
    %v2319 = vpop.f32.mrb[0].mxu0
    %v2320 = vadd.f32 %v2207, %v2319
    %2321 = vmatprep.mubr.bf16.mxu0 %v1757
    %2322 = vmatmul.mubr.bf16.gmra.mrb[0].mxu0 %v1756
    %v2323 = vpop.f32.mrb[0].mxu0
    %v2324 = vadd.f32 %v2211, %v2323
    %v2325 = vpop.f32.mrb[0].mxu0
    %v2326 = vadd.f32 %v2213, %v2325
    %v2327 = vpop.f32.mrb[0].mxu0
    %v2328 = vadd.f32 %v2215, %v2327
    %v2329 = vpop.f32.mrb[0].mxu0
    %v2330 = vadd.f32 %v2217, %v2329
    %2331 = vmatprep.mubr.bf16.mxu0 %v1761
    %2332 = vmatmul.mubr.bf16.gmra.mrb[0].mxu0 %v1760
    %v2333 = vpop.f32.mrb[0].mxu0
    %v2334 = vadd.f32 %v2221, %v2333
    %v2335 = vpop.f32.mrb[0].mxu0
    %v2336 = vadd.f32 %v2223, %v2335
    %v2337 = vpop.f32.mrb[0].mxu0
    %v2338 = vadd.f32 %v2225, %v2337
    %v2339 = vpop.f32.mrb[0].mxu0
    %v2340 = vadd.f32 %v2227, %v2339
    %2341 = vmatprep.mubr.bf16.mxu0 %v1765
    %2342 = vmatmul.mubr.bf16.gmra.mrb[0].mxu0 %v1764
    %v2343 = vpop.f32.mrb[0].mxu0
    %v2344 = vadd.f32 %v2231, %v2343
    %v2345 = vpop.f32.mrb[0].mxu0
    %v2346 = vadd.f32 %v2233, %v2345
    %v2347 = vpop.f32.mrb[0].mxu0
    %v2348 = vadd.f32 %v2235, %v2347
    %v2349 = vpop.f32.mrb[0].mxu0
    %v2350 = vadd.f32 %v2237, %v2349
    %2351 = vmatprep.mubr.bf16.mxu0 %v1769
    %2352 = vmatmul.mubr.bf16.gmra.mrb[0].mxu0 %v1768
    %v2353 = vpop.f32.mrb[0].mxu0
    %v2354 = vadd.f32 %v2241, %v2353
    %v2355 = vpop.f32.mrb[0].mxu0
    %v2356 = vadd.f32 %v2243, %v2355
    %v2357 = vpop.f32.mrb[0].mxu0
    %v2358 = vadd.f32 %v2245, %v2357
    %v2359 = vpop.f32.mrb[0].mxu0
    %v2360 = vadd.f32 %v2247, %v2359
    %2361 = vmatprep.mubr.bf16.mxu0 %v1773
    %2362 = vmatmul.mubr.bf16.gmra.mrb[0].mxu0 %v1772
    %v2363 = vpop.f32.mrb[0].mxu0
    %v2364 = vadd.f32 %v2251, %v2363
    %v2365 = vpop.f32.mrb[0].mxu0
    %v2366 = vadd.f32 %v2253, %v2365
    %v2367 = vpop.f32.mrb[0].mxu0
    %v2368 = vadd.f32 %v2255, %v2367
    %v2369 = vpop.f32.mrb[0].mxu0
    %v2370 = vadd.f32 %v2257, %v2369
    %2371 = vmatprep.mubr.bf16.mxu0 %v1777
    %2372 = vmatmul.mubr.bf16.gmra.mrb[0].mxu0 %v1776
    %v2373 = vpop.f32.mrb[0].mxu0
    %v2374 = vadd.f32 %v2261, %v2373
    %v2375 = vpop.f32.mrb[0].mxu0
    %v2376 = vadd.f32 %v2263, %v2375
    %v2377 = vpop.f32.mrb[0].mxu0
    %v2378 = vadd.f32 %v2265, %v2377
    %v2379 = vpop.f32.mrb[0].mxu0
    %v2380 = vadd.f32 %v2267, %v2379
    %2381 = vmatprep.mubr.bf16.mxu0 %v1781
    %2382 = vmatmul.mubr.bf16.gmra.mrb[0].mxu0 %v1780
    %v2383 = vpop.f32.mrb[0].mxu0
    %v2384 = vadd.f32 %v2271, %v2383
    %v2385 = vpop.f32.mrb[0].mxu0
    %v2386 = vadd.f32 %v2273, %v2385
    %v2387 = vpop.f32.mrb[0].mxu0
    %v2388 = vadd.f32 %v2275, %v2387
    %v2389 = vpop.f32.mrb[0].mxu0
    %v2390 = vadd.f32 %v2277, %v2389
    %2391 = vdwg.mxu0
    %v2392 = vadd.f32 %v2314, %v2318
    %v2393 = vadd.f32 %v2392, %v2324
    %v2394 = vadd.f32 %v2393, %v2328
    %v2395 = vadd.f32 %v2394, %v2334
    %v2396 = vadd.f32 %v2395, %v2338
    %v2397 = vadd.f32 %v2396, %v2344
    %v2398 = vadd.f32 %v2397, %v2348
    %v2399 = vadd.f32 %v2398, %v2354
    %v2400 = vadd.f32 %v2399, %v2358
    %v2401 = vadd.f32 %v2400, %v2364
    %v2402 = vadd.f32 %v2401, %v2368
    %v2403 = vadd.f32 %v2402, %v2374
    %v2404 = vadd.f32 %v2403, %v2378
    %v2405 = vadd.f32 %v2404, %v2384
    %v2406 = vadd.f32 %v2405, %v2388
    %v2407 = vrot.slane %v2406, 4
    %v2408 = vadd.f32 %v2406, %v2407
    %v2409 = vrot.slane %v2408, 2
    %v2410 = vadd.f32 %v2408, %v2409
    %v2411 = vrot.slane %v2410, 1
    %v2412 = vadd.f32 %v2410, %v2411
    %v2413 = vadd.f32 %v2316, %v2320
    %v2414 = vadd.f32 %v2413, %v2326
    %v2415 = vadd.f32 %v2414, %v2330
    %v2416 = vadd.f32 %v2415, %v2336
    %v2417 = vadd.f32 %v2416, %v2340
    %v2418 = vadd.f32 %v2417, %v2346
    %v2419 = vadd.f32 %v2418, %v2350
    %v2420 = vadd.f32 %v2419, %v2356
    %v2421 = vadd.f32 %v2420, %v2360
    %v2422 = vadd.f32 %v2421, %v2366
    %v2423 = vadd.f32 %v2422, %v2370
    %v2424 = vadd.f32 %v2423, %v2376
    %v2425 = vadd.f32 %v2424, %v2380
    %v2426 = vadd.f32 %v2425, %v2386
    %v2427 = vadd.f32 %v2426, %v2390
    %v2428 = vrot.slane %v2427, 4
    %v2429 = vadd.f32 %v2427, %v2428
    %v2430 = vrot.slane %v2429, 2
    %v2431 = vadd.f32 %v2429, %v2430
    %v2432 = vrot.slane %v2431, 1
    %v2433 = vadd.f32 %v2431, %v2432
    %v2434 = vmul.f32 %v2412, %v320
    %v2435 = vmul.f32 %v2433, %v320
    %v2436 = vmul.f32 %v2314, %v2314
    %v2437 = vmul.f32 %v2316, %v2316
    %v2438 = vmul.f32 %v2318, %v2318
    %v2439 = vmul.f32 %v2320, %v2320
    %v2440 = vmul.f32 %v2324, %v2324
    %v2441 = vmul.f32 %v2326, %v2326
    %v2442 = vmul.f32 %v2328, %v2328
    %v2443 = vmul.f32 %v2330, %v2330
    %v2444 = vmul.f32 %v2334, %v2334
    %v2445 = vmul.f32 %v2336, %v2336
    %v2446 = vmul.f32 %v2338, %v2338
    %v2447 = vmul.f32 %v2340, %v2340
    %v2448 = vmul.f32 %v2344, %v2344
    %v2449 = vmul.f32 %v2346, %v2346
    %v2450 = vmul.f32 %v2348, %v2348
    %v2451 = vmul.f32 %v2350, %v2350
    %v2452 = vmul.f32 %v2354, %v2354
    %v2453 = vmul.f32 %v2356, %v2356
    %v2454 = vmul.f32 %v2358, %v2358
    %v2455 = vmul.f32 %v2360, %v2360
    %v2456 = vmul.f32 %v2364, %v2364
    %v2457 = vmul.f32 %v2366, %v2366
    %v2458 = vmul.f32 %v2368, %v2368
    %v2459 = vmul.f32 %v2370, %v2370
    %v2460 = vmul.f32 %v2374, %v2374
    %v2461 = vmul.f32 %v2376, %v2376
    %v2462 = vmul.f32 %v2378, %v2378
    %v2463 = vmul.f32 %v2380, %v2380
    %v2464 = vmul.f32 %v2384, %v2384
    %v2465 = vmul.f32 %v2386, %v2386
    %v2466 = vmul.f32 %v2388, %v2388
    %v2467 = vmul.f32 %v2390, %v2390
    %v2468 = vadd.f32 %v2436, %v2438
    %v2469 = vadd.f32 %v2468, %v2440
    %v2470 = vadd.f32 %v2469, %v2442
    %v2471 = vadd.f32 %v2470, %v2444
    %v2472 = vadd.f32 %v2471, %v2446
    %v2473 = vadd.f32 %v2472, %v2448
    %v2474 = vadd.f32 %v2473, %v2450
    %v2475 = vadd.f32 %v2474, %v2452
    %v2476 = vadd.f32 %v2475, %v2454
    %v2477 = vadd.f32 %v2476, %v2456
    %v2478 = vadd.f32 %v2477, %v2458
    %v2479 = vadd.f32 %v2478, %v2460
    %v2480 = vadd.f32 %v2479, %v2462
    %v2481 = vadd.f32 %v2480, %v2464
    %v2482 = vadd.f32 %v2481, %v2466
    %v2483 = vrot.slane %v2482, 4
    %v2484 = vadd.f32 %v2482, %v2483
    %v2485 = vrot.slane %v2484, 2
    %v2486 = vadd.f32 %v2484, %v2485
    %v2487 = vrot.slane %v2486, 1
    %v2488 = vadd.f32 %v2486, %v2487
    %v2489 = vadd.f32 %v2437, %v2439
    %v2490 = vadd.f32 %v2489, %v2441
    %v2491 = vadd.f32 %v2490, %v2443
    %v2492 = vadd.f32 %v2491, %v2445
    %v2493 = vadd.f32 %v2492, %v2447
    %v2494 = vadd.f32 %v2493, %v2449
    %v2495 = vadd.f32 %v2494, %v2451
    %v2496 = vadd.f32 %v2495, %v2453
    %v2497 = vadd.f32 %v2496, %v2455
    %v2498 = vadd.f32 %v2497, %v2457
    %v2499 = vadd.f32 %v2498, %v2459
    %v2500 = vadd.f32 %v2499, %v2461
    %v2501 = vadd.f32 %v2500, %v2463
    %v2502 = vadd.f32 %v2501, %v2465
    %v2503 = vadd.f32 %v2502, %v2467
    %v2504 = vrot.slane %v2503, 4
    %v2505 = vadd.f32 %v2503, %v2504
    %v2506 = vrot.slane %v2505, 2
    %v2507 = vadd.f32 %v2505, %v2506
    %v2508 = vrot.slane %v2507, 1
    %v2509 = vadd.f32 %v2507, %v2508
    %v2510 = vmul.f32 %v2488, %v320
    %v2511 = vmul.f32 %v2509, %v320
    %v2512 = vmul.f32 %v2434, %v2434
    %v2513 = vmul.f32 %v2435, %v2435
    %v2514 = vsub.f32 %v2510, %v2512
    %v2515 = vsub.f32 %v2511, %v2513
    %v2516 = vadd.f32 %v2514, 1e-05
    %v2517 = vadd.f32 %v2515, 1e-05
    %v2518 = vrsqrt.pop %v2516
    %v2519 = vrsqrt.pop %v2517
    %v2521 = vrot.slane %v66, 4
    %v2525 = vcombine.low %v2518, %v2519
    %v2527 = vunpack.c.l.s4 1966171168
    %v2528 = vunpack.c.0.s8 %v2527
    %v2529 = vlaneseq
    %v2530 = vshrl.u32 %v2529, 7
    %v2531 = vsub.s32 %v2528, %v2530
    %v2532 = vrot.slane %v2525, %v2531
    %v2534 = vunpack.c.l.s4 1966171168
    %v2535 = vunpack.c.0.s8 %v2534
    %v2536 = vlaneseq
    %v2537 = vshrl.u32 %v2536, 7
    %v2538 = vsub.s32 %v2535, %v2537
    %v2539 = vrot.slane %v2532, %v2538
    %v2541 = vmul.f32 %v2521, %v2539
    %v2543 = vlaneseq
    %v2544 = vshrl.u32 %v2543, 7
    %v2545 = vsub.s32 0, %v2544
    %v2546 = vrot.slane %v2541, %v2545
    %v2547 = vlaneseq
    %v2548 = vshrl.u32 %v2547, 7
    %v2549 = vsub.s32 1, %v2548
    %v2550 = vrot.slane %v2541, %v2549
    %v2553 = vmul.f32 %v2434, %v2546
    %v2554 = vmul.f32 %v2435, %v2550
    %v2555 = vrot.slane %v66, 6
    %v2559 = vcombine.low %v2553, %v2554
    %v2561 = vunpack.c.l.s4 1966171168
    %v2562 = vunpack.c.0.s8 %v2561
    %v2563 = vlaneseq
    %v2564 = vshrl.u32 %v2563, 7
    %v2565 = vsub.s32 %v2562, %v2564
    %v2566 = vrot.slane %v2559, %v2565
    %v2568 = vunpack.c.l.s4 1966171168
    %v2569 = vunpack.c.0.s8 %v2568
    %v2570 = vlaneseq
    %v2571 = vshrl.u32 %v2570, 7
    %v2572 = vsub.s32 %v2569, %v2571
    %v2573 = vrot.slane %v2566, %v2572
    %v2575 = vsub.f32 %v2555, %v2573
    %v2576 = vmul.f32 %v2314, %v2546
    %v2577 = vmul.f32 %v2316, %v2550
    %v2578 = vmul.f32 %v2318, %v2546
    %v2579 = vmul.f32 %v2320, %v2550
    %v2580 = vmul.f32 %v2324, %v2546
    %v2581 = vmul.f32 %v2326, %v2550
    %v2582 = vmul.f32 %v2328, %v2546
    %v2583 = vmul.f32 %v2330, %v2550
    %v2584 = vmul.f32 %v2334, %v2546
    %v2585 = vmul.f32 %v2336, %v2550
    %v2586 = vmul.f32 %v2338, %v2546
    %v2587 = vmul.f32 %v2340, %v2550
    %v2588 = vmul.f32 %v2344, %v2546
    %v2589 = vmul.f32 %v2346, %v2550
    %v2590 = vmul.f32 %v2348, %v2546
    %v2591 = vmul.f32 %v2350, %v2550
    %v2592 = vmul.f32 %v2354, %v2546
    %v2593 = vmul.f32 %v2356, %v2550
    %v2594 = vmul.f32 %v2358, %v2546
    %v2595 = vmul.f32 %v2360, %v2550
    %v2596 = vmul.f32 %v2364, %v2546
    %v2597 = vmul.f32 %v2366, %v2550
    %v2598 = vmul.f32 %v2368, %v2546
    %v2599 = vmul.f32 %v2370, %v2550
    %v2600 = vmul.f32 %v2374, %v2546
    %v2601 = vmul.f32 %v2376, %v2550
    %v2602 = vmul.f32 %v2378, %v2546
    %v2603 = vmul.f32 %v2380, %v2550
    %v2604 = vmul.f32 %v2384, %v2546
    %v2605 = vmul.f32 %v2386, %v2550
    %v2606 = vmul.f32 %v2388, %v2546
    %v2607 = vmul.f32 %v2390, %v2550
    %v2609 = vlaneseq
    %v2610 = vshrl.u32 %v2609, 7
    %v2611 = vsub.s32 0, %v2610
    %v2612 = vrot.slane %v2575, %v2611
    %v2613 = vlaneseq
    %v2614 = vshrl.u32 %v2613, 7
    %v2615 = vsub.s32 1, %v2614
    %v2616 = vrot.slane %v2575, %v2615
    %v2619 = vadd.f32 %v2576, %v2612
    %v2620 = vadd.f32 %v2577, %v2616
    %v2621 = vadd.f32 %v2578, %v2612
    %v2622 = vadd.f32 %v2579, %v2616
    %v2623 = vadd.f32 %v2580, %v2612
    %v2624 = vadd.f32 %v2581, %v2616
    %v2625 = vadd.f32 %v2582, %v2612
    %v2626 = vadd.f32 %v2583, %v2616
    %v2627 = vadd.f32 %v2584, %v2612
    %v2628 = vadd.f32 %v2585, %v2616
    %v2629 = vadd.f32 %v2586, %v2612
    %v2630 = vadd.f32 %v2587, %v2616
    %v2631 = vadd.f32 %v2588, %v2612
    %v2632 = vadd.f32 %v2589, %v2616
    %v2633 = vadd.f32 %v2590, %v2612
    %v2634 = vadd.f32 %v2591, %v2616
    %v2635 = vadd.f32 %v2592, %v2612
    %v2636 = vadd.f32 %v2593, %v2616
    %v2637 = vadd.f32 %v2594, %v2612
    %v2638 = vadd.f32 %v2595, %v2616
    %v2639 = vadd.f32 %v2596, %v2612
    %v2640 = vadd.f32 %v2597, %v2616
    %v2641 = vadd.f32 %v2598, %v2612
    %v2642 = vadd.f32 %v2599, %v2616
    %v2643 = vadd.f32 %v2600, %v2612
    %v2644 = vadd.f32 %v2601, %v2616
    %v2645 = vadd.f32 %v2602, %v2612
    %v2646 = vadd.f32 %v2603, %v2616
    %v2647 = vadd.f32 %v2604, %v2612
    %v2648 = vadd.f32 %v2605, %v2616
    %v2649 = vadd.f32 %v2606, %v2612
    %v2650 = vadd.f32 %v2607, %v2616
    %v2651 = vmax.f32 %v2619, 0.0
    %v2652 = vmax.f32 %v2620, 0.0
    %v2653 = vmax.f32 %v2621, 0.0
    %v2654 = vmax.f32 %v2622, 0.0
    %v2655 = vmax.f32 %v2623, 0.0
    %v2656 = vmax.f32 %v2624, 0.0
    %v2657 = vmax.f32 %v2625, 0.0
    %v2658 = vmax.f32 %v2626, 0.0
    %v2659 = vmax.f32 %v2627, 0.0
    %v2660 = vmax.f32 %v2628, 0.0
    %v2661 = vmax.f32 %v2629, 0.0
    %v2662 = vmax.f32 %v2630, 0.0
    %v2663 = vmax.f32 %v2631, 0.0
    %v2664 = vmax.f32 %v2632, 0.0
    %v2665 = vmax.f32 %v2633, 0.0
    %v2666 = vmax.f32 %v2634, 0.0
    %v2667 = vmax.f32 %v2635, 0.0
    %v2668 = vmax.f32 %v2636, 0.0
    %v2669 = vmax.f32 %v2637, 0.0
    %v2670 = vmax.f32 %v2638, 0.0
    %v2671 = vmax.f32 %v2639, 0.0
    %v2672 = vmax.f32 %v2640, 0.0
    %v2673 = vmax.f32 %v2641, 0.0
    %v2674 = vmax.f32 %v2642, 0.0
    %v2675 = vmax.f32 %v2643, 0.0
    %v2676 = vmax.f32 %v2644, 0.0
    %v2677 = vmax.f32 %v2645, 0.0
    %v2678 = vmax.f32 %v2646, 0.0
    %v2679 = vmax.f32 %v2647, 0.0
    %v2680 = vmax.f32 %v2648, 0.0
    %v2681 = vmax.f32 %v2649, 0.0
    %v2682 = vmax.f32 %v2650, 0.0
    %v2683 = vpack.c.bf16 %v2653, %v2651
    %v2684 = vpack.c.bf16 %v2654, %v2652
    %v2685 = vpack.c.bf16 %v2657, %v2655
    %v2686 = vpack.c.bf16 %v2658, %v2656
    %v2687 = vpack.c.bf16 %v2661, %v2659
    %v2688 = vpack.c.bf16 %v2662, %v2660
    %v2689 = vpack.c.bf16 %v2665, %v2663
    %v2690 = vpack.c.bf16 %v2666, %v2664
    %v2691 = vpack.c.bf16 %v2669, %v2667
    %v2692 = vpack.c.bf16 %v2670, %v2668
    %v2693 = vpack.c.bf16 %v2673, %v2671
    %v2694 = vpack.c.bf16 %v2674, %v2672
    %v2695 = vpack.c.bf16 %v2677, %v2675
    %v2696 = vpack.c.bf16 %v2678, %v2676
    %v2697 = vpack.c.bf16 %v2681, %v2679
    %v2698 = vpack.c.bf16 %v2682, %v2680
    %v2699 = vld [vmem:[#allocation6] sm:$0xff]
    %v2700 = vld [vmem:[#allocation6 + $0x8] sm:$0xff]
    %v2701 = vld [vmem:[#allocation6 + $0x10] sm:$0xff]
    %v2702 = vld [vmem:[#allocation6 + $0x18] sm:$0xf]
    %v2703 = vld [vmem:[#allocation6 + $0x1c] sm:$0xff]
    %v2704 = vld [vmem:[#allocation6 + $0x24] sm:$0xff]
    %v2705 = vld [vmem:[#allocation6 + $0x2c] sm:$0xff]
    %v2706 = vld [vmem:[#allocation6 + $0x34] sm:$0xf]
    %v2707 = vld [vmem:[#allocation6 + $0x38] sm:$0xff]
    %v2708 = vld [vmem:[#allocation6 + $0x40] sm:$0xff]
    %v2709 = vld [vmem:[#allocation6 + $0x48] sm:$0xff]
    %v2710 = vld [vmem:[#allocation6 + $0x50] sm:$0xf]
    %v2711 = vld [vmem:[#allocation6 + $0x54] sm:$0xff]
    %v2712 = vld [vmem:[#allocation6 + $0x5c] sm:$0xff]
    %v2713 = vld [vmem:[#allocation6 + $0x64] sm:$0xff]
    %v2714 = vld [vmem:[#allocation6 + $0x6c] sm:$0xf]
    %v2715 = vld [vmem:[#allocation6 + $0x70] sm:$0xff]
    %v2716 = vld [vmem:[#allocation6 + $0x78] sm:$0xff]
    %v2717 = vld [vmem:[#allocation6 + $0x80] sm:$0xff]
    %v2718 = vld [vmem:[#allocation6 + $0x88] sm:$0xf]
    %v2719 = vld [vmem:[#allocation6 + $0x8c] sm:$0xff]
    %v2720 = vld [vmem:[#allocation6 + $0x94] sm:$0xff]
    %v2721 = vld [vmem:[#allocation6 + $0x9c] sm:$0xff]
    %v2722 = vld [vmem:[#allocation6 + $0xa4] sm:$0xf]
    %v2723 = vld [vmem:[#allocation6 + $0xa8] sm:$0xff]
    %v2724 = vld [vmem:[#allocation6 + $0xb0] sm:$0xff]
    %v2725 = vld [vmem:[#allocation6 + $0xb8] sm:$0xff]
    %v2726 = vld [vmem:[#allocation6 + $0xc0] sm:$0xf]
    %v2727 = vld [vmem:[#allocation6 + $0xc4] sm:$0xff]
    %v2728 = vld [vmem:[#allocation6 + $0xcc] sm:$0xff]
    %v2729 = vld [vmem:[#allocation6 + $0xd4] sm:$0xff]
    %v2730 = vld [vmem:[#allocation6 + $0xdc] sm:$0xf]
    %v2731 = vld [vmem:[#allocation6 + $0xe0] sm:$0xff]
    %v2732 = vld [vmem:[#allocation6 + $0xe8] sm:$0xff]
    %v2733 = vld [vmem:[#allocation6 + $0xf0] sm:$0xff]
    %v2734 = vld [vmem:[#allocation6 + $0xf8] sm:$0xf]
    %v2735 = vld [vmem:[#allocation6 + $0xfc] sm:$0xff]
    %v2736 = vld [vmem:[#allocation6 + $0x104] sm:$0xff]
    %v2737 = vld [vmem:[#allocation6 + $0x10c] sm:$0xff]
    %v2738 = vld [vmem:[#allocation6 + $0x114] sm:$0xf]
    %v2739 = vld [vmem:[#allocation6 + $0x118] sm:$0xff]
    %v2740 = vld [vmem:[#allocation6 + $0x120] sm:$0xff]
    %v2741 = vld [vmem:[#allocation6 + $0x128] sm:$0xff]
    %v2742 = vld [vmem:[#allocation6 + $0x130] sm:$0xf]
    %v2743 = vld [vmem:[#allocation6 + $0x134] sm:$0xff]
    %v2744 = vld [vmem:[#allocation6 + $0x13c] sm:$0xff]
    %v2745 = vld [vmem:[#allocation6 + $0x144] sm:$0xff]
    %v2746 = vld [vmem:[#allocation6 + $0x14c] sm:$0xf]
    %v2747 = vld [vmem:[#allocation6 + $0x150] sm:$0xff]
    %v2748 = vld [vmem:[#allocation6 + $0x158] sm:$0xff]
    %v2749 = vld [vmem:[#allocation6 + $0x160] sm:$0xff]
    %v2750 = vld [vmem:[#allocation6 + $0x168] sm:$0xf]
    %v2751 = vld [vmem:[#allocation6 + $0x16c] sm:$0xff]
    %v2752 = vld [vmem:[#allocation6 + $0x174] sm:$0xff]
    %v2753 = vld [vmem:[#allocation6 + $0x17c] sm:$0xff]
    %v2754 = vld [vmem:[#allocation6 + $0x184] sm:$0xf]
    %v2755 = vld [vmem:[#allocation6 + $0x188] sm:$0xff]
    %v2756 = vld [vmem:[#allocation6 + $0x190] sm:$0xff]
    %v2757 = vld [vmem:[#allocation6 + $0x198] sm:$0xff]
    %v2758 = vld [vmem:[#allocation6 + $0x1a0] sm:$0xf]
    %v2759 = vld [vmem:[#allocation6 + $0x1a4] sm:$0xff]
    %v2760 = vld [vmem:[#allocation6 + $0x1ac] sm:$0xff]
    %v2761 = vld [vmem:[#allocation6 + $0x1b4] sm:$0xff]
    %v2762 = vld [vmem:[#allocation6 + $0x1bc] sm:$0xf]
    %v2763 = vld [vmem:[#allocation6 + $0x1c0] sm:$0xff]
    %v2764 = vld [vmem:[#allocation6 + $0x1c8] sm:$0xff]
    %v2765 = vld [vmem:[#allocation6 + $0x1d0] sm:$0xff]
    %v2766 = vld [vmem:[#allocation6 + $0x1d8] sm:$0xf]
    %v2767 = vld [vmem:[#allocation6 + $0x1dc] sm:$0xff]
    %v2768 = vld [vmem:[#allocation6 + $0x1e4] sm:$0xff]
    %v2769 = vld [vmem:[#allocation6 + $0x1ec] sm:$0xff]
    %v2770 = vld [vmem:[#allocation6 + $0x1f4] sm:$0xf]
    %v2771 = vld [vmem:[#allocation6 + $0x1f8] sm:$0xff]
    %v2772 = vld [vmem:[#allocation6 + $0x200] sm:$0xff]
    %v2773 = vld [vmem:[#allocation6 + $0x208] sm:$0xff]
    %v2774 = vld [vmem:[#allocation6 + $0x210] sm:$0xf]
    %v2775 = vld [vmem:[#allocation6 + $0x214] sm:$0xff]
    %v2776 = vld [vmem:[#allocation6 + $0x21c] sm:$0xff]
    %v2777 = vld [vmem:[#allocation6 + $0x224] sm:$0xff]
    %v2778 = vld [vmem:[#allocation6 + $0x22c] sm:$0xf]
    %v2779 = vld [vmem:[#allocation6 + $0x230] sm:$0xff]
    %v2780 = vld [vmem:[#allocation6 + $0x238] sm:$0xff]
    %v2781 = vld [vmem:[#allocation6 + $0x240] sm:$0xff]
    %v2782 = vld [vmem:[#allocation6 + $0x248] sm:$0xf]
    %v2783 = vld [vmem:[#allocation6 + $0x24c] sm:$0xff]
    %v2784 = vld [vmem:[#allocation6 + $0x254] sm:$0xff]
    %v2785 = vld [vmem:[#allocation6 + $0x25c] sm:$0xff]
    %v2786 = vld [vmem:[#allocation6 + $0x264] sm:$0xf]
    %v2787 = vld [vmem:[#allocation6 + $0x268] sm:$0xff]
    %v2788 = vld [vmem:[#allocation6 + $0x270] sm:$0xff]
    %v2789 = vld [vmem:[#allocation6 + $0x278] sm:$0xff]
    %v2790 = vld [vmem:[#allocation6 + $0x280] sm:$0xf]
    %v2791 = vld [vmem:[#allocation6 + $0x284] sm:$0xff]
    %v2792 = vld [vmem:[#allocation6 + $0x28c] sm:$0xff]
    %v2793 = vld [vmem:[#allocation6 + $0x294] sm:$0xff]
    %v2794 = vld [vmem:[#allocation6 + $0x29c] sm:$0xf]
    %v2795 = vld [vmem:[#allocation6 + $0x2a0] sm:$0xff]
    %v2796 = vld [vmem:[#allocation6 + $0x2a8] sm:$0xff]
    %v2797 = vld [vmem:[#allocation6 + $0x2b0] sm:$0xff]
    %v2798 = vld [vmem:[#allocation6 + $0x2b8] sm:$0xf]
    %v2799 = vld [vmem:[#allocation6 + $0x2bc] sm:$0xff]
    %v2800 = vld [vmem:[#allocation6 + $0x2c4] sm:$0xff]
    %v2801 = vld [vmem:[#allocation6 + $0x2cc] sm:$0xff]
    %v2802 = vld [vmem:[#allocation6 + $0x2d4] sm:$0xf]
    %v2803 = vld [vmem:[#allocation6 + $0x2d8] sm:$0xff]
    %v2804 = vld [vmem:[#allocation6 + $0x2e0] sm:$0xff]
    %v2805 = vld [vmem:[#allocation6 + $0x2e8] sm:$0xff]
    %v2806 = vld [vmem:[#allocation6 + $0x2f0] sm:$0xf]
    %v2807 = vld [vmem:[#allocation6 + $0x2f4] sm:$0xff]
    %v2808 = vld [vmem:[#allocation6 + $0x2fc] sm:$0xff]
    %v2809 = vld [vmem:[#allocation6 + $0x304] sm:$0xff]
    %v2810 = vld [vmem:[#allocation6 + $0x30c] sm:$0xf]
    %v2811 = vld [vmem:[#allocation6 + $0x310] sm:$0xff]
    %v2812 = vld [vmem:[#allocation6 + $0x318] sm:$0xff]
    %v2813 = vld [vmem:[#allocation6 + $0x320] sm:$0xff]
    %v2814 = vld [vmem:[#allocation6 + $0x328] sm:$0xf]
    %v2815 = vld [vmem:[#allocation6 + $0x32c] sm:$0xff]
    %v2816 = vld [vmem:[#allocation6 + $0x334] sm:$0xff]
    %v2817 = vld [vmem:[#allocation6 + $0x33c] sm:$0xff]
    %v2818 = vld [vmem:[#allocation6 + $0x344] sm:$0xf]
    %v2819 = vld [vmem:[#allocation6 + $0x348] sm:$0xff]
    %v2820 = vld [vmem:[#allocation6 + $0x350] sm:$0xff]
    %v2821 = vld [vmem:[#allocation6 + $0x358] sm:$0xff]
    %v2822 = vld [vmem:[#allocation6 + $0x360] sm:$0xf]
    %v2823 = vld [vmem:[#allocation6 + $0x364] sm:$0xff]
    %v2824 = vld [vmem:[#allocation6 + $0x36c] sm:$0xff]
    %v2825 = vld [vmem:[#allocation6 + $0x374] sm:$0xff]
    %v2826 = vld [vmem:[#allocation6 + $0x37c] sm:$0xf]
    %v2828 = vlaneseq
    %v2829 = vshrl.u32 %v2828, 7
    %v2830 = vsub.s32 0, %v2829
    %v2831 = vrot.slane %v67, %v2830
    %v2832 = vlaneseq
    %v2833 = vshrl.u32 %v2832, 7
    %v2834 = vsub.s32 1, %v2833
    %v2835 = vrot.slane %v67, %v2834
    %v2836 = vlaneseq
    %v2837 = vshrl.u32 %v2836, 7
    %v2838 = vsub.s32 2, %v2837
    %v2839 = vrot.slane %v67, %v2838
    %v2840 = vlaneseq
    %v2841 = vshrl.u32 %v2840, 7
    %v2842 = vsub.s32 3, %v2841
    %v2843 = vrot.slane %v67, %v2842
    %v2844 = vlaneseq
    %v2845 = vshrl.u32 %v2844, 7
    %v2846 = vsub.s32 4, %v2845
    %v2847 = vrot.slane %v67, %v2846
    %v2848 = vlaneseq
    %v2849 = vshrl.u32 %v2848, 7
    %v2850 = vsub.s32 5, %v2849
    %v2851 = vrot.slane %v67, %v2850
    %v2852 = vlaneseq
    %v2853 = vshrl.u32 %v2852, 7
    %v2854 = vsub.s32 6, %v2853
    %v2855 = vrot.slane %v67, %v2854
    %v2991 = vunpack.c.l.b16 %v2699
    %v2992 = vunpack.c.h.b16 %v2699
    %v2993 = vunpack.c.l.b16 %v2700
    %v2994 = vunpack.c.h.b16 %v2700
    %v2995 = vunpack.c.l.b16 %v2701
    %v2996 = vunpack.c.h.b16 %v2701
    %v2997 = vunpack.c.l.b16 %v2702
    %v2998 = vunpack.c.l.b16 %v2703
    %v2999 = vunpack.c.h.b16 %v2703
    %v3000 = vunpack.c.l.b16 %v2704
    %v3001 = vunpack.c.h.b16 %v2704
    %v3002 = vunpack.c.l.b16 %v2705
    %v3003 = vunpack.c.h.b16 %v2705
    %v3004 = vunpack.c.l.b16 %v2706
    %v3005 = vunpack.c.l.b16 %v2707
    %v3006 = vunpack.c.h.b16 %v2707
    %v3007 = vunpack.c.l.b16 %v2708
    %v3008 = vunpack.c.h.b16 %v2708
    %v3009 = vunpack.c.l.b16 %v2709
    %v3010 = vunpack.c.h.b16 %v2709
    %v3011 = vunpack.c.l.b16 %v2710
    %v3012 = vunpack.c.l.b16 %v2711
    %v3013 = vunpack.c.h.b16 %v2711
    %v3014 = vunpack.c.l.b16 %v2712
    %v3015 = vunpack.c.h.b16 %v2712
    %v3016 = vunpack.c.l.b16 %v2713
    %v3017 = vunpack.c.h.b16 %v2713
    %v3018 = vunpack.c.l.b16 %v2714
    %v3019 = vunpack.c.l.b16 %v2715
    %v3020 = vunpack.c.h.b16 %v2715
    %v3021 = vunpack.c.l.b16 %v2716
    %v3022 = vunpack.c.h.b16 %v2716
    %v3023 = vunpack.c.l.b16 %v2717
    %v3024 = vunpack.c.h.b16 %v2717
    %v3025 = vunpack.c.l.b16 %v2718
    %v3026 = vunpack.c.l.b16 %v2719
    %v3027 = vunpack.c.h.b16 %v2719
    %v3028 = vunpack.c.l.b16 %v2720
    %v3029 = vunpack.c.h.b16 %v2720
    %v3030 = vunpack.c.l.b16 %v2721
    %v3031 = vunpack.c.h.b16 %v2721
    %v3032 = vunpack.c.l.b16 %v2722
    %v3033 = vunpack.c.l.b16 %v2723
    %v3034 = vunpack.c.h.b16 %v2723
    %v3035 = vunpack.c.l.b16 %v2724
    %v3036 = vunpack.c.h.b16 %v2724
    %v3037 = vunpack.c.l.b16 %v2725
    %v3038 = vunpack.c.h.b16 %v2725
    %v3039 = vunpack.c.l.b16 %v2726
    %v3040 = vunpack.c.l.b16 %v2727
    %v3041 = vunpack.c.h.b16 %v2727
    %v3042 = vunpack.c.l.b16 %v2728
    %v3043 = vunpack.c.h.b16 %v2728
    %v3044 = vunpack.c.l.b16 %v2729
    %v3045 = vunpack.c.h.b16 %v2729
    %v3046 = vunpack.c.l.b16 %v2730
    %v3047 = vunpack.c.l.b16 %v2731
    %v3048 = vunpack.c.h.b16 %v2731
    %v3049 = vunpack.c.l.b16 %v2732
    %v3050 = vunpack.c.h.b16 %v2732
    %v3051 = vunpack.c.l.b16 %v2733
    %v3052 = vunpack.c.h.b16 %v2733
    %v3053 = vunpack.c.l.b16 %v2734
    %v3054 = vunpack.c.l.b16 %v2735
    %v3055 = vunpack.c.h.b16 %v2735
    %v3056 = vunpack.c.l.b16 %v2736
    %v3057 = vunpack.c.h.b16 %v2736
    %v3058 = vunpack.c.l.b16 %v2737
    %v3059 = vunpack.c.h.b16 %v2737
    %v3060 = vunpack.c.l.b16 %v2738
    %v3061 = vunpack.c.l.b16 %v2739
    %v3062 = vunpack.c.h.b16 %v2739
    %v3063 = vunpack.c.l.b16 %v2740
    %v3064 = vunpack.c.h.b16 %v2740
    %v3065 = vunpack.c.l.b16 %v2741
    %v3066 = vunpack.c.h.b16 %v2741
    %v3067 = vunpack.c.l.b16 %v2742
    %v3068 = vunpack.c.l.b16 %v2743
    %v3069 = vunpack.c.h.b16 %v2743
    %v3070 = vunpack.c.l.b16 %v2744
    %v3071 = vunpack.c.h.b16 %v2744
    %v3072 = vunpack.c.l.b16 %v2745
    %v3073 = vunpack.c.h.b16 %v2745
    %v3074 = vunpack.c.l.b16 %v2746
    %v3075 = vunpack.c.l.b16 %v2747
    %v3076 = vunpack.c.h.b16 %v2747
    %v3077 = vunpack.c.l.b16 %v2748
    %v3078 = vunpack.c.h.b16 %v2748
    %v3079 = vunpack.c.l.b16 %v2749
    %v3080 = vunpack.c.h.b16 %v2749
    %v3081 = vunpack.c.l.b16 %v2750
    %v3082 = vunpack.c.l.b16 %v2751
    %v3083 = vunpack.c.h.b16 %v2751
    %v3084 = vunpack.c.l.b16 %v2752
    %v3085 = vunpack.c.h.b16 %v2752
    %v3086 = vunpack.c.l.b16 %v2753
    %v3087 = vunpack.c.h.b16 %v2753
    %v3088 = vunpack.c.l.b16 %v2754
    %v3089 = vunpack.c.l.b16 %v2755
    %v3090 = vunpack.c.h.b16 %v2755
    %v3091 = vunpack.c.l.b16 %v2756
    %v3092 = vunpack.c.h.b16 %v2756
    %v3093 = vunpack.c.l.b16 %v2757
    %v3094 = vunpack.c.h.b16 %v2757
    %v3095 = vunpack.c.l.b16 %v2758
    %v3096 = vunpack.c.l.b16 %v2759
    %v3097 = vunpack.c.h.b16 %v2759
    %v3098 = vunpack.c.l.b16 %v2760
    %v3099 = vunpack.c.h.b16 %v2760
    %v3100 = vunpack.c.l.b16 %v2761
    %v3101 = vunpack.c.h.b16 %v2761
    %v3102 = vunpack.c.l.b16 %v2762
    %v3103 = vunpack.c.l.b16 %v2763
    %v3104 = vunpack.c.h.b16 %v2763
    %v3105 = vunpack.c.l.b16 %v2764
    %v3106 = vunpack.c.h.b16 %v2764
    %v3107 = vunpack.c.l.b16 %v2765
    %v3108 = vunpack.c.h.b16 %v2765
    %v3109 = vunpack.c.l.b16 %v2766
    %v3110 = vunpack.c.l.b16 %v2767
    %v3111 = vunpack.c.h.b16 %v2767
    %v3112 = vunpack.c.l.b16 %v2768
    %v3113 = vunpack.c.h.b16 %v2768
    %v3114 = vunpack.c.l.b16 %v2769
    %v3115 = vunpack.c.h.b16 %v2769
    %v3116 = vunpack.c.l.b16 %v2770
    %v3117 = vunpack.c.l.b16 %v2771
    %v3118 = vunpack.c.h.b16 %v2771
    %v3119 = vunpack.c.l.b16 %v2772
    %v3120 = vunpack.c.h.b16 %v2772
    %v3121 = vunpack.c.l.b16 %v2773
    %v3122 = vunpack.c.h.b16 %v2773
    %v3123 = vunpack.c.l.b16 %v2774
    %v3124 = vunpack.c.l.b16 %v2775
    %v3125 = vunpack.c.h.b16 %v2775
    %v3126 = vunpack.c.l.b16 %v2776
    %v3127 = vunpack.c.h.b16 %v2776
    %v3128 = vunpack.c.l.b16 %v2777
    %v3129 = vunpack.c.h.b16 %v2777
    %v3130 = vunpack.c.l.b16 %v2778
    %v3131 = vunpack.c.l.b16 %v2779
    %v3132 = vunpack.c.h.b16 %v2779
    %v3133 = vunpack.c.l.b16 %v2780
    %v3134 = vunpack.c.h.b16 %v2780
    %v3135 = vunpack.c.l.b16 %v2781
    %v3136 = vunpack.c.h.b16 %v2781
    %v3137 = vunpack.c.l.b16 %v2782
    %v3138 = vunpack.c.l.b16 %v2783
    %v3139 = vunpack.c.h.b16 %v2783
    %v3140 = vunpack.c.l.b16 %v2784
    %v3141 = vunpack.c.h.b16 %v2784
    %v3142 = vunpack.c.l.b16 %v2785
    %v3143 = vunpack.c.h.b16 %v2785
    %v3144 = vunpack.c.l.b16 %v2786
    %v3145 = vunpack.c.l.b16 %v2787
    %v3146 = vunpack.c.h.b16 %v2787
    %v3147 = vunpack.c.l.b16 %v2788
    %v3148 = vunpack.c.h.b16 %v2788
    %v3149 = vunpack.c.l.b16 %v2789
    %v3150 = vunpack.c.h.b16 %v2789
    %v3151 = vunpack.c.l.b16 %v2790
    %v3152 = vunpack.c.l.b16 %v2791
    %v3153 = vunpack.c.h.b16 %v2791
    %v3154 = vunpack.c.l.b16 %v2792
    %v3155 = vunpack.c.h.b16 %v2792
    %v3156 = vunpack.c.l.b16 %v2793
    %v3157 = vunpack.c.h.b16 %v2793
    %v3158 = vunpack.c.l.b16 %v2794
    %v3159 = vunpack.c.l.b16 %v2795
    %v3160 = vunpack.c.h.b16 %v2795
    %v3161 = vunpack.c.l.b16 %v2796
    %v3162 = vunpack.c.h.b16 %v2796
    %v3163 = vunpack.c.l.b16 %v2797
    %v3164 = vunpack.c.h.b16 %v2797
    %v3165 = vunpack.c.l.b16 %v2798
    %v3166 = vunpack.c.l.b16 %v2799
    %v3167 = vunpack.c.h.b16 %v2799
    %v3168 = vunpack.c.l.b16 %v2800
    %v3169 = vunpack.c.h.b16 %v2800
    %v3170 = vunpack.c.l.b16 %v2801
    %v3171 = vunpack.c.h.b16 %v2801
    %v3172 = vunpack.c.l.b16 %v2802
    %v3173 = vunpack.c.l.b16 %v2803
    %v3174 = vunpack.c.h.b16 %v2803
    %v3175 = vunpack.c.l.b16 %v2804
    %v3176 = vunpack.c.h.b16 %v2804
    %v3177 = vunpack.c.l.b16 %v2805
    %v3178 = vunpack.c.h.b16 %v2805
    %v3179 = vunpack.c.l.b16 %v2806
    %v3180 = vunpack.c.l.b16 %v2807
    %v3181 = vunpack.c.h.b16 %v2807
    %v3182 = vunpack.c.l.b16 %v2808
    %v3183 = vunpack.c.h.b16 %v2808
    %v3184 = vunpack.c.l.b16 %v2809
    %v3185 = vunpack.c.h.b16 %v2809
    %v3186 = vunpack.c.l.b16 %v2810
    %v3187 = vunpack.c.l.b16 %v2811
    %v3188 = vunpack.c.h.b16 %v2811
    %v3189 = vunpack.c.l.b16 %v2812
    %v3190 = vunpack.c.h.b16 %v2812
    %v3191 = vunpack.c.l.b16 %v2813
    %v3192 = vunpack.c.h.b16 %v2813
    %v3193 = vunpack.c.l.b16 %v2814
    %v3194 = vunpack.c.l.b16 %v2815
    %v3195 = vunpack.c.h.b16 %v2815
    %v3196 = vunpack.c.l.b16 %v2816
    %v3197 = vunpack.c.h.b16 %v2816
    %v3198 = vunpack.c.l.b16 %v2817
    %v3199 = vunpack.c.h.b16 %v2817
    %v3200 = vunpack.c.l.b16 %v2818
    %v3201 = vunpack.c.l.b16 %v2819
    %v3202 = vunpack.c.h.b16 %v2819
    %v3203 = vunpack.c.l.b16 %v2820
    %v3204 = vunpack.c.h.b16 %v2820
    %v3205 = vunpack.c.l.b16 %v2821
    %v3206 = vunpack.c.h.b16 %v2821
    %v3207 = vunpack.c.l.b16 %v2822
    %v3208 = vunpack.c.l.b16 %v2823
    %v3209 = vunpack.c.h.b16 %v2823
    %v3210 = vunpack.c.l.b16 %v2824
    %v3211 = vunpack.c.h.b16 %v2824
    %v3212 = vunpack.c.l.b16 %v2825
    %v3213 = vunpack.c.h.b16 %v2825
    %v3214 = vunpack.c.l.b16 %v2826
    %v3215 = vpack.c.b16 %v2998, %v2991
    %v3216 = vpack.c.b16 %v2999, %v2992
    %v3217 = vpack.c.b16 %v3000, %v2993
    %v3218 = vpack.c.b16 %v3001, %v2994
    %v3219 = vpack.c.b16 %v3002, %v2995
    %v3220 = vpack.c.b16 %v3003, %v2996
    %v3221 = vpack.c.b16 %v3004, %v2997
    %v3222 = vpack.c.b16 %v3012, %v3005
    %v3223 = vpack.c.b16 %v3013, %v3006
    %v3224 = vpack.c.b16 %v3014, %v3007
    %v3225 = vpack.c.b16 %v3015, %v3008
    %v3226 = vpack.c.b16 %v3016, %v3009
    %v3227 = vpack.c.b16 %v3017, %v3010
    %v3228 = vpack.c.b16 %v3018, %v3011
    %v3229 = vpack.c.b16 %v3026, %v3019
    %v3230 = vpack.c.b16 %v3027, %v3020
    %v3231 = vpack.c.b16 %v3028, %v3021
    %v3232 = vpack.c.b16 %v3029, %v3022
    %v3233 = vpack.c.b16 %v3030, %v3023
    %v3234 = vpack.c.b16 %v3031, %v3024
    %v3235 = vpack.c.b16 %v3032, %v3025
    %v3236 = vpack.c.b16 %v3040, %v3033
    %v3237 = vpack.c.b16 %v3041, %v3034
    %v3238 = vpack.c.b16 %v3042, %v3035
    %v3239 = vpack.c.b16 %v3043, %v3036
    %v3240 = vpack.c.b16 %v3044, %v3037
    %v3241 = vpack.c.b16 %v3045, %v3038
    %v3242 = vpack.c.b16 %v3046, %v3039
    %v3243 = vpack.c.b16 %v3054, %v3047
    %v3244 = vpack.c.b16 %v3055, %v3048
    %v3245 = vpack.c.b16 %v3056, %v3049
    %v3246 = vpack.c.b16 %v3057, %v3050
    %v3247 = vpack.c.b16 %v3058, %v3051
    %v3248 = vpack.c.b16 %v3059, %v3052
    %v3249 = vpack.c.b16 %v3060, %v3053
    %v3250 = vpack.c.b16 %v3068, %v3061
    %v3251 = vpack.c.b16 %v3069, %v3062
    %v3252 = vpack.c.b16 %v3070, %v3063
    %v3253 = vpack.c.b16 %v3071, %v3064
    %v3254 = vpack.c.b16 %v3072, %v3065
    %v3255 = vpack.c.b16 %v3073, %v3066
    %v3256 = vpack.c.b16 %v3074, %v3067
    %v3257 = vpack.c.b16 %v3082, %v3075
    %v3258 = vpack.c.b16 %v3083, %v3076
    %v3259 = vpack.c.b16 %v3084, %v3077
    %v3260 = vpack.c.b16 %v3085, %v3078
    %v3261 = vpack.c.b16 %v3086, %v3079
    %v3262 = vpack.c.b16 %v3087, %v3080
    %v3263 = vpack.c.b16 %v3088, %v3081
    %v3264 = vpack.c.b16 %v3096, %v3089
    %v3265 = vpack.c.b16 %v3097, %v3090
    %v3266 = vpack.c.b16 %v3098, %v3091
    %v3267 = vpack.c.b16 %v3099, %v3092
    %v3268 = vpack.c.b16 %v3100, %v3093
    %v3269 = vpack.c.b16 %v3101, %v3094
    %v3270 = vpack.c.b16 %v3102, %v3095
    %v3271 = vpack.c.b16 %v3110, %v3103
    %v3272 = vpack.c.b16 %v3111, %v3104
    %v3273 = vpack.c.b16 %v3112, %v3105
    %v3274 = vpack.c.b16 %v3113, %v3106
    %v3275 = vpack.c.b16 %v3114, %v3107
    %v3276 = vpack.c.b16 %v3115, %v3108
    %v3277 = vpack.c.b16 %v3116, %v3109
    %v3278 = vpack.c.b16 %v3124, %v3117
    %v3279 = vpack.c.b16 %v3125, %v3118
    %v3280 = vpack.c.b16 %v3126, %v3119
    %v3281 = vpack.c.b16 %v3127, %v3120
    %v3282 = vpack.c.b16 %v3128, %v3121
    %v3283 = vpack.c.b16 %v3129, %v3122
    %v3284 = vpack.c.b16 %v3130, %v3123
    %v3285 = vpack.c.b16 %v3138, %v3131
    %v3286 = vpack.c.b16 %v3139, %v3132
    %v3287 = vpack.c.b16 %v3140, %v3133
    %v3288 = vpack.c.b16 %v3141, %v3134
    %v3289 = vpack.c.b16 %v3142, %v3135
    %v3290 = vpack.c.b16 %v3143, %v3136
    %v3291 = vpack.c.b16 %v3144, %v3137
    %v3292 = vpack.c.b16 %v3152, %v3145
    %v3293 = vpack.c.b16 %v3153, %v3146
    %v3294 = vpack.c.b16 %v3154, %v3147
    %v3295 = vpack.c.b16 %v3155, %v3148
    %v3296 = vpack.c.b16 %v3156, %v3149
    %v3297 = vpack.c.b16 %v3157, %v3150
    %v3298 = vpack.c.b16 %v3158, %v3151
    %v3299 = vpack.c.b16 %v3166, %v3159
    %v3300 = vpack.c.b16 %v3167, %v3160
    %v3301 = vpack.c.b16 %v3168, %v3161
    %v3302 = vpack.c.b16 %v3169, %v3162
    %v3303 = vpack.c.b16 %v3170, %v3163
    %v3304 = vpack.c.b16 %v3171, %v3164
    %v3305 = vpack.c.b16 %v3172, %v3165
    %v3306 = vpack.c.b16 %v3180, %v3173
    %v3307 = vpack.c.b16 %v3181, %v3174
    %v3308 = vpack.c.b16 %v3182, %v3175
    %v3309 = vpack.c.b16 %v3183, %v3176
    %v3310 = vpack.c.b16 %v3184, %v3177
    %v3311 = vpack.c.b16 %v3185, %v3178
    %v3312 = vpack.c.b16 %v3186, %v3179
    %v3313 = vpack.c.b16 %v3194, %v3187
    %v3314 = vpack.c.b16 %v3195, %v3188
    %v3315 = vpack.c.b16 %v3196, %v3189
    %v3316 = vpack.c.b16 %v3197, %v3190
    %v3317 = vpack.c.b16 %v3198, %v3191
    %v3318 = vpack.c.b16 %v3199, %v3192
    %v3319 = vpack.c.b16 %v3200, %v3193
    %v3320 = vpack.c.b16 %v3208, %v3201
    %v3321 = vpack.c.b16 %v3209, %v3202
    %v3322 = vpack.c.b16 %v3210, %v3203
    %v3323 = vpack.c.b16 %v3211, %v3204
    %v3324 = vpack.c.b16 %v3212, %v3205
    %v3325 = vpack.c.b16 %v3213, %v3206
    %v3326 = vpack.c.b16 %v3214, %v3207
    %3439 = vmatprep.subr.bf16.mxu0 %v3216
    %3440 = vmatpush1.bf16.msra.mxu0 %v3215
    %3441 = vmatprep.subr.bf16.mxu0 %v3223
    %3442 = vmatpush1.bf16.msra.mxu0 %v3222
    %3443 = vmatprep.subr.bf16.mxu0 %v3230
    %3444 = vmatpush1.bf16.msra.mxu0 %v3229
    %3445 = vmatprep.subr.bf16.mxu0 %v3237
    %3446 = vmatpush1.bf16.msra.mxu0 %v3236
    %3447 = vmatprep.subr.bf16.mxu0 %v3244
    %3448 = vmatpush1.bf16.msra.mxu0 %v3243
    %3449 = vmatprep.subr.bf16.mxu0 %v3251
    %3450 = vmatpush1.bf16.msra.mxu0 %v3250
    %3451 = vmatprep.subr.bf16.mxu0 %v3258
    %3452 = vmatpush1.bf16.msra.mxu0 %v3257
    %3453 = vmatprep.subr.bf16.mxu0 %v3265
    %3454 = vmatpush1.bf16.msra.mxu0 %v3264
    %3455 = vmatprep.subr.bf16.mxu0 %v3272
    %3456 = vmatpush1.bf16.msra.mxu0 %v3271
    %3457 = vmatprep.subr.bf16.mxu0 %v3279
    %3458 = vmatpush1.bf16.msra.mxu0 %v3278
    %3459 = vmatprep.subr.bf16.mxu0 %v3286
    %3460 = vmatpush1.bf16.msra.mxu0 %v3285
    %3461 = vmatprep.subr.bf16.mxu0 %v3293
    %3462 = vmatpush1.bf16.msra.mxu0 %v3292
    %3463 = vmatprep.subr.bf16.mxu0 %v3300
    %3464 = vmatpush1.bf16.msra.mxu0 %v3299
    %3465 = vmatprep.subr.bf16.mxu0 %v3307
    %3466 = vmatpush1.bf16.msra.mxu0 %v3306
    %3467 = vmatprep.subr.bf16.mxu0 %v3314
    %3468 = vmatpush1.bf16.msra.mxu0 %v3313
    %3469 = vmatprep.subr.bf16.mxu0 %v3321
    %3470 = vmatpush1.bf16.msra.mxu0 %v3320
    %3471 = vmatprep.mubr.bf16.mxu0 %v2684
    %3472 = vmatmul.mubr.bf16.gmra.mrb[0].mxu0 %v2683
    %v3473 = vpop.f32.mrb[0].mxu0
    %v3474 = vadd.f32 %v2831, %v3473
    %v3475 = vpop.f32.mrb[0].mxu0
    %v3476 = vadd.f32 %v2835, %v3475
    %v3477 = vpop.f32.mrb[0].mxu0
    %v3478 = vadd.f32 %v2831, %v3477
    %v3479 = vpop.f32.mrb[0].mxu0
    %v3480 = vadd.f32 %v2835, %v3479
    %3481 = vmatprep.mubr.bf16.mxu0 %v2686
    %3482 = vmatmul.mubr.bf16.gmra.mrb[0].mxu0 %v2685
    %v3483 = vpop.f32.mrb[0].mxu0
    %v3484 = vadd.f32 %v2831, %v3483
    %v3485 = vpop.f32.mrb[0].mxu0
    %v3486 = vadd.f32 %v2835, %v3485
    %v3487 = vpop.f32.mrb[0].mxu0
    %v3488 = vadd.f32 %v2831, %v3487
    %v3489 = vpop.f32.mrb[0].mxu0
    %v3490 = vadd.f32 %v2835, %v3489
    %3491 = vmatprep.mubr.bf16.mxu0 %v2688
    %3492 = vmatmul.mubr.bf16.gmra.mrb[0].mxu0 %v2687
    %v3493 = vpop.f32.mrb[0].mxu0
    %v3494 = vadd.f32 %v2831, %v3493
    %v3495 = vpop.f32.mrb[0].mxu0
    %v3496 = vadd.f32 %v2835, %v3495
    %v3497 = vpop.f32.mrb[0].mxu0
    %v3498 = vadd.f32 %v2831, %v3497
    %v3499 = vpop.f32.mrb[0].mxu0
    %v3500 = vadd.f32 %v2835, %v3499
    %3501 = vmatprep.mubr.bf16.mxu0 %v2690
    %3502 = vmatmul.mubr.bf16.gmra.mrb[0].mxu0 %v2689
    %v3503 = vpop.f32.mrb[0].mxu0
    %v3504 = vadd.f32 %v2831, %v3503
    %v3505 = vpop.f32.mrb[0].mxu0
    %v3506 = vadd.f32 %v2835, %v3505
    %v3507 = vpop.f32.mrb[0].mxu0
    %v3508 = vadd.f32 %v2831, %v3507
    %v3509 = vpop.f32.mrb[0].mxu0
    %v3510 = vadd.f32 %v2835, %v3509
    %3511 = vmatprep.mubr.bf16.mxu0 %v2692
    %3512 = vmatmul.mubr.bf16.gmra.mrb[0].mxu0 %v2691
    %v3513 = vpop.f32.mrb[0].mxu0
    %v3514 = vadd.f32 %v2831, %v3513
    %v3515 = vpop.f32.mrb[0].mxu0
    %v3516 = vadd.f32 %v2835, %v3515
    %v3517 = vpop.f32.mrb[0].mxu0
    %v3518 = vadd.f32 %v2831, %v3517
    %v3519 = vpop.f32.mrb[0].mxu0
    %v3520 = vadd.f32 %v2835, %v3519
    %3521 = vmatprep.mubr.bf16.mxu0 %v2694
    %3522 = vmatmul.mubr.bf16.gmra.mrb[0].mxu0 %v2693
    %v3523 = vpop.f32.mrb[0].mxu0
    %v3524 = vadd.f32 %v2831, %v3523
    %v3525 = vpop.f32.mrb[0].mxu0
    %v3526 = vadd.f32 %v2835, %v3525
    %v3527 = vpop.f32.mrb[0].mxu0
    %v3528 = vadd.f32 %v2831, %v3527
    %v3529 = vpop.f32.mrb[0].mxu0
    %v3530 = vadd.f32 %v2835, %v3529
    %3531 = vmatprep.mubr.bf16.mxu0 %v2696
    %3532 = vmatmul.mubr.bf16.gmra.mrb[0].mxu0 %v2695
    %v3533 = vpop.f32.mrb[0].mxu0
    %v3534 = vadd.f32 %v2831, %v3533
    %v3535 = vpop.f32.mrb[0].mxu0
    %v3536 = vadd.f32 %v2835, %v3535
    %v3537 = vpop.f32.mrb[0].mxu0
    %v3538 = vadd.f32 %v2831, %v3537
    %v3539 = vpop.f32.mrb[0].mxu0
    %v3540 = vadd.f32 %v2835, %v3539
    %3541 = vmatprep.mubr.bf16.mxu0 %v2698
    %3542 = vmatmul.mubr.bf16.gmra.mrb[0].mxu0 %v2697
    %v3543 = vpop.f32.mrb[0].mxu0
    %v3544 = vadd.f32 %v2831, %v3543
    %v3545 = vpop.f32.mrb[0].mxu0
    %v3546 = vadd.f32 %v2835, %v3545
    %v3547 = vpop.f32.mrb[0].mxu0
    %v3548 = vadd.f32 %v2831, %v3547
    %v3549 = vpop.f32.mrb[0].mxu0
    %v3550 = vadd.f32 %v2835, %v3549
    %3551 = vdwg.mxu0
    %3552 = vmatprep.subr.bf16.mxu0 %v3218
    %3553 = vmatpush1.bf16.msra.mxu0 %v3217
    %3554 = vmatprep.subr.bf16.mxu0 %v3225
    %3555 = vmatpush1.bf16.msra.mxu0 %v3224
    %3556 = vmatprep.subr.bf16.mxu0 %v3232
    %3557 = vmatpush1.bf16.msra.mxu0 %v3231
    %3558 = vmatprep.subr.bf16.mxu0 %v3239
    %3559 = vmatpush1.bf16.msra.mxu0 %v3238
    %3560 = vmatprep.subr.bf16.mxu0 %v3246
    %3561 = vmatpush1.bf16.msra.mxu0 %v3245
    %3562 = vmatprep.subr.bf16.mxu0 %v3253
    %3563 = vmatpush1.bf16.msra.mxu0 %v3252
    %3564 = vmatprep.subr.bf16.mxu0 %v3260
    %3565 = vmatpush1.bf16.msra.mxu0 %v3259
    %3566 = vmatprep.subr.bf16.mxu0 %v3267
    %3567 = vmatpush1.bf16.msra.mxu0 %v3266
    %3568 = vmatprep.subr.bf16.mxu0 %v3274
    %3569 = vmatpush1.bf16.msra.mxu0 %v3273
    %3570 = vmatprep.subr.bf16.mxu0 %v3281
    %3571 = vmatpush1.bf16.msra.mxu0 %v3280
    %3572 = vmatprep.subr.bf16.mxu0 %v3288
    %3573 = vmatpush1.bf16.msra.mxu0 %v3287
    %3574 = vmatprep.subr.bf16.mxu0 %v3295
    %3575 = vmatpush1.bf16.msra.mxu0 %v3294
    %3576 = vmatprep.subr.bf16.mxu0 %v3302
    %3577 = vmatpush1.bf16.msra.mxu0 %v3301
    %3578 = vmatprep.subr.bf16.mxu0 %v3309
    %3579 = vmatpush1.bf16.msra.mxu0 %v3308
    %3580 = vmatprep.subr.bf16.mxu0 %v3316
    %3581 = vmatpush1.bf16.msra.mxu0 %v3315
    %3582 = vmatprep.subr.bf16.mxu0 %v3323
    %3583 = vmatpush1.bf16.msra.mxu0 %v3322
    %3584 = vmatprep.mubr.bf16.mxu0 %v2684
    %3585 = vmatmul.mubr.bf16.gmra.mrb[0].mxu0 %v2683
    %v3586 = vpop.f32.mrb[0].mxu0
    %v3587 = vadd.f32 %v2839, %v3586
    %v3588 = vpop.f32.mrb[0].mxu0
    %v3589 = vadd.f32 %v2843, %v3588
    %v3590 = vpop.f32.mrb[0].mxu0
    %v3591 = vadd.f32 %v2839, %v3590
    %v3592 = vpop.f32.mrb[0].mxu0
    %v3593 = vadd.f32 %v2843, %v3592
    %3594 = vmatprep.mubr.bf16.mxu0 %v2686
    %3595 = vmatmul.mubr.bf16.gmra.mrb[0].mxu0 %v2685
    %v3596 = vpop.f32.mrb[0].mxu0
    %v3597 = vadd.f32 %v2839, %v3596
    %v3598 = vpop.f32.mrb[0].mxu0
    %v3599 = vadd.f32 %v2843, %v3598
    %v3600 = vpop.f32.mrb[0].mxu0
    %v3601 = vadd.f32 %v2839, %v3600
    %v3602 = vpop.f32.mrb[0].mxu0
    %v3603 = vadd.f32 %v2843, %v3602
    %3604 = vmatprep.mubr.bf16.mxu0 %v2688
    %3605 = vmatmul.mubr.bf16.gmra.mrb[0].mxu0 %v2687
    %v3606 = vpop.f32.mrb[0].mxu0
    %v3607 = vadd.f32 %v2839, %v3606
    %v3608 = vpop.f32.mrb[0].mxu0
    %v3609 = vadd.f32 %v2843, %v3608
    %v3610 = vpop.f32.mrb[0].mxu0
    %v3611 = vadd.f32 %v2839, %v3610
    %v3612 = vpop.f32.mrb[0].mxu0
    %v3613 = vadd.f32 %v2843, %v3612
    %3614 = vmatprep.mubr.bf16.mxu0 %v2690
    %3615 = vmatmul.mubr.bf16.gmra.mrb[0].mxu0 %v2689
    %v3616 = vpop.f32.mrb[0].mxu0
    %v3617 = vadd.f32 %v2839, %v3616
    %v3618 = vpop.f32.mrb[0].mxu0
    %v3619 = vadd.f32 %v2843, %v3618
    %v3620 = vpop.f32.mrb[0].mxu0
    %v3621 = vadd.f32 %v2839, %v3620
    %v3622 = vpop.f32.mrb[0].mxu0
    %v3623 = vadd.f32 %v2843, %v3622
    %3624 = vmatprep.mubr.bf16.mxu0 %v2692
    %3625 = vmatmul.mubr.bf16.gmra.mrb[0].mxu0 %v2691
    %v3626 = vpop.f32.mrb[0].mxu0
    %v3627 = vadd.f32 %v2839, %v3626
    %v3628 = vpop.f32.mrb[0].mxu0
    %v3629 = vadd.f32 %v2843, %v3628
    %v3630 = vpop.f32.mrb[0].mxu0
    %v3631 = vadd.f32 %v2839, %v3630
    %v3632 = vpop.f32.mrb[0].mxu0
    %v3633 = vadd.f32 %v2843, %v3632
    %3634 = vmatprep.mubr.bf16.mxu0 %v2694
    %3635 = vmatmul.mubr.bf16.gmra.mrb[0].mxu0 %v2693
    %v3636 = vpop.f32.mrb[0].mxu0
    %v3637 = vadd.f32 %v2839, %v3636
    %v3638 = vpop.f32.mrb[0].mxu0
    %v3639 = vadd.f32 %v2843, %v3638
    %v3640 = vpop.f32.mrb[0].mxu0
    %v3641 = vadd.f32 %v2839, %v3640
    %v3642 = vpop.f32.mrb[0].mxu0
    %v3643 = vadd.f32 %v2843, %v3642
    %3644 = vmatprep.mubr.bf16.mxu0 %v2696
    %3645 = vmatmul.mubr.bf16.gmra.mrb[0].mxu0 %v2695
    %v3646 = vpop.f32.mrb[0].mxu0
    %v3647 = vadd.f32 %v2839, %v3646
    %v3648 = vpop.f32.mrb[0].mxu0
    %v3649 = vadd.f32 %v2843, %v3648
    %v3650 = vpop.f32.mrb[0].mxu0
    %v3651 = vadd.f32 %v2839, %v3650
    %v3652 = vpop.f32.mrb[0].mxu0
    %v3653 = vadd.f32 %v2843, %v3652
    %3654 = vmatprep.mubr.bf16.mxu0 %v2698
    %3655 = vmatmul.mubr.bf16.gmra.mrb[0].mxu0 %v2697
    %v3656 = vpop.f32.mrb[0].mxu0
    %v3657 = vadd.f32 %v2839, %v3656
    %v3658 = vpop.f32.mrb[0].mxu0
    %v3659 = vadd.f32 %v2843, %v3658
    %v3660 = vpop.f32.mrb[0].mxu0
    %v3661 = vadd.f32 %v2839, %v3660
    %v3662 = vpop.f32.mrb[0].mxu0
    %v3663 = vadd.f32 %v2843, %v3662
    %3664 = vdwg.mxu0
    %3665 = vmatprep.subr.bf16.mxu0 %v3220
    %3666 = vmatpush1.bf16.msra.mxu0 %v3219
    %3667 = vmatprep.subr.bf16.mxu0 %v3227
    %3668 = vmatpush1.bf16.msra.mxu0 %v3226
    %3669 = vmatprep.subr.bf16.mxu0 %v3234
    %3670 = vmatpush1.bf16.msra.mxu0 %v3233
    %3671 = vmatprep.subr.bf16.mxu0 %v3241
    %3672 = vmatpush1.bf16.msra.mxu0 %v3240
    %3673 = vmatprep.subr.bf16.mxu0 %v3248
    %3674 = vmatpush1.bf16.msra.mxu0 %v3247
    %3675 = vmatprep.subr.bf16.mxu0 %v3255
    %3676 = vmatpush1.bf16.msra.mxu0 %v3254
    %3677 = vmatprep.subr.bf16.mxu0 %v3262
    %3678 = vmatpush1.bf16.msra.mxu0 %v3261
    %3679 = vmatprep.subr.bf16.mxu0 %v3269
    %3680 = vmatpush1.bf16.msra.mxu0 %v3268
    %3681 = vmatprep.subr.bf16.mxu0 %v3276
    %3682 = vmatpush1.bf16.msra.mxu0 %v3275
    %3683 = vmatprep.subr.bf16.mxu0 %v3283
    %3684 = vmatpush1.bf16.msra.mxu0 %v3282
    %3685 = vmatprep.subr.bf16.mxu0 %v3290
    %3686 = vmatpush1.bf16.msra.mxu0 %v3289
    %3687 = vmatprep.subr.bf16.mxu0 %v3297
    %3688 = vmatpush1.bf16.msra.mxu0 %v3296
    %3689 = vmatprep.subr.bf16.mxu0 %v3304
    %3690 = vmatpush1.bf16.msra.mxu0 %v3303
    %3691 = vmatprep.subr.bf16.mxu0 %v3311
    %3692 = vmatpush1.bf16.msra.mxu0 %v3310
    %3693 = vmatprep.subr.bf16.mxu0 %v3318
    %3694 = vmatpush1.bf16.msra.mxu0 %v3317
    %3695 = vmatprep.subr.bf16.mxu0 %v3325
    %3696 = vmatpush1.bf16.msra.mxu0 %v3324
    %3697 = vmatprep.mubr.bf16.mxu0 %v2684
    %3698 = vmatmul.mubr.bf16.gmra.mrb[0].mxu0 %v2683
    %v3699 = vpop.f32.mrb[0].mxu0
    %v3700 = vadd.f32 %v2847, %v3699
    %v3701 = vpop.f32.mrb[0].mxu0
    %v3702 = vadd.f32 %v2851, %v3701
    %v3703 = vpop.f32.mrb[0].mxu0
    %v3704 = vadd.f32 %v2847, %v3703
    %v3705 = vpop.f32.mrb[0].mxu0
    %v3706 = vadd.f32 %v2851, %v3705
    %3707 = vmatprep.mubr.bf16.mxu0 %v2686
    %3708 = vmatmul.mubr.bf16.gmra.mrb[0].mxu0 %v2685
    %v3709 = vpop.f32.mrb[0].mxu0
    %v3710 = vadd.f32 %v2847, %v3709
    %v3711 = vpop.f32.mrb[0].mxu0
    %v3712 = vadd.f32 %v2851, %v3711
    %v3713 = vpop.f32.mrb[0].mxu0
    %v3714 = vadd.f32 %v2847, %v3713
    %v3715 = vpop.f32.mrb[0].mxu0
    %v3716 = vadd.f32 %v2851, %v3715
    %3717 = vmatprep.mubr.bf16.mxu0 %v2688
    %3718 = vmatmul.mubr.bf16.gmra.mrb[0].mxu0 %v2687
    %v3719 = vpop.f32.mrb[0].mxu0
    %v3720 = vadd.f32 %v2847, %v3719
    %v3721 = vpop.f32.mrb[0].mxu0
    %v3722 = vadd.f32 %v2851, %v3721
    %v3723 = vpop.f32.mrb[0].mxu0
    %v3724 = vadd.f32 %v2847, %v3723
    %v3725 = vpop.f32.mrb[0].mxu0
    %v3726 = vadd.f32 %v2851, %v3725
    %3727 = vmatprep.mubr.bf16.mxu0 %v2690
    %3728 = vmatmul.mubr.bf16.gmra.mrb[0].mxu0 %v2689
    %v3729 = vpop.f32.mrb[0].mxu0
    %v3730 = vadd.f32 %v2847, %v3729
    %v3731 = vpop.f32.mrb[0].mxu0
    %v3732 = vadd.f32 %v2851, %v3731
    %v3733 = vpop.f32.mrb[0].mxu0
    %v3734 = vadd.f32 %v2847, %v3733
    %v3735 = vpop.f32.mrb[0].mxu0
    %v3736 = vadd.f32 %v2851, %v3735
    %3737 = vmatprep.mubr.bf16.mxu0 %v2692
    %3738 = vmatmul.mubr.bf16.gmra.mrb[0].mxu0 %v2691
    %v3739 = vpop.f32.mrb[0].mxu0
    %v3740 = vadd.f32 %v2847, %v3739
    %v3741 = vpop.f32.mrb[0].mxu0
    %v3742 = vadd.f32 %v2851, %v3741
    %v3743 = vpop.f32.mrb[0].mxu0
    %v3744 = vadd.f32 %v2847, %v3743
    %v3745 = vpop.f32.mrb[0].mxu0
    %v3746 = vadd.f32 %v2851, %v3745
    %3747 = vmatprep.mubr.bf16.mxu0 %v2694
    %3748 = vmatmul.mubr.bf16.gmra.mrb[0].mxu0 %v2693
    %v3749 = vpop.f32.mrb[0].mxu0
    %v3750 = vadd.f32 %v2847, %v3749
    %v3751 = vpop.f32.mrb[0].mxu0
    %v3752 = vadd.f32 %v2851, %v3751
    %v3753 = vpop.f32.mrb[0].mxu0
    %v3754 = vadd.f32 %v2847, %v3753
    %v3755 = vpop.f32.mrb[0].mxu0
    %v3756 = vadd.f32 %v2851, %v3755
    %3757 = vmatprep.mubr.bf16.mxu0 %v2696
    %3758 = vmatmul.mubr.bf16.gmra.mrb[0].mxu0 %v2695
    %v3759 = vpop.f32.mrb[0].mxu0
    %v3760 = vadd.f32 %v2847, %v3759
    %v3761 = vpop.f32.mrb[0].mxu0
    %v3762 = vadd.f32 %v2851, %v3761
    %v3763 = vpop.f32.mrb[0].mxu0
    %v3764 = vadd.f32 %v2847, %v3763
    %v3765 = vpop.f32.mrb[0].mxu0
    %v3766 = vadd.f32 %v2851, %v3765
    %3767 = vmatprep.mubr.bf16.mxu0 %v2698
    %3768 = vmatmul.mubr.bf16.gmra.mrb[0].mxu0 %v2697
    %v3769 = vpop.f32.mrb[0].mxu0
    %v3770 = vadd.f32 %v2847, %v3769
    %v3771 = vpop.f32.mrb[0].mxu0
    %v3772 = vadd.f32 %v2851, %v3771
    %v3773 = vpop.f32.mrb[0].mxu0
    %v3774 = vadd.f32 %v2847, %v3773
    %v3775 = vpop.f32.mrb[0].mxu0
    %v3776 = vadd.f32 %v2851, %v3775
    %3777 = vdwg.mxu0
    %3778 = vmatprep.subr.bf16.mxu0 0
    %3779 = vmatpush1.bf16.msra.mxu0 %v3221
    %3780 = vmatprep.subr.bf16.mxu0 0
    %3781 = vmatpush1.bf16.msra.mxu0 %v3228
    %3782 = vmatprep.subr.bf16.mxu0 0
    %3783 = vmatpush1.bf16.msra.mxu0 %v3235
    %3784 = vmatprep.subr.bf16.mxu0 0
    %3785 = vmatpush1.bf16.msra.mxu0 %v3242
    %3786 = vmatprep.subr.bf16.mxu0 0
    %3787 = vmatpush1.bf16.msra.mxu0 %v3249
    %3788 = vmatprep.subr.bf16.mxu0 0
    %3789 = vmatpush1.bf16.msra.mxu0 %v3256
    %3790 = vmatprep.subr.bf16.mxu0 0
    %3791 = vmatpush1.bf16.msra.mxu0 %v3263
    %3792 = vmatprep.subr.bf16.mxu0 0
    %3793 = vmatpush1.bf16.msra.mxu0 %v3270
    %3794 = vmatprep.subr.bf16.mxu0 0
    %3795 = vmatpush1.bf16.msra.mxu0 %v3277
    %3796 = vmatprep.subr.bf16.mxu0 0
    %3797 = vmatpush1.bf16.msra.mxu0 %v3284
    %3798 = vmatprep.subr.bf16.mxu0 0
    %3799 = vmatpush1.bf16.msra.mxu0 %v3291
    %3800 = vmatprep.subr.bf16.mxu0 0
    %3801 = vmatpush1.bf16.msra.mxu0 %v3298
    %3802 = vmatprep.subr.bf16.mxu0 0
    %3803 = vmatpush1.bf16.msra.mxu0 %v3305
    %3804 = vmatprep.subr.bf16.mxu0 0
    %3805 = vmatpush1.bf16.msra.mxu0 %v3312
    %3806 = vmatprep.subr.bf16.mxu0 0
    %3807 = vmatpush1.bf16.msra.mxu0 %v3319
    %3808 = vmatprep.subr.bf16.mxu0 0
    %3809 = vmatpush1.bf16.msra.mxu0 %v3326
    %3810 = vmatprep.mubr.bf16.mxu0 %v2684
    %3811 = vmatmul.mubr.bf16.gmra.mrb[0].mxu0 %v2683
    %v3812 = vpop.f32.mrb[0].mxu0
    %v3813 = vadd.f32 %v2855, %v3812
    %v3814 = vpop.f32.mrb[0].mxu0
    %v3815 = vpop.f32.mrb[0].mxu0
    %v3816 = vadd.f32 %v2855, %v3815
    %v3817 = vpop.f32.mrb[0].mxu0
    %3818 = vmatprep.mubr.bf16.mxu0 %v2686
    %3819 = vmatmul.mubr.bf16.gmra.mrb[0].mxu0 %v2685
    %v3820 = vpop.f32.mrb[0].mxu0
    %v3821 = vadd.f32 %v2855, %v3820
    %v3822 = vpop.f32.mrb[0].mxu0
    %v3823 = vpop.f32.mrb[0].mxu0
    %v3824 = vadd.f32 %v2855, %v3823
    %v3825 = vpop.f32.mrb[0].mxu0
    %3826 = vmatprep.mubr.bf16.mxu0 %v2688
    %3827 = vmatmul.mubr.bf16.gmra.mrb[0].mxu0 %v2687
    %v3828 = vpop.f32.mrb[0].mxu0
    %v3829 = vadd.f32 %v2855, %v3828
    %v3830 = vpop.f32.mrb[0].mxu0
    %v3831 = vpop.f32.mrb[0].mxu0
    %v3832 = vadd.f32 %v2855, %v3831
    %v3833 = vpop.f32.mrb[0].mxu0
    %3834 = vmatprep.mubr.bf16.mxu0 %v2690
    %3835 = vmatmul.mubr.bf16.gmra.mrb[0].mxu0 %v2689
    %v3836 = vpop.f32.mrb[0].mxu0
    %v3837 = vadd.f32 %v2855, %v3836
    %v3838 = vpop.f32.mrb[0].mxu0
    %v3839 = vpop.f32.mrb[0].mxu0
    %v3840 = vadd.f32 %v2855, %v3839
    %v3841 = vpop.f32.mrb[0].mxu0
    %3842 = vmatprep.mubr.bf16.mxu0 %v2692
    %3843 = vmatmul.mubr.bf16.gmra.mrb[0].mxu0 %v2691
    %v3844 = vpop.f32.mrb[0].mxu0
    %v3845 = vadd.f32 %v2855, %v3844
    %v3846 = vpop.f32.mrb[0].mxu0
    %v3847 = vpop.f32.mrb[0].mxu0
    %v3848 = vadd.f32 %v2855, %v3847
    %v3849 = vpop.f32.mrb[0].mxu0
    %3850 = vmatprep.mubr.bf16.mxu0 %v2694
    %3851 = vmatmul.mubr.bf16.gmra.mrb[0].mxu0 %v2693
    %v3852 = vpop.f32.mrb[0].mxu0
    %v3853 = vadd.f32 %v2855, %v3852
    %v3854 = vpop.f32.mrb[0].mxu0
    %v3855 = vpop.f32.mrb[0].mxu0
    %v3856 = vadd.f32 %v2855, %v3855
    %v3857 = vpop.f32.mrb[0].mxu0
    %3858 = vmatprep.mubr.bf16.mxu0 %v2696
    %3859 = vmatmul.mubr.bf16.gmra.mrb[0].mxu0 %v2695
    %v3860 = vpop.f32.mrb[0].mxu0
    %v3861 = vadd.f32 %v2855, %v3860
    %v3862 = vpop.f32.mrb[0].mxu0
    %v3863 = vpop.f32.mrb[0].mxu0
    %v3864 = vadd.f32 %v2855, %v3863
    %v3865 = vpop.f32.mrb[0].mxu0
    %3866 = vmatprep.mubr.bf16.mxu0 %v2698
    %3867 = vmatmul.mubr.bf16.gmra.mrb[0].mxu0 %v2697
    %v3868 = vpop.f32.mrb[0].mxu0
    %v3869 = vadd.f32 %v2855, %v3868
    %v3870 = vpop.f32.mrb[0].mxu0
    %v3871 = vpop.f32.mrb[0].mxu0
    %v3872 = vadd.f32 %v2855, %v3871
    %v3873 = vpop.f32.mrb[0].mxu0
    %3874 = vdwg.mxu0
    %v3875 = vtanh.pop %v3474
    %v3876 = vtanh.pop %v3476
    %v3877 = vtanh.pop %v3587
    %v3878 = vtanh.pop %v3589
    %v3879 = vtanh.pop %v3700
    %v3880 = vtanh.pop %v3702
    %v3881 = vtanh.pop %v3813
    %v3882 = vtanh.pop %v3478
    %v3883 = vtanh.pop %v3480
    %v3884 = vtanh.pop %v3591
    %v3885 = vtanh.pop %v3593
    %v3886 = vtanh.pop %v3704
    %v3887 = vtanh.pop %v3706
    %v3888 = vtanh.pop %v3816
    %v3889 = vtanh.pop %v3484
    %v3890 = vtanh.pop %v3486
    %v3891 = vtanh.pop %v3597
    %v3892 = vtanh.pop %v3599
    %v3893 = vtanh.pop %v3710
    %v3894 = vtanh.pop %v3712
    %v3895 = vtanh.pop %v3821
    %v3896 = vtanh.pop %v3488
    %v3897 = vtanh.pop %v3490
    %v3898 = vtanh.pop %v3601
    %v3899 = vtanh.pop %v3603
    %v3900 = vtanh.pop %v3714
    %v3901 = vtanh.pop %v3716
    %v3902 = vtanh.pop %v3824
    %v3903 = vtanh.pop %v3494
    %v3904 = vtanh.pop %v3496
    %v3905 = vtanh.pop %v3607
    %v3906 = vtanh.pop %v3609
    %v3907 = vtanh.pop %v3720
    %v3908 = vtanh.pop %v3722
    %v3909 = vtanh.pop %v3829
    %v3910 = vtanh.pop %v3498
    %v3911 = vtanh.pop %v3500
    %v3912 = vtanh.pop %v3611
    %v3913 = vtanh.pop %v3613
    %v3914 = vtanh.pop %v3724
    %v3915 = vtanh.pop %v3726
    %v3916 = vtanh.pop %v3832
    %v3917 = vtanh.pop %v3504
    %v3918 = vtanh.pop %v3506
    %v3919 = vtanh.pop %v3617
    %v3920 = vtanh.pop %v3619
    %v3921 = vtanh.pop %v3730
    %v3922 = vtanh.pop %v3732
    %v3923 = vtanh.pop %v3837
    %v3924 = vtanh.pop %v3508
    %v3925 = vtanh.pop %v3510
    %v3926 = vtanh.pop %v3621
    %v3927 = vtanh.pop %v3623
    %v3928 = vtanh.pop %v3734
    %v3929 = vtanh.pop %v3736
    %v3930 = vtanh.pop %v3840
    %v3931 = vtanh.pop %v3514
    %v3932 = vtanh.pop %v3516
    %v3933 = vtanh.pop %v3627
    %v3934 = vtanh.pop %v3629
    %v3935 = vtanh.pop %v3740
    %v3936 = vtanh.pop %v3742
    %v3937 = vtanh.pop %v3845
    %v3938 = vtanh.pop %v3518
    %v3939 = vtanh.pop %v3520
    %v3940 = vtanh.pop %v3631
    %v3941 = vtanh.pop %v3633
    %v3942 = vtanh.pop %v3744
    %v3943 = vtanh.pop %v3746
    %v3944 = vtanh.pop %v3848
    %v3945 = vtanh.pop %v3524
    %v3946 = vtanh.pop %v3526
    %v3947 = vtanh.pop %v3637
    %v3948 = vtanh.pop %v3639
    %v3949 = vtanh.pop %v3750
    %v3950 = vtanh.pop %v3752
    %v3951 = vtanh.pop %v3853
    %v3952 = vtanh.pop %v3528
    %v3953 = vtanh.pop %v3530
    %v3954 = vtanh.pop %v3641
    %v3955 = vtanh.pop %v3643
    %v3956 = vtanh.pop %v3754
    %v3957 = vtanh.pop %v3756
    %v3958 = vtanh.pop %v3856
    %v3959 = vtanh.pop %v3534
    %v3960 = vtanh.pop %v3536
    %v3961 = vtanh.pop %v3647
    %v3962 = vtanh.pop %v3649
    %v3963 = vtanh.pop %v3760
    %v3964 = vtanh.pop %v3762
    %v3965 = vtanh.pop %v3861
    %v3966 = vtanh.pop %v3538
    %v3967 = vtanh.pop %v3540
    %v3968 = vtanh.pop %v3651
    %v3969 = vtanh.pop %v3653
    %v3970 = vtanh.pop %v3764
    %v3971 = vtanh.pop %v3766
    %v3972 = vtanh.pop %v3864
    %v3973 = vtanh.pop %v3544
    %v3974 = vtanh.pop %v3546
    %v3975 = vtanh.pop %v3657
    %v3976 = vtanh.pop %v3659
    %v3977 = vtanh.pop %v3770
    %v3978 = vtanh.pop %v3772
    %v3979 = vtanh.pop %v3869
    %v3980 = vtanh.pop %v3548
    %v3981 = vtanh.pop %v3550
    %v3982 = vtanh.pop %v3661
    %v3983 = vtanh.pop %v3663
    %v3984 = vtanh.pop %v3774
    %v3985 = vtanh.pop %v3776
    %v3986 = vtanh.pop %v3872
    %3987 = vst [vmem:[%s6] sm:$0xff] %v3875
    %3988 = vst [vmem:[%s6 + $0x8] sm:$0xff] %v3876
    %3989 = vst [vmem:[%s6 + $0x10] sm:$0xff] %v3877
    %3990 = vst [vmem:[%s6 + $0x18] sm:$0xff] %v3878
    %3991 = vst [vmem:[%s6 + $0x20] sm:$0xff] %v3879
    %3992 = vst [vmem:[%s6 + $0x28] sm:$0xff] %v3880
    %3993 = vst [vmem:[%s6 + $0x30] sm:$0xff] %v3881
    %3994 = vst [vmem:[%s6 + $0x38] sm:$0xff] %v3882
    %3995 = vst [vmem:[%s6 + $0x40] sm:$0xff] %v3883
    %3996 = vst [vmem:[%s6 + $0x48] sm:$0xff] %v3884
    %3997 = vst [vmem:[%s6 + $0x50] sm:$0xff] %v3885
    %3998 = vst [vmem:[%s6 + $0x58] sm:$0xff] %v3886
    %3999 = vst [vmem:[%s6 + $0x60] sm:$0xff] %v3887
    %4000 = vst [vmem:[%s6 + $0x68] sm:$0xff] %v3888
    %4001 = vst [vmem:[%s6 + $0x70] sm:$0xff] %v3889
    %4002 = vst [vmem:[%s6 + $0x78] sm:$0xff] %v3890
    %4003 = vst [vmem:[%s6 + $0x80] sm:$0xff] %v3891
    %4004 = vst [vmem:[%s6 + $0x88] sm:$0xff] %v3892
    %4005 = vst [vmem:[%s6 + $0x90] sm:$0xff] %v3893
    %4006 = vst [vmem:[%s6 + $0x98] sm:$0xff] %v3894
    %4007 = vst [vmem:[%s6 + $0xa0] sm:$0xff] %v3895
    %4008 = vst [vmem:[%s6 + $0xa8] sm:$0xff] %v3896
    %4009 = vst [vmem:[%s6 + $0xb0] sm:$0xff] %v3897
    %4010 = vst [vmem:[%s6 + $0xb8] sm:$0xff] %v3898
    %4011 = vst [vmem:[%s6 + $0xc0] sm:$0xff] %v3899
    %4012 = vst [vmem:[%s6 + $0xc8] sm:$0xff] %v3900
    %4013 = vst [vmem:[%s6 + $0xd0] sm:$0xff] %v3901
    %4014 = vst [vmem:[%s6 + $0xd8] sm:$0xff] %v3902
    %4015 = vst [vmem:[%s6 + $0xe0] sm:$0xff] %v3903
    %4016 = vst [vmem:[%s6 + $0xe8] sm:$0xff] %v3904
    %4017 = vst [vmem:[%s6 + $0xf0] sm:$0xff] %v3905
    %4018 = vst [vmem:[%s6 + $0xf8] sm:$0xff] %v3906
    %4019 = vst [vmem:[%s6 + $0x100] sm:$0xff] %v3907
    %4020 = vst [vmem:[%s6 + $0x108] sm:$0xff] %v3908
    %4021 = vst [vmem:[%s6 + $0x110] sm:$0xff] %v3909
    %4022 = vst [vmem:[%s6 + $0x118] sm:$0xff] %v3910
    %4023 = vst [vmem:[%s6 + $0x120] sm:$0xff] %v3911
    %4024 = vst [vmem:[%s6 + $0x128] sm:$0xff] %v3912
    %4025 = vst [vmem:[%s6 + $0x130] sm:$0xff] %v3913
    %4026 = vst [vmem:[%s6 + $0x138] sm:$0xff] %v3914
    %4027 = vst [vmem:[%s6 + $0x140] sm:$0xff] %v3915
    %4028 = vst [vmem:[%s6 + $0x148] sm:$0xff] %v3916
    %4029 = vst [vmem:[%s6 + $0x150] sm:$0xff] %v3917
    %4030 = vst [vmem:[%s6 + $0x158] sm:$0xff] %v3918
    %4031 = vst [vmem:[%s6 + $0x160] sm:$0xff] %v3919
    %4032 = vst [vmem:[%s6 + $0x168] sm:$0xff] %v3920
    %4033 = vst [vmem:[%s6 + $0x170] sm:$0xff] %v3921
    %4034 = vst [vmem:[%s6 + $0x178] sm:$0xff] %v3922
    %4035 = vst [vmem:[%s6 + $0x180] sm:$0xff] %v3923
    %4036 = vst [vmem:[%s6 + $0x188] sm:$0xff] %v3924
    %4037 = vst [vmem:[%s6 + $0x190] sm:$0xff] %v3925
    %4038 = vst [vmem:[%s6 + $0x198] sm:$0xff] %v3926
    %4039 = vst [vmem:[%s6 + $0x1a0] sm:$0xff] %v3927
    %4040 = vst [vmem:[%s6 + $0x1a8] sm:$0xff] %v3928
    %4041 = vst [vmem:[%s6 + $0x1b0] sm:$0xff] %v3929
    %4042 = vst [vmem:[%s6 + $0x1b8] sm:$0xff] %v3930
    %4043 = vst [vmem:[%s6 + $0x1c0] sm:$0xff] %v3931
    %4044 = vst [vmem:[%s6 + $0x1c8] sm:$0xff] %v3932
    %4045 = vst [vmem:[%s6 + $0x1d0] sm:$0xff] %v3933
    %4046 = vst [vmem:[%s6 + $0x1d8] sm:$0xff] %v3934
    %4047 = vst [vmem:[%s6 + $0x1e0] sm:$0xff] %v3935
    %4048 = vst [vmem:[%s6 + $0x1e8] sm:$0xff] %v3936
    %4049 = vst [vmem:[%s6 + $0x1f0] sm:$0xff] %v3937
    %4050 = vst [vmem:[%s6 + $0x1f8] sm:$0xff] %v3938
    %4051 = vst [vmem:[%s6 + $0x200] sm:$0xff] %v3939
    %4052 = vst [vmem:[%s6 + $0x208] sm:$0xff] %v3940
    %4053 = vst [vmem:[%s6 + $0x210] sm:$0xff] %v3941
    %4054 = vst [vmem:[%s6 + $0x218] sm:$0xff] %v3942
    %4055 = vst [vmem:[%s6 + $0x220] sm:$0xff] %v3943
    %4056 = vst [vmem:[%s6 + $0x228] sm:$0xff] %v3944
    %4057 = vst [vmem:[%s6 + $0x230] sm:$0xff] %v3945
    %4058 = vst [vmem:[%s6 + $0x238] sm:$0xff] %v3946
    %4059 = vst [vmem:[%s6 + $0x240] sm:$0xff] %v3947
    %4060 = vst [vmem:[%s6 + $0x248] sm:$0xff] %v3948
    %4061 = vst [vmem:[%s6 + $0x250] sm:$0xff] %v3949
    %4062 = vst [vmem:[%s6 + $0x258] sm:$0xff] %v3950
    %4063 = vst [vmem:[%s6 + $0x260] sm:$0xff] %v3951
    %4064 = vst [vmem:[%s6 + $0x268] sm:$0xff] %v3952
    %4065 = vst [vmem:[%s6 + $0x270] sm:$0xff] %v3953
    %4066 = vst [vmem:[%s6 + $0x278] sm:$0xff] %v3954
    %4067 = vst [vmem:[%s6 + $0x280] sm:$0xff] %v3955
    %4068 = vst [vmem:[%s6 + $0x288] sm:$0xff] %v3956
    %4069 = vst [vmem:[%s6 + $0x290] sm:$0xff] %v3957
    %4070 = vst [vmem:[%s6 + $0x298] sm:$0xff] %v3958
    %4071 = vst [vmem:[%s6 + $0x2a0] sm:$0xff] %v3959
    %4072 = vst [vmem:[%s6 + $0x2a8] sm:$0xff] %v3960
    %4073 = vst [vmem:[%s6 + $0x2b0] sm:$0xff] %v3961
    %4074 = vst [vmem:[%s6 + $0x2b8] sm:$0xff] %v3962
    %4075 = vst [vmem:[%s6 + $0x2c0] sm:$0xff] %v3963
    %4076 = vst [vmem:[%s6 + $0x2c8] sm:$0xff] %v3964
    %4077 = vst [vmem:[%s6 + $0x2d0] sm:$0xff] %v3965
    %4078 = vst [vmem:[%s6 + $0x2d8] sm:$0xff] %v3966
    %4079 = vst [vmem:[%s6 + $0x2e0] sm:$0xff] %v3967
    %4080 = vst [vmem:[%s6 + $0x2e8] sm:$0xff] %v3968
    %4081 = vst [vmem:[%s6 + $0x2f0] sm:$0xff] %v3969
    %4082 = vst [vmem:[%s6 + $0x2f8] sm:$0xff] %v3970
    %4083 = vst [vmem:[%s6 + $0x300] sm:$0xff] %v3971
    %4084 = vst [vmem:[%s6 + $0x308] sm:$0xff] %v3972
    %4085 = vst [vmem:[%s6 + $0x310] sm:$0xff] %v3973
    %4086 = vst [vmem:[%s6 + $0x318] sm:$0xff] %v3974
    %4087 = vst [vmem:[%s6 + $0x320] sm:$0xff] %v3975
    %4088 = vst [vmem:[%s6 + $0x328] sm:$0xff] %v3976
    %4089 = vst [vmem:[%s6 + $0x330] sm:$0xff] %v3977
    %4090 = vst [vmem:[%s6 + $0x338] sm:$0xff] %v3978
    %4091 = vst [vmem:[%s6 + $0x340] sm:$0xff] %v3979
    %4092 = vst [vmem:[%s6 + $0x348] sm:$0xff] %v3980
    %4093 = vst [vmem:[%s6 + $0x350] sm:$0xff] %v3981
    %4094 = vst [vmem:[%s6 + $0x358] sm:$0xff] %v3982
    %4095 = vst [vmem:[%s6 + $0x360] sm:$0xff] %v3983
    %4096 = vst [vmem:[%s6 + $0x368] sm:$0xff] %v3984
    %4097 = vst [vmem:[%s6 + $0x370] sm:$0xff] %v3985
    %4098 = vst [vmem:[%s6 + $0x378] sm:$0xff] %v3986
    // Predicated region
    $region38: #{generator_forward.1} parent=1 // pred_check
      _
    $region39: #{generator_forward.1} parent=1 // pred_check_branch
      %4100 = sbr.rel (0) target = $region41
    $region40: #{generator_forward.1} parent=1 // pred_region
      _
    $region41: #{generator_forward.1} parent=1 // pred_fallthru
      _
    // Predicated region
    $region42: #{generator_forward.1} parent=1 // pred_check
      _
    $region43: #{generator_forward.1} parent=1 // pred_check_branch
      %4102 = sbr.rel (0) target = $region45
    $region44: #{generator_forward.1} parent=1 // pred_region
      _
    $region45: #{generator_forward.1} parent=1 // pred_fallthru
      _
    %4103 = vsyncpa [#allocation3], 1
    %4104 = vsyncpa [#allocation5], 1

</llo_original>
